<compile_context>
chip_gen: v6e
topology: v6e:2x2x1
jax: 0.10.0
libtpu: 0.0.40
codegen_flags: <defaults>
</compile_context>

<pallas_src>
import jax
import jax.numpy as jnp
from jax.experimental import pallas as pl
from jax.experimental.pallas import tpu as pltpu

LANE = 128


def bottleneck_kernel(x_ref, w1_ref, b1_ref, w2_ref, b2_ref, w3_ref, b3_ref,
                      out_ref, pad_ref):
    x = x_ref[0]                                   # [H, W, Cin_p]  f32
    H, W, _ = x.shape
    Pp = pad_ref.shape[-1]

    # ---- conv1 (1x1, no bias; bn1 scale folded into w1) + bias + relu -----
    h1 = jnp.dot(x.astype(jnp.bfloat16), w1_ref[...],
                 preferred_element_type=jnp.float32)            # [H, W, Pp]
    h1 = jnp.maximum(h1 + b1_ref[...].reshape(1, 1, -1), 0.0)

    # ---- conv2 (3x3, stride 1, pad 1; bn2 scale folded) + bias + relu -----
    # Zero only the 1-pixel border; the interior is fully rewritten each step.
    pad_ref[0:1, :, :] = jnp.zeros((1, W + 2, Pp), jnp.float32)
    pad_ref[H + 1:H + 2, :, :] = jnp.zeros((1, W + 2, Pp), jnp.float32)
    pad_ref[:, 0:1, :] = jnp.zeros((H + 2, 1, Pp), jnp.float32)
    pad_ref[:, W + 1:W + 2, :] = jnp.zeros((H + 2, 1, Pp), jnp.float32)
    pad_ref[1:H + 1, 1:W + 1, :] = h1

    # im2col: gather the nine taps once, concatenate along the lane-dense
    # channel axis, and run a single fat MXU contraction with K = 9 * Pp.
    taps = [pad_ref[kh:kh + H, kw:kw + W, :].astype(jnp.bfloat16)
            for kh in range(3) for kw in range(3)]
    patch = jnp.concatenate(taps, axis=-1)                      # [H, W, 9*Pp]
    h2 = jnp.dot(patch, w2_ref[...], preferred_element_type=jnp.float32)
    h2 = jnp.maximum(h2 + b2_ref[...].reshape(1, 1, -1), 0.0)   # [H, W, Pp]

    # ---- conv3 (1x1; bn3 scale folded) + bias + residual + relu -----------
    h3 = jnp.dot(h2.astype(jnp.bfloat16), w3_ref[...],
                 preferred_element_type=jnp.float32)            # [H, W, Cout_p]
    h3 = h3 + b3_ref[...].reshape(1, 1, -1)
    out_ref[0] = jnp.maximum(h3 + x, 0.0)   # downsample is None -> identity residual


def _round_up(x, m):
    return ((x + m - 1) // m) * m


def _full_spec(a):
    nd = a.ndim
    return pl.BlockSpec(a.shape, lambda n, nd=nd: (0,) * nd)


def _fold_and_pad_params(params, lane=LANE):
    """Fold BN scales into conv weights, zero-pad channels to lane multiples,
    cast matmul operands to bf16.  Done once (wrapper side), not per kernel step."""
    w1, s1, b1, w2, s2, b2, w3, s3, b3 = params
    Cin, P = w1.shape
    Cout = w3.shape[1]
    Cin_p, P_p, Cout_p = _round_up(Cin, lane), _round_up(P, lane), _round_up(Cout, lane)

    s1, b1 = s1.reshape(-1), b1.reshape(-1)
    s2, b2 = s2.reshape(-1), b2.reshape(-1)
    s3, b3 = s3.reshape(-1), b3.reshape(-1)

    # conv1: (Cin, P), bn1 scale folded into the output channels.
    w1f = jnp.zeros((Cin_p, P_p), jnp.float32).at[:Cin, :P].set(w1 * s1[None, :])
    b1f = jnp.zeros((1, P_p), jnp.float32).at[0, :P].set(b1)

    # conv2: HWIO (3,3,P,P), bn2 scale folded; flatten taps -> (9*P_p, P_p)
    # with (kh, kw, cin) row ordering matching the kernel's im2col concat order.
    w2f = jnp.zeros((3, 3, P_p, P_p), jnp.float32).at[:, :, :P, :P].set(
        w2 * s2[None, None, None, :])
    w2f = w2f.reshape(9 * P_p, P_p)
    b2f = jnp.zeros((1, P_p), jnp.float32).at[0, :P].set(b2)

    # conv3: (P, Cout), bn3 scale folded.
    w3f = jnp.zeros((P_p, Cout_p), jnp.float32).at[:P, :Cout].set(w3 * s3[None, :])
    b3f = jnp.zeros((1, Cout_p), jnp.float32).at[0, :Cout].set(b3)

    folded = (w1f.astype(jnp.bfloat16), b1f,
              w2f.astype(jnp.bfloat16), b2f,
              w3f.astype(jnp.bfloat16), b3f)
    return folded, (Cin_p, P_p, Cout_p)


def bottleneck_forward(x_nhwc, params):
    N, H, W, Cin = x_nhwc.shape
    Cout = params[6].shape[1]
    assert Cout == Cin, "identity residual requires inplanes == planes * expansion"

    (w1f, b1f, w2f, b2f, w3f, b3f), (Cin_p, P_p, Cout_p) = _fold_and_pad_params(params)

    # Lane-dense channels: pad Cin up to a multiple of 128 (padded channels
    # stay exactly zero through the whole block and are sliced off at the end).
    x_p = jnp.zeros((N, H, W, Cin_p), jnp.float32).at[..., :Cin].set(x_nhwc)

    out_p = pl.pallas_call(
        bottleneck_kernel,
        out_shape=jax.ShapeDtypeStruct((N, H, W, Cout_p), jnp.float32),
        grid=(N,),
        in_specs=[
            pl.BlockSpec((1, H, W, Cin_p), lambda n: (n, 0, 0, 0)),
            _full_spec(w1f), _full_spec(b1f),
            _full_spec(w2f), _full_spec(b2f),
            _full_spec(w3f), _full_spec(b3f),
        ],
        out_specs=pl.BlockSpec((1, H, W, Cout_p), lambda n: (n, 0, 0, 0)),
        scratch_shapes=[pltpu.VMEM((H + 2, W + 2, P_p), jnp.float32)],
        compiler_params=pltpu.CompilerParams(
            dimension_semantics=("parallel",),      # batch images are independent
            vmem_limit_bytes=64 * 1024 * 1024,
        ),
    )(x_p, w1f, b1f, w2f, b2f, w3f, b3f)

    return out_p[..., :Cout]


def init_params(key, inplanes, planes, dtype=jnp.float32):
    """Deterministic synthetic parameters matching Bottleneck.__init__ shapes."""
    expansion = 4
    outplanes = planes * expansion
    eps = 1e-5
    ks = jax.random.split(key, 16)

    def conv_w(k, shape, fan_in):
        return (jax.random.normal(k, shape, dtype) / jnp.sqrt(float(fan_in))).astype(dtype)

    w1 = conv_w(ks[0], (inplanes, planes), inplanes)          # 1x1: (Cin, Cout)
    w2 = conv_w(ks[1], (3, 3, planes, planes), 9 * planes)    # 3x3: HWIO
    w3 = conv_w(ks[2], (planes, outplanes), planes)           # 1x1: (Cin, Cout)

    def bn_fold(kg, kb, km, kv, c):
        gamma = 1.0 + 0.1 * jax.random.normal(kg, (c,), dtype)
        beta = 0.1 * jax.random.normal(kb, (c,), dtype)
        rmean = 0.1 * jax.random.normal(km, (c,), dtype)
        rvar = 1.0 + 0.1 * jax.random.uniform(kv, (c,), dtype)
        scale = gamma / jnp.sqrt(rvar + eps)
        bias = beta - rmean * scale
        return scale.reshape(1, c), bias.reshape(1, c)

    s1, b1 = bn_fold(ks[3], ks[4], ks[5], ks[6], planes)
    s2, b2 = bn_fold(ks[7], ks[8], ks[9], ks[10], planes)
    s3, b3 = bn_fold(ks[11], ks[12], ks[13], ks[14], outplanes)
    return (w1, s1, b1, w2, s2, b2, w3, s3, b3)


def bottleneck_reference(x_nhwc, params):
    """Pure-JAX f32 reference (same math as the PyTorch forward, NHWC)."""
    w1, s1, b1, w2, s2, b2, w3, s3, b3 = params
    hi = jax.lax.Precision.HIGHEST

    def bn(h, s, b):
        return h * s.reshape(1, 1, 1, -1) + b.reshape(1, 1, 1, -1)

    h = jnp.einsum('nhwc,cp->nhwp', x_nhwc, w1, precision=hi)
    h = jax.nn.relu(bn(h, s1, b1))
    h = jax.lax.conv_general_dilated(
        h, w2, window_strides=(1, 1), padding='SAME',
        dimension_numbers=('NHWC', 'HWIO', 'NHWC'), precision=hi)
    h = jax.nn.relu(bn(h, s2, b2))
    h = jnp.einsum('nhwp,po->nhwo', h, w3, precision=hi)
    h = bn(h, s3, b3)
    return jax.nn.relu(h + x_nhwc)


if __name__ == "__main__":
    key = jax.random.PRNGKey(0)
    planes = 8
    inplanes = planes * 4          # downsample is None -> inplanes == planes * expansion
    N, H, W = 2, 16, 16

    kx, kp = jax.random.split(key)
    x_nchw = jax.random.normal(kx, (N, inplanes, H, W), jnp.float32)   # PyTorch layout
    x_nhwc = jnp.transpose(x_nchw, (0, 2, 3, 1))                       # kernel layout

    params = init_params(kp, inplanes, planes)

    out = bottleneck_forward(x_nhwc, params)
    out = jax.block_until_ready(out)

    ref = jax.block_until_ready(bottleneck_reference(x_nhwc, params))
    max_err = float(jnp.max(jnp.abs(out - ref)))
    assert out.shape == (N, H, W, inplanes)
    # Tolerance covers bf16 MXU inputs (f32 accumulation) vs the f32 reference.
    assert max_err < 1e-1, f"mismatch vs reference: max_err={max_err}"
    print("KERNEL_OK")
</pallas_src>

<mosaic_0001>
module attributes {stable_mosaic.version = 11 : i64} {
  func.func @bottleneck_kernel(%arg0: i32, %arg1: memref<1x16x16x128xf32, #tpu.memory_space<vmem>>, %arg2: memref<128x128xbf16, #tpu.memory_space<vmem>>, %arg3: memref<1x128xf32, #tpu.memory_space<vmem>>, %arg4: memref<1152x128xbf16, #tpu.memory_space<vmem>>, %arg5: memref<1x128xf32, #tpu.memory_space<vmem>>, %arg6: memref<128x128xbf16, #tpu.memory_space<vmem>>, %arg7: memref<1x128xf32, #tpu.memory_space<vmem>>, %arg8: memref<1x16x16x128xf32, #tpu.memory_space<vmem>>, %arg9: memref<18x18x128xf32, #tpu.memory_space<vmem>>) attributes {dimension_semantics = [#tpu.dimension_semantics<parallel>], iteration_bounds = array<i64: 2>, scalar_prefetch = 0 : i64, scratch_operands = 1 : i64, tpu.core_type = #tpu.core_type<tc>, window_params = [{transform_indices = @transform_0, window_bounds = array<i64: 1, 16, 16, 128>}, {pipeline_mode = #tpu.pipeline_mode<synchronous>, transform_indices = @transform_1, window_bounds = array<i64: 128, 128>}, {pipeline_mode = #tpu.pipeline_mode<synchronous>, transform_indices = @transform_2, window_bounds = array<i64: 1, 128>}, {pipeline_mode = #tpu.pipeline_mode<synchronous>, transform_indices = @transform_3, window_bounds = array<i64: 1152, 128>}, {pipeline_mode = #tpu.pipeline_mode<synchronous>, transform_indices = @transform_4, window_bounds = array<i64: 1, 128>}, {pipeline_mode = #tpu.pipeline_mode<synchronous>, transform_indices = @transform_5, window_bounds = array<i64: 128, 128>}, {pipeline_mode = #tpu.pipeline_mode<synchronous>, transform_indices = @transform_6, window_bounds = array<i64: 1, 128>}, {transform_indices = @transform_7, window_bounds = array<i64: 1, 16, 16, 128>}]} {
    %c0 = arith.constant 0 : index
    %c0_0 = arith.constant 0 : index
    %c0_1 = arith.constant 0 : index
    %c0_2 = arith.constant 0 : index
    %0 = vector.load %arg1[%c0, %c0_0, %c0_1, %c0_2] : memref<1x16x16x128xf32, #tpu.memory_space<vmem>>, vector<1x16x16x128xf32>
    %1 = vector.shape_cast %0 : vector<1x16x16x128xf32> to vector<16x16x128xf32>
    %2 = arith.truncf %1 : vector<16x16x128xf32> to vector<16x16x128xbf16>
    %c0_3 = arith.constant 0 : index
    %c0_4 = arith.constant 0 : index
    %3 = vector.load %arg2[%c0_3, %c0_4] : memref<128x128xbf16, #tpu.memory_space<vmem>>, vector<128x128xbf16>
    %cst = arith.constant dense<0.000000e+00> : vector<16x16x128xf32>
    %4 = tpu.matmul %2, %3, %cst {dimension_numbers = #tpu.dot_dimension_numbers<[2], [0], [0, 1], [1], [0, 0, 0, 1, 1, 1], [], []>} : vector<16x16x128xbf16>, vector<128x128xbf16>, vector<16x16x128xf32> -> vector<16x16x128xf32>
    %c0_5 = arith.constant 0 : index
    %c0_6 = arith.constant 0 : index
    %5 = vector.load %arg3[%c0_5, %c0_6] : memref<1x128xf32, #tpu.memory_space<vmem>>, vector<1x128xf32>
    %6 = vector.shape_cast %5 : vector<1x128xf32> to vector<1x1x128xf32>
    %7 = vector.broadcast %6 : vector<1x1x128xf32> to vector<16x16x128xf32>
    %8 = arith.addf %4, %7 : vector<16x16x128xf32>
    %cst_7 = arith.constant 0.000000e+00 : f32
    %9 = vector.broadcast %cst_7 : f32 to vector<16x16x128xf32>
    %10 = arith.maximumf %8, %9 : vector<16x16x128xf32>
    %cst_8 = arith.constant 0.000000e+00 : f32
    %11 = vector.broadcast %cst_8 : f32 to vector<1x18x128xf32>
    %c0_9 = arith.constant 0 : index
    %c0_10 = arith.constant 0 : index
    %c0_11 = arith.constant 0 : index
    %12 = vector.load %arg9[%c0_9, %c0_10, %c0_11] : memref<18x18x128xf32, #tpu.memory_space<vmem>>, vector<1x18x128xf32>
    tpu.vector_store %arg9[%c0_9, %c0_10, %c0_11], %11 {strides = array<i32>} : memref<18x18x128xf32, #tpu.memory_space<vmem>>, vector<1x18x128xf32>,
    %cst_12 = arith.constant 0.000000e+00 : f32
    %13 = vector.broadcast %cst_12 : f32 to vector<1x18x128xf32>
    %c17 = arith.constant 17 : index
    %c0_13 = arith.constant 0 : index
    %c0_14 = arith.constant 0 : index
    %14 = vector.load %arg9[%c17, %c0_13, %c0_14] : memref<18x18x128xf32, #tpu.memory_space<vmem>>, vector<1x18x128xf32>
    tpu.vector_store %arg9[%c17, %c0_13, %c0_14], %13 {strides = array<i32>} : memref<18x18x128xf32, #tpu.memory_space<vmem>>, vector<1x18x128xf32>,
    %cst_15 = arith.constant 0.000000e+00 : f32
    %15 = vector.broadcast %cst_15 : f32 to vector<18x1x128xf32>
    %c0_16 = arith.constant 0 : index
    %c0_17 = arith.constant 0 : index
    %c0_18 = arith.constant 0 : index
    %16 = vector.load %arg9[%c0_16, %c0_17, %c0_18] : memref<18x18x128xf32, #tpu.memory_space<vmem>>, vector<18x1x128xf32>
    tpu.vector_store %arg9[%c0_16, %c0_17, %c0_18], %15 {strides = array<i32>} : memref<18x18x128xf32, #tpu.memory_space<vmem>>, vector<18x1x128xf32>,
    %cst_19 = arith.constant 0.000000e+00 : f32
    %17 = vector.broadcast %cst_19 : f32 to vector<18x1x128xf32>
    %c0_20 = arith.constant 0 : index
    %c17_21 = arith.constant 17 : index
    %c0_22 = arith.constant 0 : index
    %18 = vector.load %arg9[%c0_20, %c17_21, %c0_22] : memref<18x18x128xf32, #tpu.memory_space<vmem>>, vector<18x1x128xf32>
    tpu.vector_store %arg9[%c0_20, %c17_21, %c0_22], %17 {strides = array<i32>} : memref<18x18x128xf32, #tpu.memory_space<vmem>>, vector<18x1x128xf32>,
    %c1 = arith.constant 1 : index
    %c1_23 = arith.constant 1 : index
    %c0_24 = arith.constant 0 : index
    %19 = vector.load %arg9[%c1, %c1_23, %c0_24] : memref<18x18x128xf32, #tpu.memory_space<vmem>>, vector<16x16x128xf32>
    tpu.vector_store %arg9[%c1, %c1_23, %c0_24], %10 {strides = array<i32>} : memref<18x18x128xf32, #tpu.memory_space<vmem>>, vector<16x16x128xf32>,
    %c0_25 = arith.constant 0 : index
    %c0_26 = arith.constant 0 : index
    %c0_27 = arith.constant 0 : index
    %20 = vector.load %arg9[%c0_25, %c0_26, %c0_27] : memref<18x18x128xf32, #tpu.memory_space<vmem>>, vector<16x16x128xf32>
    %21 = arith.truncf %20 : vector<16x16x128xf32> to vector<16x16x128xbf16>
    %c0_28 = arith.constant 0 : index
    %c1_29 = arith.constant 1 : index
    %c0_30 = arith.constant 0 : index
    %22 = vector.load %arg9[%c0_28, %c1_29, %c0_30] : memref<18x18x128xf32, #tpu.memory_space<vmem>>, vector<16x16x128xf32>
    %23 = arith.truncf %22 : vector<16x16x128xf32> to vector<16x16x128xbf16>
    %c0_31 = arith.constant 0 : index
    %c2 = arith.constant 2 : index
    %c0_32 = arith.constant 0 : index
    %24 = vector.load %arg9[%c0_31, %c2, %c0_32] : memref<18x18x128xf32, #tpu.memory_space<vmem>>, vector<16x16x128xf32>
    %25 = arith.truncf %24 : vector<16x16x128xf32> to vector<16x16x128xbf16>
    %c1_33 = arith.constant 1 : index
    %c0_34 = arith.constant 0 : index
    %c0_35 = arith.constant 0 : index
    %26 = vector.load %arg9[%c1_33, %c0_34, %c0_35] : memref<18x18x128xf32, #tpu.memory_space<vmem>>, vector<16x16x128xf32>
    %27 = arith.truncf %26 : vector<16x16x128xf32> to vector<16x16x128xbf16>
    %c1_36 = arith.constant 1 : index
    %c1_37 = arith.constant 1 : index
    %c0_38 = arith.constant 0 : index
    %28 = vector.load %arg9[%c1_36, %c1_37, %c0_38] : memref<18x18x128xf32, #tpu.memory_space<vmem>>, vector<16x16x128xf32>
    %29 = arith.truncf %28 : vector<16x16x128xf32> to vector<16x16x128xbf16>
    %c1_39 = arith.constant 1 : index
    %c2_40 = arith.constant 2 : index
    %c0_41 = arith.constant 0 : index
    %30 = vector.load %arg9[%c1_39, %c2_40, %c0_41] : memref<18x18x128xf32, #tpu.memory_space<vmem>>, vector<16x16x128xf32>
    %31 = arith.truncf %30 : vector<16x16x128xf32> to vector<16x16x128xbf16>
    %c2_42 = arith.constant 2 : index
    %c0_43 = arith.constant 0 : index
    %c0_44 = arith.constant 0 : index
    %32 = vector.load %arg9[%c2_42, %c0_43, %c0_44] : memref<18x18x128xf32, #tpu.memory_space<vmem>>, vector<16x16x128xf32>
    %33 = arith.truncf %32 : vector<16x16x128xf32> to vector<16x16x128xbf16>
    %c2_45 = arith.constant 2 : index
    %c1_46 = arith.constant 1 : index
    %c0_47 = arith.constant 0 : index
    %34 = vector.load %arg9[%c2_45, %c1_46, %c0_47] : memref<18x18x128xf32, #tpu.memory_space<vmem>>, vector<16x16x128xf32>
    %35 = arith.truncf %34 : vector<16x16x128xf32> to vector<16x16x128xbf16>
    %c2_48 = arith.constant 2 : index
    %c2_49 = arith.constant 2 : index
    %c0_50 = arith.constant 0 : index
    %36 = vector.load %arg9[%c2_48, %c2_49, %c0_50] : memref<18x18x128xf32, #tpu.memory_space<vmem>>, vector<16x16x128xf32>
    %37 = arith.truncf %36 : vector<16x16x128xf32> to vector<16x16x128xbf16>
    %38 = tpu.concatenate %21, %23, %25, %27, %29, %31, %33, %35, %37 in 2 : vector<16x16x128xbf16>, vector<16x16x128xbf16>, vector<16x16x128xbf16>, vector<16x16x128xbf16>, vector<16x16x128xbf16>, vector<16x16x128xbf16>, vector<16x16x128xbf16>, vector<16x16x128xbf16>, vector<16x16x128xbf16> -> vector<16x16x1152xbf16>
    %c0_51 = arith.constant 0 : index
    %c0_52 = arith.constant 0 : index
    %39 = vector.load %arg4[%c0_51, %c0_52] : memref<1152x128xbf16, #tpu.memory_space<vmem>>, vector<1152x128xbf16>
    %cst_53 = arith.constant dense<0.000000e+00> : vector<16x16x128xf32>
    %40 = tpu.matmul %38, %39, %cst_53 {dimension_numbers = #tpu.dot_dimension_numbers<[2], [0], [0, 1], [1], [0, 0, 0, 1, 1, 1], [], []>} : vector<16x16x1152xbf16>, vector<1152x128xbf16>, vector<16x16x128xf32> -> vector<16x16x128xf32>
    %c0_54 = arith.constant 0 : index
    %c0_55 = arith.constant 0 : index
    %41 = vector.load %arg5[%c0_54, %c0_55] : memref<1x128xf32, #tpu.memory_space<vmem>>, vector<1x128xf32>
    %42 = vector.shape_cast %41 : vector<1x128xf32> to vector<1x1x128xf32>
    %43 = vector.broadcast %42 : vector<1x1x128xf32> to vector<16x16x128xf32>
    %44 = arith.addf %40, %43 : vector<16x16x128xf32>
    %cst_56 = arith.constant 0.000000e+00 : f32
    %45 = vector.broadcast %cst_56 : f32 to vector<16x16x128xf32>
    %46 = arith.maximumf %44, %45 : vector<16x16x128xf32>
    %47 = arith.truncf %46 : vector<16x16x128xf32> to vector<16x16x128xbf16>
    %c0_57 = arith.constant 0 : index
    %c0_58 = arith.constant 0 : index
    %48 = vector.load %arg6[%c0_57, %c0_58] : memref<128x128xbf16, #tpu.memory_space<vmem>>, vector<128x128xbf16>
    %cst_59 = arith.constant dense<0.000000e+00> : vector<16x16x128xf32>
    %49 = tpu.matmul %47, %48, %cst_59 {dimension_numbers = #tpu.dot_dimension_numbers<[2], [0], [0, 1], [1], [0, 0, 0, 1, 1, 1], [], []>} : vector<16x16x128xbf16>, vector<128x128xbf16>, vector<16x16x128xf32> -> vector<16x16x128xf32>
    %c0_60 = arith.constant 0 : index
    %c0_61 = arith.constant 0 : index
    %50 = vector.load %arg7[%c0_60, %c0_61] : memref<1x128xf32, #tpu.memory_space<vmem>>, vector<1x128xf32>
    %51 = vector.shape_cast %50 : vector<1x128xf32> to vector<1x1x128xf32>
    %52 = vector.broadcast %51 : vector<1x1x128xf32> to vector<16x16x128xf32>
    %53 = arith.addf %49, %52 : vector<16x16x128xf32>
    %54 = arith.addf %53, %1 : vector<16x16x128xf32>
    %cst_62 = arith.constant 0.000000e+00 : f32
    %55 = vector.broadcast %cst_62 : f32 to vector<16x16x128xf32>
    %56 = arith.maximumf %54, %55 : vector<16x16x128xf32>
    %c0_63 = arith.constant 0 : index
    %c0_64 = arith.constant 0 : index
    %c0_65 = arith.constant 0 : index
    %c0_66 = arith.constant 0 : index
    %57 = vector.load %arg8[%c0_63, %c0_64, %c0_65, %c0_66] : memref<1x16x16x128xf32, #tpu.memory_space<vmem>>, vector<1x16x16x128xf32>
    %58 = vector.shape_cast %57 : vector<1x16x16x128xf32> to vector<16x16x128xf32>
    %59 = vector.shape_cast %56 : vector<16x16x128xf32> to vector<1x16x16x128xf32>
    tpu.vector_store %arg8[%c0_63, %c0_64, %c0_65, %c0_66], %59 {strides = array<i32>} : memref<1x16x16x128xf32, #tpu.memory_space<vmem>>, vector<1x16x16x128xf32>,
    return
  }
  func.func @transform_0(%arg0: i32) -> (i32, i32, i32, i32) {
    %c0_i32 = arith.constant 0 : i32
    %c0_i32_0 = arith.constant 0 : i32
    %c0_i32_1 = arith.constant 0 : i32
    %c0_i32_2 = arith.constant 0 : i32
    return %arg0, %c0_i32, %c0_i32_0, %c0_i32_1 : i32, i32, i32, i32
  }
  func.func @transform_1(%arg0: i32) -> (i32, i32) {
    %c0_i32 = arith.constant 0 : i32
    %c0_i32_0 = arith.constant 0 : i32
    %c0_i32_1 = arith.constant 0 : i32
    return %c0_i32, %c0_i32_0 : i32, i32
  }
  func.func @transform_2(%arg0: i32) -> (i32, i32) {
    %c0_i32 = arith.constant 0 : i32
    %c0_i32_0 = arith.constant 0 : i32
    %c0_i32_1 = arith.constant 0 : i32
    return %c0_i32, %c0_i32_0 : i32, i32
  }
  func.func @transform_3(%arg0: i32) -> (i32, i32) {
    %c0_i32 = arith.constant 0 : i32
    %c0_i32_0 = arith.constant 0 : i32
    %c0_i32_1 = arith.constant 0 : i32
    return %c0_i32, %c0_i32_0 : i32, i32
  }
  func.func @transform_4(%arg0: i32) -> (i32, i32) {
    %c0_i32 = arith.constant 0 : i32
    %c0_i32_0 = arith.constant 0 : i32
    %c0_i32_1 = arith.constant 0 : i32
    return %c0_i32, %c0_i32_0 : i32, i32
  }
  func.func @transform_5(%arg0: i32) -> (i32, i32) {
    %c0_i32 = arith.constant 0 : i32
    %c0_i32_0 = arith.constant 0 : i32
    %c0_i32_1 = arith.constant 0 : i32
    return %c0_i32, %c0_i32_0 : i32, i32
  }
  func.func @transform_6(%arg0: i32) -> (i32, i32) {
    %c0_i32 = arith.constant 0 : i32
    %c0_i32_0 = arith.constant 0 : i32
    %c0_i32_1 = arith.constant 0 : i32
    return %c0_i32, %c0_i32_0 : i32, i32
  }
  func.func @transform_7(%arg0: i32) -> (i32, i32, i32, i32) {
    %c0_i32 = arith.constant 0 : i32
    %c0_i32_0 = arith.constant 0 : i32
    %c0_i32_1 = arith.constant 0 : i32
    %c0_i32_2 = arith.constant 0 : i32
    return %arg0, %c0_i32, %c0_i32_0, %c0_i32_1 : i32, i32, i32, i32
  }
}

</mosaic_0001>

<llo_original>
// kernel: tpu_custom_call.1
$region0: #{tpu_custom_call.1}
  #allocation0 [shape = 'u32[]', space=smem, size = 0x4, offset = 0x4, fixed_abs, tag = 'smem constant byte address 0x4 - core index']
  #allocation1 [shape = 'u32[144,128]{1,0:T(1,128)}', space=vmem, size = 0x12000, scoped, tag = 'internal scratch']
  #allocation2 [shape = 'f32[18,18,128]{2,1,0:T(8,128)}', space=vmem, size = 0x36000, scoped, tag = 'scratch operand']
  %s0 = inlined_call_operand.hbm [shape: f32[2,16,16,128], index: 0, kind: input, shape index: {}]
  %s1 = inlined_call_operand.hbm [shape: bf16[128,128], index: 1, kind: input, shape index: {}]
  %s2 = inlined_call_operand.vmem [shape: f32[1,128], index: 2, kind: input, shape index: {}]
  %s3 = inlined_call_operand.hbm [shape: bf16[1152,128], index: 3, kind: input, shape index: {}]
  %s4 = inlined_call_operand.vmem [shape: f32[1,128], index: 4, kind: input, shape index: {}]
  %s5 = inlined_call_operand.hbm [shape: bf16[128,128], index: 5, kind: input, shape index: {}]
  %s6 = inlined_call_operand.vmem [shape: f32[1,128], index: 6, kind: input, shape index: {}]
  %s7 = inlined_call_operand.hbm [shape: f32[2,16,16,128], index: 7, kind: output, shape index: {}]
  %s8 = sld [smem:[#allocation0]]
  $region77: #{tpu_custom_call.1} parent=0
    _
  %s10 = ssub.s32 1, %s8
  %s11 = scalar_select 0, %s10, %s8
  $region1: #{tpu_custom_call.1} parent=0
    #allocation3 [shape = 'u8[262144]{0}', space=vmem, size = 0x40000, scoped, tag = 'input window, operand 0']
    #allocation4 [shape = 's32[2]{0}', space=sflag, size = 0x8, scoped, tag = 'scoped memory for tpu_custom_call.1']
    #allocation5 [shape = 's32[2]{0}', space=sflag, size = 0x8, scoped, tag = 'scoped memory for tpu_custom_call.1']
    #allocation6 [shape = 'u8[32768]{0}', space=vmem, size = 0x8000, scoped, tag = 'input window, operand 1, single buffered']
    #allocation7 [shape = 's32[1]{0}', space=sflag, size = 0x4, scoped, tag = 'scoped memory for tpu_custom_call.1']
    #allocation8 [shape = 'u8[294912]{0}', space=vmem, size = 0x48000, scoped, tag = 'input window, operand 3, single buffered']
    #allocation9 [shape = 'u8[32768]{0}', space=vmem, size = 0x8000, scoped, tag = 'input window, operand 5, single buffered']
    #allocation10 [shape = 's32[1]{0}', space=sflag, size = 0x4, scoped, tag = 'scoped memory for tpu_custom_call.1']
    #allocation11 [shape = 'u8[262144]{0}', space=vmem, size = 0x40000, scoped, tag = 'output window, operand 0']
    %12 = vsyncpa [#allocation4], 0
    %s13 = scalar_lea.sflag [#allocation4], 1
    %14 = vsyncpa %s13, 0
    %15 = vsyncpa [#allocation7], 0
    %16 = vsyncpa [#allocation10], 0
    %17 = vsyncpa [#allocation5], 0
    %s18 = scalar_lea.sflag [#allocation5], 1
    %19 = vsyncpa %s18, 0
    loop: start=0, step=1, limit=4
    $region2: #{tpu_custom_call.1} parent=1 // loop_pre_header
      _
    $region3: #{tpu_custom_call.1} parent=1 // loop_header
      %s21 = sphi 0, %s25
      %p22 = scmp.ge.s32.totalorder %s21, 4
      %s31 = sphi 0, %s33
      %s34 = sphi 0, %s31
      %s35 = sphi 0, %s34
      %s51 = sphi 0, %s35
      %s55 = sphi 0, %s55
      %s57 = sphi 0, %s55
      %s58 = sphi 0, %s57
      %s72 = sphi 0, %s58
      %s76 = sphi 0, %s76
      %s78 = sphi 0, %s76
      %s79 = sphi 0, %s78
      %s93 = sphi 0, %s79
      %s97 = sphi 0, %s97
      %s99 = sphi 0, %s97
      %s100 = sphi 0, %s99
      %s114 = sphi 0, %s100
      %s118 = sphi 0, %s118
      %s120 = sphi 0, %s118
      %s121 = sphi 0, %s120
      %s135 = sphi 0, %s121
      %s139 = sphi 0, %s139
      %s141 = sphi 0, %s139
      %s142 = sphi 0, %s141
      %s156 = sphi 0, %s142
      %s160 = sphi 0, %s160
      %s162 = sphi 0, %s160
      %s163 = sphi 0, %s162
      %s177 = sphi 0, %s163
      %s183 = sphi 0, %s185
      %s186 = sphi 0, %s183
      %s187 = sphi 0, %s186
      %s203 = sphi 0, %s187
    $region4: #{tpu_custom_call.1} parent=1 // loop_header_branch
      %24 = sbr.rel (%p22) target = $region8
    $region5: #{tpu_custom_call.1} parent=1 // loop_body
      %s26 = ssub.s32 %s21, 1
      %s27 = ssub.s32 %s21, 2
      %s28 = sadd.s32 %s21, 1
      %s29 = ssub.s32 %s21, %s28
      %p30 = scmp.eq.s32.totalorder %s29, 0
      %s32 = sadd.s32 %s31, 1
      %s33 = scalar_select %p30, %s31, %s32
      %p36 = pneg %p30
      %p37 = scmp.eq.s32.totalorder %s21, 1
      %p38 = por %p36, %p37
      %p39 = scmp.ne.s32.totalorder %s31, %s34
      %p40 = scmp.eq.s32.totalorder %s21, 0
      %p41 = por %p39, %p40
      %p42 = scmp.ne.s32.totalorder %s31, %s34
      %p43 = scmp.eq.s32.totalorder %s26, 1
      %p44 = por %p42, %p43
      %p45 = scmp.ne.s32.totalorder %s34, %s35
      %p46 = scmp.eq.s32.totalorder %s26, 0
      %p47 = por %p45, %p46
      %p48 = scmp.ne.s32.totalorder %s34, %s35
      %p49 = scmp.eq.s32.totalorder %s27, 1
      %p50 = por %p48, %p49
      %p52 = scmp.ne.s32.totalorder %s35, %s51
      %p53 = scmp.eq.s32.totalorder %s27, 0
      %p54 = por %p52, %p53
      %s56 = sadd.s32 %s55, 1
      %p59 = scmp.eq.s32.totalorder %s21, 1
      %p60 = scmp.ne.s32.totalorder %s55, %s57
      %p61 = scmp.eq.s32.totalorder %s21, 0
      %p62 = por %p60, %p61
      %p63 = scmp.ne.s32.totalorder %s55, %s57
      %p64 = scmp.eq.s32.totalorder %s26, 1
      %p65 = por %p63, %p64
      %p66 = scmp.ne.s32.totalorder %s57, %s58
      %p67 = scmp.eq.s32.totalorder %s26, 0
      %p68 = por %p66, %p67
      %p69 = scmp.ne.s32.totalorder %s57, %s58
      %p70 = scmp.eq.s32.totalorder %s27, 1
      %p71 = por %p69, %p70
      %p73 = scmp.ne.s32.totalorder %s58, %s72
      %p74 = scmp.eq.s32.totalorder %s27, 0
      %p75 = por %p73, %p74
      %s77 = sadd.s32 %s76, 1
      %p80 = scmp.eq.s32.totalorder %s21, 1
      %p81 = scmp.ne.s32.totalorder %s76, %s78
      %p82 = scmp.eq.s32.totalorder %s21, 0
      %p83 = por %p81, %p82
      %p84 = scmp.ne.s32.totalorder %s76, %s78
      %p85 = scmp.eq.s32.totalorder %s26, 1
      %p86 = por %p84, %p85
      %p87 = scmp.ne.s32.totalorder %s78, %s79
      %p88 = scmp.eq.s32.totalorder %s26, 0
      %p89 = por %p87, %p88
      %p90 = scmp.ne.s32.totalorder %s78, %s79
      %p91 = scmp.eq.s32.totalorder %s27, 1
      %p92 = por %p90, %p91
      %p94 = scmp.ne.s32.totalorder %s79, %s93
      %p95 = scmp.eq.s32.totalorder %s27, 0
      %p96 = por %p94, %p95
      %s98 = sadd.s32 %s97, 1
      %p101 = scmp.eq.s32.totalorder %s21, 1
      %p102 = scmp.ne.s32.totalorder %s97, %s99
      %p103 = scmp.eq.s32.totalorder %s21, 0
      %p104 = por %p102, %p103
      %p105 = scmp.ne.s32.totalorder %s97, %s99
      %p106 = scmp.eq.s32.totalorder %s26, 1
      %p107 = por %p105, %p106
      %p108 = scmp.ne.s32.totalorder %s99, %s100
      %p109 = scmp.eq.s32.totalorder %s26, 0
      %p110 = por %p108, %p109
      %p111 = scmp.ne.s32.totalorder %s99, %s100
      %p112 = scmp.eq.s32.totalorder %s27, 1
      %p113 = por %p111, %p112
      %p115 = scmp.ne.s32.totalorder %s100, %s114
      %p116 = scmp.eq.s32.totalorder %s27, 0
      %p117 = por %p115, %p116
      %s119 = sadd.s32 %s118, 1
      %p122 = scmp.eq.s32.totalorder %s21, 1
      %p123 = scmp.ne.s32.totalorder %s118, %s120
      %p124 = scmp.eq.s32.totalorder %s21, 0
      %p125 = por %p123, %p124
      %p126 = scmp.ne.s32.totalorder %s118, %s120
      %p127 = scmp.eq.s32.totalorder %s26, 1
      %p128 = por %p126, %p127
      %p129 = scmp.ne.s32.totalorder %s120, %s121
      %p130 = scmp.eq.s32.totalorder %s26, 0
      %p131 = por %p129, %p130
      %p132 = scmp.ne.s32.totalorder %s120, %s121
      %p133 = scmp.eq.s32.totalorder %s27, 1
      %p134 = por %p132, %p133
      %p136 = scmp.ne.s32.totalorder %s121, %s135
      %p137 = scmp.eq.s32.totalorder %s27, 0
      %p138 = por %p136, %p137
      %s140 = sadd.s32 %s139, 1
      %p143 = scmp.eq.s32.totalorder %s21, 1
      %p144 = scmp.ne.s32.totalorder %s139, %s141
      %p145 = scmp.eq.s32.totalorder %s21, 0
      %p146 = por %p144, %p145
      %p147 = scmp.ne.s32.totalorder %s139, %s141
      %p148 = scmp.eq.s32.totalorder %s26, 1
      %p149 = por %p147, %p148
      %p150 = scmp.ne.s32.totalorder %s141, %s142
      %p151 = scmp.eq.s32.totalorder %s26, 0
      %p152 = por %p150, %p151
      %p153 = scmp.ne.s32.totalorder %s141, %s142
      %p154 = scmp.eq.s32.totalorder %s27, 1
      %p155 = por %p153, %p154
      %p157 = scmp.ne.s32.totalorder %s142, %s156
      %p158 = scmp.eq.s32.totalorder %s27, 0
      %p159 = por %p157, %p158
      %s161 = sadd.s32 %s160, 1
      %p164 = scmp.eq.s32.totalorder %s21, 1
      %p165 = scmp.ne.s32.totalorder %s160, %s162
      %p166 = scmp.eq.s32.totalorder %s21, 0
      %p167 = por %p165, %p166
      %p168 = scmp.ne.s32.totalorder %s160, %s162
      %p169 = scmp.eq.s32.totalorder %s26, 1
      %p170 = por %p168, %p169
      %p171 = scmp.ne.s32.totalorder %s162, %s163
      %p172 = scmp.eq.s32.totalorder %s26, 0
      %p173 = por %p171, %p172
      %p174 = scmp.ne.s32.totalorder %s162, %s163
      %p175 = scmp.eq.s32.totalorder %s27, 1
      %p176 = por %p174, %p175
      %p178 = scmp.ne.s32.totalorder %s163, %s177
      %p179 = scmp.eq.s32.totalorder %s27, 0
      %p180 = por %p178, %p179
      %s181 = ssub.s32 %s21, %s28
      %p182 = scmp.eq.s32.totalorder %s181, 0
      %s184 = sadd.s32 %s183, 1
      %s185 = scalar_select %p182, %s183, %s184
      %p188 = pneg %p182
      %p189 = scmp.eq.s32.totalorder %s21, 1
      %p190 = por %p188, %p189
      %p191 = scmp.ne.s32.totalorder %s183, %s186
      %p192 = scmp.eq.s32.totalorder %s21, 0
      %p193 = por %p191, %p192
      %p194 = scmp.ne.s32.totalorder %s183, %s186
      %p195 = scmp.eq.s32.totalorder %s26, 1
      %p196 = por %p194, %p195
      %p197 = scmp.ne.s32.totalorder %s186, %s187
      %p198 = scmp.eq.s32.totalorder %s26, 0
      %p199 = por %p197, %p198
      %p200 = scmp.ne.s32.totalorder %s186, %s187
      %p201 = scmp.eq.s32.totalorder %s27, 1
      %p202 = por %p200, %p201
      %p204 = scmp.ne.s32.totalorder %s187, %s203
      %p205 = scmp.eq.s32.totalorder %s27, 0
      %p206 = por %p204, %p205
      %p207 = scmp.le.s32.totalorder 1, %s21
      %p208 = scmp.lt.s32.totalorder %s21, 3
      %p209 = pnand %p207, %p208
      %p210 = pneg %p209
      // Predicated region
      $region9: #{tpu_custom_call.1} parent=5 // pred_check
        _
      $region10: #{tpu_custom_call.1} parent=5 // pred_check_branch
        %212 = sbr.rel (%p209) target = $region12
      $region11: #{tpu_custom_call.1} parent=5 // pred_region
        %s213 = ssub.s32 %s21, 1
        // Predicated region
        $region13: #{tpu_custom_call.1} parent=11 // pred_check
          %p214 = pneg %p68
        $region14: #{tpu_custom_call.1} parent=11 // pred_check_branch
          %216 = sbr.rel (%p214) target = $region16
        $region15: #{tpu_custom_call.1} parent=11 // pred_region
          %s218 = ssub.s32 1024, 1024
          %219 = vsyncadd [#allocation7], %s218
          %s220 = sshll.u32 [#allocation6], 4
          %s221 = int_to_ptr.vmem [resolvable:$true] %s220
          %226 = dma.hbm_to_vmem [thread:$0]  %s1, 1024, %s221, [#allocation7], 64, 64, 4
        $region16: #{tpu_custom_call.1} parent=11 // pred_fallthru
          _
        // Predicated region
        $region17: #{tpu_custom_call.1} parent=11 // pred_check
          %p227 = pneg %p89
        $region18: #{tpu_custom_call.1} parent=11 // pred_check_branch
          %229 = sbr.rel (%p227) target = $region20
        $region19: #{tpu_custom_call.1} parent=11 // pred_region
          _
        $region20: #{tpu_custom_call.1} parent=11 // pred_fallthru
          _
        // Predicated region
        $region21: #{tpu_custom_call.1} parent=11 // pred_check
          %p230 = pneg %p110
        $region22: #{tpu_custom_call.1} parent=11 // pred_check_branch
          %232 = sbr.rel (%p230) target = $region24
        $region23: #{tpu_custom_call.1} parent=11 // pred_region
          %s234 = ssub.s32 9216, 9216
          %235 = vsyncadd [#allocation7], %s234
          %s236 = sshll.u32 [#allocation8], 4
          %s237 = int_to_ptr.vmem [resolvable:$true] %s236
          %242 = dma.hbm_to_vmem [thread:$0]  %s3, 9216, %s237, [#allocation7], 64, 64, 4
        $region24: #{tpu_custom_call.1} parent=11 // pred_fallthru
          _
        // Predicated region
        $region25: #{tpu_custom_call.1} parent=11 // pred_check
          %p243 = pneg %p131
        $region26: #{tpu_custom_call.1} parent=11 // pred_check_branch
          %245 = sbr.rel (%p243) target = $region28
        $region27: #{tpu_custom_call.1} parent=11 // pred_region
          _
        $region28: #{tpu_custom_call.1} parent=11 // pred_fallthru
          _
        // Predicated region
        $region29: #{tpu_custom_call.1} parent=11 // pred_check
          %p246 = pneg %p152
        $region30: #{tpu_custom_call.1} parent=11 // pred_check_branch
          %248 = sbr.rel (%p246) target = $region32
        $region31: #{tpu_custom_call.1} parent=11 // pred_region
          %s250 = ssub.s32 1024, 1024
          %251 = vsyncadd [#allocation10], %s250
          %s252 = sshll.u32 [#allocation9], 4
          %s253 = int_to_ptr.vmem [resolvable:$true] %s252
          %258 = dma.hbm_to_vmem [thread:$0]  %s5, 1024, %s253, [#allocation10], 64, 64, 4
        $region32: #{tpu_custom_call.1} parent=11 // pred_fallthru
          _
        // Predicated region
        $region33: #{tpu_custom_call.1} parent=11 // pred_check
          %p259 = pneg %p173
        $region34: #{tpu_custom_call.1} parent=11 // pred_check_branch
          %261 = sbr.rel (%p259) target = $region36
        $region35: #{tpu_custom_call.1} parent=11 // pred_region
          _
        $region36: #{tpu_custom_call.1} parent=11 // pred_fallthru
          _
      $region12: #{tpu_custom_call.1} parent=5 // pred_fallthru
        _
      %p262 = scmp.lt.s32.totalorder %s21, 2
      // Predicated region
      $region37: #{tpu_custom_call.1} parent=5 // pred_check
        %p263 = pneg %p262
      $region38: #{tpu_custom_call.1} parent=5 // pred_check_branch
        %265 = sbr.rel (%p263) target = $region40
      $region39: #{tpu_custom_call.1} parent=5 // pred_region
        // Predicated region
        $region41: #{tpu_custom_call.1} parent=39 // pred_check
          %p266 = pneg %p41
        $region42: #{tpu_custom_call.1} parent=39 // pred_check_branch
          %268 = sbr.rel (%p266) target = $region44
        $region43: #{tpu_custom_call.1} parent=39 // pred_region
          %s269 = sand.u32 %s31, 1
          %s270 = scalar_lea.sflag [#allocation4], %s269
          %s271 = sand.u32 %s31, 1
          %s272 = smul.addr %s271, 256
          %s273 = scalar_lea.vmem [#allocation3], %s272
          %s275 = ssub.s32 4096, 4096
          %276 = vsyncadd %s270, %s275
          %s277 = smul.addr %s21, 32
          %s278 = smul.addr %s277, 128
          %s279 = scalar_lea.hbm %s0, %s278
          %s280 = sshll.u32 %s273, 4
          %s281 = int_to_ptr.vmem [resolvable:$true] %s280
          %286 = dma.hbm_to_vmem [thread:$0]  %s279, 4096, %s281, %s270, 128, 128, 8
        $region44: #{tpu_custom_call.1} parent=39 // pred_fallthru
          _
      $region40: #{tpu_custom_call.1} parent=5 // pred_fallthru
        _
      %p287 = scmp.le.s32.totalorder 1, %s21
      %p288 = scmp.lt.s32.totalorder %s21, 3
      %p289 = pnand %p287, %p288
      %p290 = pneg %p289
      // Predicated region
      $region45: #{tpu_custom_call.1} parent=5 // pred_check
        _
      $region46: #{tpu_custom_call.1} parent=5 // pred_check_branch
        %292 = sbr.rel (%p289) target = $region48
      $region47: #{tpu_custom_call.1} parent=5 // pred_region
        %s293 = ssub.s32 %s21, 1
        %s294 = sand.u32 %s34, 1
        %s295 = scalar_lea.sflag [#allocation4], %s294
        %s296 = sand.u32 %s34, 1
        %s297 = smul.addr %s296, 256
        %s298 = scalar_lea.vmem [#allocation3], %s297
        // Predicated region
        $region49: #{tpu_custom_call.1} parent=47 // pred_check
          %p299 = pneg %p47
        $region50: #{tpu_custom_call.1} parent=47 // pred_check_branch
          %301 = sbr.rel (%p299) target = $region52
        $region51: #{tpu_custom_call.1} parent=47 // pred_region
          %302 = dma.done %s295, 4096
        $region52: #{tpu_custom_call.1} parent=47 // pred_fallthru
          _
        // Predicated region
        $region53: #{tpu_custom_call.1} parent=47 // pred_check
          %p303 = pneg %p68
        $region54: #{tpu_custom_call.1} parent=47 // pred_check_branch
          %305 = sbr.rel (%p303) target = $region56
        $region55: #{tpu_custom_call.1} parent=47 // pred_region
          %306 = dma.done [#allocation7], 1024
        $region56: #{tpu_custom_call.1} parent=47 // pred_fallthru
          _
        // Predicated region
        $region57: #{tpu_custom_call.1} parent=47 // pred_check
          %p307 = pneg %p110
        $region58: #{tpu_custom_call.1} parent=47 // pred_check_branch
          %309 = sbr.rel (%p307) target = $region60
        $region59: #{tpu_custom_call.1} parent=47 // pred_region
          %310 = dma.done [#allocation7], 9216
        $region60: #{tpu_custom_call.1} parent=47 // pred_fallthru
          _
        // Predicated region
        $region61: #{tpu_custom_call.1} parent=47 // pred_check
          %p311 = pneg %p152
        $region62: #{tpu_custom_call.1} parent=47 // pred_check_branch
          %313 = sbr.rel (%p311) target = $region64
        $region63: #{tpu_custom_call.1} parent=47 // pred_region
          %314 = dma.done [#allocation10], 1024
        $region64: #{tpu_custom_call.1} parent=47 // pred_fallthru
          _
        %s315 = sand.u32 %s34, 1
        %s316 = scalar_lea.sflag [#allocation4], %s315
        %s317 = sand.u32 %s34, 1
        %s318 = smul.addr %s317, 256
        %s319 = scalar_lea.vmem [#allocation3], %s318
        %p320 = pneg %p47
        %p321 = pneg %p44
        %p322 = pneg %p68
        %p323 = pneg %p65
        %p324 = pneg %p89
        %p325 = pneg %p86
        %p326 = pneg %p110
        %p327 = pneg %p107
        %p328 = pneg %p131
        %p329 = pneg %p128
        %p330 = pneg %p152
        %p331 = pneg %p149
        %p332 = pneg %p173
        %p333 = pneg %p170
        %p334 = pneg %p199
        %p335 = pneg %p196
        %s336 = sand.u32 %s186, 1
        %s337 = scalar_lea.sflag [#allocation5], %s336
        %s338 = sand.u32 %s186, 1
        %s339 = smul.addr %s338, 256
        %s340 = scalar_lea.vmem [#allocation11], %s339
        %v342 = vld [vmem:[%s298] sm:$0xff]
        %v343 = vld [vmem:[%s298 + $0x8] sm:$0xff]
        %v344 = vld [vmem:[%s298 + $0x10] sm:$0xff]
        %v345 = vld [vmem:[%s298 + $0x18] sm:$0xff]
        %v346 = vld [vmem:[%s298 + $0x20] sm:$0xff]
        %v347 = vld [vmem:[%s298 + $0x28] sm:$0xff]
        %v348 = vld [vmem:[%s298 + $0x30] sm:$0xff]
        %v349 = vld [vmem:[%s298 + $0x38] sm:$0xff]
        %v350 = vld [vmem:[%s298 + $0x40] sm:$0xff]
        %v351 = vld [vmem:[%s298 + $0x48] sm:$0xff]
        %v352 = vld [vmem:[%s298 + $0x50] sm:$0xff]
        %v353 = vld [vmem:[%s298 + $0x58] sm:$0xff]
        %v354 = vld [vmem:[%s298 + $0x60] sm:$0xff]
        %v355 = vld [vmem:[%s298 + $0x68] sm:$0xff]
        %v356 = vld [vmem:[%s298 + $0x70] sm:$0xff]
        %v357 = vld [vmem:[%s298 + $0x78] sm:$0xff]
        %v358 = vld [vmem:[%s298 + $0x80] sm:$0xff]
        %v359 = vld [vmem:[%s298 + $0x88] sm:$0xff]
        %v360 = vld [vmem:[%s298 + $0x90] sm:$0xff]
        %v361 = vld [vmem:[%s298 + $0x98] sm:$0xff]
        %v362 = vld [vmem:[%s298 + $0xa0] sm:$0xff]
        %v363 = vld [vmem:[%s298 + $0xa8] sm:$0xff]
        %v364 = vld [vmem:[%s298 + $0xb0] sm:$0xff]
        %v365 = vld [vmem:[%s298 + $0xb8] sm:$0xff]
        %v366 = vld [vmem:[%s298 + $0xc0] sm:$0xff]
        %v367 = vld [vmem:[%s298 + $0xc8] sm:$0xff]
        %v368 = vld [vmem:[%s298 + $0xd0] sm:$0xff]
        %v369 = vld [vmem:[%s298 + $0xd8] sm:$0xff]
        %v370 = vld [vmem:[%s298 + $0xe0] sm:$0xff]
        %v371 = vld [vmem:[%s298 + $0xe8] sm:$0xff]
        %v372 = vld [vmem:[%s298 + $0xf0] sm:$0xff]
        %v373 = vld [vmem:[%s298 + $0xf8] sm:$0xff]
        %v374 = vpack.c.bf16 %v343, %v342
        %v375 = vpack.c.bf16 %v345, %v344
        %v376 = vpack.c.bf16 %v347, %v346
        %v377 = vpack.c.bf16 %v349, %v348
        %v378 = vpack.c.bf16 %v351, %v350
        %v379 = vpack.c.bf16 %v353, %v352
        %v380 = vpack.c.bf16 %v355, %v354
        %v381 = vpack.c.bf16 %v357, %v356
        %v382 = vpack.c.bf16 %v359, %v358
        %v383 = vpack.c.bf16 %v361, %v360
        %v384 = vpack.c.bf16 %v363, %v362
        %v385 = vpack.c.bf16 %v365, %v364
        %v386 = vpack.c.bf16 %v367, %v366
        %v387 = vpack.c.bf16 %v369, %v368
        %v388 = vpack.c.bf16 %v371, %v370
        %v389 = vpack.c.bf16 %v373, %v372
        %v390 = vld [vmem:[#allocation6] sm:$0xf]
        %v391 = vld [vmem:[#allocation6 + $0x4] sm:$0xf]
        %v392 = vld [vmem:[#allocation6 + $0x8] sm:$0xf]
        %v393 = vld [vmem:[#allocation6 + $0xc] sm:$0xf]
        %v394 = vld [vmem:[#allocation6 + $0x10] sm:$0xf]
        %v395 = vld [vmem:[#allocation6 + $0x14] sm:$0xf]
        %v396 = vld [vmem:[#allocation6 + $0x18] sm:$0xf]
        %v397 = vld [vmem:[#allocation6 + $0x1c] sm:$0xf]
        %v398 = vld [vmem:[#allocation6 + $0x20] sm:$0xf]
        %v399 = vld [vmem:[#allocation6 + $0x24] sm:$0xf]
        %v400 = vld [vmem:[#allocation6 + $0x28] sm:$0xf]
        %v401 = vld [vmem:[#allocation6 + $0x2c] sm:$0xf]
        %v402 = vld [vmem:[#allocation6 + $0x30] sm:$0xf]
        %v403 = vld [vmem:[#allocation6 + $0x34] sm:$0xf]
        %v404 = vld [vmem:[#allocation6 + $0x38] sm:$0xf]
        %v405 = vld [vmem:[#allocation6 + $0x3c] sm:$0xf]
        %v406 = vld [vmem:[%s2] sm:$0x1]
        %v408 = vlaneseq
        %v409 = vshrl.u32 %v408, 7
        %v410 = vsub.s32 0, %v409
        %v411 = vrot.slane %v406, %v410
        %v429 = vunpack.c.l.b16 %v390
        %v430 = vunpack.c.l.b16 %v391
        %v431 = vunpack.c.l.b16 %v392
        %v432 = vunpack.c.l.b16 %v393
        %v433 = vunpack.c.l.b16 %v394
        %v434 = vunpack.c.l.b16 %v395
        %v435 = vunpack.c.l.b16 %v396
        %v436 = vunpack.c.l.b16 %v397
        %v437 = vunpack.c.l.b16 %v398
        %v438 = vunpack.c.l.b16 %v399
        %v439 = vunpack.c.l.b16 %v400
        %v440 = vunpack.c.l.b16 %v401
        %v441 = vunpack.c.l.b16 %v402
        %v442 = vunpack.c.l.b16 %v403
        %v443 = vunpack.c.l.b16 %v404
        %v444 = vunpack.c.l.b16 %v405
        %v445 = vpack.c.b16 %v430, %v429
        %v446 = vpack.c.b16 %v432, %v431
        %v447 = vpack.c.b16 %v434, %v433
        %v448 = vpack.c.b16 %v436, %v435
        %v449 = vpack.c.b16 %v438, %v437
        %v450 = vpack.c.b16 %v440, %v439
        %v451 = vpack.c.b16 %v442, %v441
        %v452 = vpack.c.b16 %v444, %v443
        %461 = vmatprep.subr.bf16.mxu0 0
        %462 = vmatpush1.bf16.msra.mxu0 %v452
        %463 = vmatprep.subr.bf16.mxu0 0
        %464 = vmatpush1.bf16.msra.mxu0 %v451
        %465 = vmatprep.subr.bf16.mxu0 0
        %466 = vmatpush1.bf16.msra.mxu0 %v450
        %467 = vmatprep.subr.bf16.mxu0 0
        %468 = vmatpush1.bf16.msra.mxu0 %v449
        %469 = vmatprep.subr.bf16.mxu0 0
        %470 = vmatpush1.bf16.msra.mxu0 %v448
        %471 = vmatprep.subr.bf16.mxu0 0
        %472 = vmatpush1.bf16.msra.mxu0 %v447
        %473 = vmatprep.subr.bf16.mxu0 0
        %474 = vmatpush1.bf16.msra.mxu0 %v446
        %475 = vmatprep.subr.bf16.mxu0 0
        %476 = vmatpush1.bf16.msra.mxu0 %v445
        %477 = vmatprep.subr.bf16.mxu0 0
        %478 = vmatpush2.bf16.msra.mxu0 0
        %479 = vmatprep.subr.bf16.mxu0 0
        %480 = vmatpush2.bf16.msra.mxu0 0
        %481 = vmatprep.subr.bf16.mxu0 0
        %482 = vmatpush2.bf16.msra.mxu0 0
        %483 = vmatprep.subr.bf16.mxu0 0
        %484 = vmatpush2.bf16.msra.mxu0 0
        %485 = vmatprep.subr.bf16.mxu0 0
        %486 = vmatpush2.bf16.msra.mxu0 0
        %487 = vmatprep.subr.bf16.mxu0 0
        %488 = vmatpush2.bf16.msra.mxu0 0
        %489 = vmatprep.subr.bf16.mxu0 0
        %490 = vmatpush2.bf16.msra.mxu0 0
        %491 = vmatprep.subr.bf16.mxu0 0
        %492 = vmatpush2.bf16.msra.mxu0 0
        %493 = vmatprep.mubr.bf16.mxu0 0
        %494 = vmatmul.mubr.bf16.gmra.mxu0 %v374
        %v495 = vpop.f32.mrf.mxu0
        %v496 = vadd.f32 %v411, %v495
        %v497 = vpop.f32.mrf.mxu0
        %v498 = vpop.f32.mrf.mxu0
        %v499 = vadd.f32 %v411, %v498
        %v500 = vpop.f32.mrf.mxu0
        %501 = vmatprep.mubr.bf16.mxu0 0
        %502 = vmatmul.mubr.bf16.gmra.mxu0 %v375
        %v503 = vpop.f32.mrf.mxu0
        %v504 = vadd.f32 %v411, %v503
        %v505 = vpop.f32.mrf.mxu0
        %v506 = vpop.f32.mrf.mxu0
        %v507 = vadd.f32 %v411, %v506
        %v508 = vpop.f32.mrf.mxu0
        %509 = vmatprep.mubr.bf16.mxu0 0
        %510 = vmatmul.mubr.bf16.gmra.mxu0 %v376
        %v511 = vpop.f32.mrf.mxu0
        %v512 = vadd.f32 %v411, %v511
        %v513 = vpop.f32.mrf.mxu0
        %v514 = vpop.f32.mrf.mxu0
        %v515 = vadd.f32 %v411, %v514
        %v516 = vpop.f32.mrf.mxu0
        %517 = vmatprep.mubr.bf16.mxu0 0
        %518 = vmatmul.mubr.bf16.gmra.mxu0 %v377
        %v519 = vpop.f32.mrf.mxu0
        %v520 = vadd.f32 %v411, %v519
        %v521 = vpop.f32.mrf.mxu0
        %v522 = vpop.f32.mrf.mxu0
        %v523 = vadd.f32 %v411, %v522
        %v524 = vpop.f32.mrf.mxu0
        %525 = vmatprep.mubr.bf16.mxu0 0
        %526 = vmatmul.mubr.bf16.gmra.mxu0 %v378
        %v527 = vpop.f32.mrf.mxu0
        %v528 = vadd.f32 %v411, %v527
        %v529 = vpop.f32.mrf.mxu0
        %v530 = vpop.f32.mrf.mxu0
        %v531 = vadd.f32 %v411, %v530
        %v532 = vpop.f32.mrf.mxu0
        %533 = vmatprep.mubr.bf16.mxu0 0
        %534 = vmatmul.mubr.bf16.gmra.mxu0 %v379
        %v535 = vpop.f32.mrf.mxu0
        %v536 = vadd.f32 %v411, %v535
        %v537 = vpop.f32.mrf.mxu0
        %v538 = vpop.f32.mrf.mxu0
        %v539 = vadd.f32 %v411, %v538
        %v540 = vpop.f32.mrf.mxu0
        %541 = vmatprep.mubr.bf16.mxu0 0
        %542 = vmatmul.mubr.bf16.gmra.mxu0 %v380
        %v543 = vpop.f32.mrf.mxu0
        %v544 = vadd.f32 %v411, %v543
        %v545 = vpop.f32.mrf.mxu0
        %v546 = vpop.f32.mrf.mxu0
        %v547 = vadd.f32 %v411, %v546
        %v548 = vpop.f32.mrf.mxu0
        %549 = vmatprep.mubr.bf16.mxu0 0
        %550 = vmatmul.mubr.bf16.gmra.mxu0 %v381
        %v551 = vpop.f32.mrf.mxu0
        %v552 = vadd.f32 %v411, %v551
        %v553 = vpop.f32.mrf.mxu0
        %v554 = vpop.f32.mrf.mxu0
        %v555 = vadd.f32 %v411, %v554
        %v556 = vpop.f32.mrf.mxu0
        %557 = vmatprep.mubr.bf16.mxu0 0
        %558 = vmatmul.mubr.bf16.gmra.mxu0 %v382
        %v559 = vpop.f32.mrf.mxu0
        %v560 = vadd.f32 %v411, %v559
        %v561 = vpop.f32.mrf.mxu0
        %v562 = vpop.f32.mrf.mxu0
        %v563 = vadd.f32 %v411, %v562
        %v564 = vpop.f32.mrf.mxu0
        %565 = vmatprep.mubr.bf16.mxu0 0
        %566 = vmatmul.mubr.bf16.gmra.mxu0 %v383
        %v567 = vpop.f32.mrf.mxu0
        %v568 = vadd.f32 %v411, %v567
        %v569 = vpop.f32.mrf.mxu0
        %v570 = vpop.f32.mrf.mxu0
        %v571 = vadd.f32 %v411, %v570
        %v572 = vpop.f32.mrf.mxu0
        %573 = vmatprep.mubr.bf16.mxu0 0
        %574 = vmatmul.mubr.bf16.gmra.mxu0 %v384
        %v575 = vpop.f32.mrf.mxu0
        %v576 = vadd.f32 %v411, %v575
        %v577 = vpop.f32.mrf.mxu0
        %v578 = vpop.f32.mrf.mxu0
        %v579 = vadd.f32 %v411, %v578
        %v580 = vpop.f32.mrf.mxu0
        %581 = vmatprep.mubr.bf16.mxu0 0
        %582 = vmatmul.mubr.bf16.gmra.mxu0 %v385
        %v583 = vpop.f32.mrf.mxu0
        %v584 = vadd.f32 %v411, %v583
        %v585 = vpop.f32.mrf.mxu0
        %v586 = vpop.f32.mrf.mxu0
        %v587 = vadd.f32 %v411, %v586
        %v588 = vpop.f32.mrf.mxu0
        %589 = vmatprep.mubr.bf16.mxu0 0
        %590 = vmatmul.mubr.bf16.gmra.mxu0 %v386
        %v591 = vpop.f32.mrf.mxu0
        %v592 = vadd.f32 %v411, %v591
        %v593 = vpop.f32.mrf.mxu0
        %v594 = vpop.f32.mrf.mxu0
        %v595 = vadd.f32 %v411, %v594
        %v596 = vpop.f32.mrf.mxu0
        %597 = vmatprep.mubr.bf16.mxu0 0
        %598 = vmatmul.mubr.bf16.gmra.mxu0 %v387
        %v599 = vpop.f32.mrf.mxu0
        %v600 = vadd.f32 %v411, %v599
        %v601 = vpop.f32.mrf.mxu0
        %v602 = vpop.f32.mrf.mxu0
        %v603 = vadd.f32 %v411, %v602
        %v604 = vpop.f32.mrf.mxu0
        %605 = vmatprep.mubr.bf16.mxu0 0
        %606 = vmatmul.mubr.bf16.gmra.mxu0 %v388
        %v607 = vpop.f32.mrf.mxu0
        %v608 = vadd.f32 %v411, %v607
        %v609 = vpop.f32.mrf.mxu0
        %v610 = vpop.f32.mrf.mxu0
        %v611 = vadd.f32 %v411, %v610
        %v612 = vpop.f32.mrf.mxu0
        %613 = vmatprep.mubr.bf16.mxu0 0
        %614 = vmatmul.mubr.bf16.gmra.mxu0 %v389
        %v615 = vpop.f32.mrf.mxu0
        %v616 = vadd.f32 %v411, %v615
        %v617 = vpop.f32.mrf.mxu0
        %v618 = vpop.f32.mrf.mxu0
        %v619 = vadd.f32 %v411, %v618
        %v620 = vpop.f32.mrf.mxu0
        %621 = vdwg.mxu0
        %v622 = vmax.f32 %v496, 0.0
        %v623 = vmax.f32 %v499, 0.0
        %v624 = vmax.f32 %v504, 0.0
        %v625 = vmax.f32 %v507, 0.0
        %v626 = vmax.f32 %v512, 0.0
        %v627 = vmax.f32 %v515, 0.0
        %v628 = vmax.f32 %v520, 0.0
        %v629 = vmax.f32 %v523, 0.0
        %v630 = vmax.f32 %v528, 0.0
        %v631 = vmax.f32 %v531, 0.0
        %v632 = vmax.f32 %v536, 0.0
        %v633 = vmax.f32 %v539, 0.0
        %v634 = vmax.f32 %v544, 0.0
        %v635 = vmax.f32 %v547, 0.0
        %v636 = vmax.f32 %v552, 0.0
        %v637 = vmax.f32 %v555, 0.0
        %v638 = vmax.f32 %v560, 0.0
        %v639 = vmax.f32 %v563, 0.0
        %v640 = vmax.f32 %v568, 0.0
        %v641 = vmax.f32 %v571, 0.0
        %v642 = vmax.f32 %v576, 0.0
        %v643 = vmax.f32 %v579, 0.0
        %v644 = vmax.f32 %v584, 0.0
        %v645 = vmax.f32 %v587, 0.0
        %v646 = vmax.f32 %v592, 0.0
        %v647 = vmax.f32 %v595, 0.0
        %v648 = vmax.f32 %v600, 0.0
        %v649 = vmax.f32 %v603, 0.0
        %v650 = vmax.f32 %v608, 0.0
        %v651 = vmax.f32 %v611, 0.0
        %v652 = vmax.f32 %v616, 0.0
        %v653 = vmax.f32 %v619, 0.0
        %654 = vst [vmem:[#allocation2] sm:$0xff] 0.0
        %655 = vst [vmem:[#allocation2 + $0x8] sm:$0xff] 0.0
        %656 = vst [vmem:[#allocation2 + $0x10] sm:$0x3] 0.0
        %s657 = scalar_lea.vmem [#allocation2], 408
        %658 = vst [vmem:[%s657] sm:$0xff] 0.0
        %659 = vst [vmem:[%s657 + $0x8] sm:$0xff] 0.0
        %660 = vst [vmem:[%s657 + $0x10] sm:$0x3] 0.0
        %661 = vst [vmem:[#allocation2] sm:$0x1] 0.0
        %662 = vst [vmem:[#allocation2 + $0x18] sm:$0x1] 0.0
        %663 = vst [vmem:[#allocation2 + $0x30] sm:$0x1] 0.0
        %664 = vst [vmem:[#allocation2 + $0x48] sm:$0x1] 0.0
        %665 = vst [vmem:[#allocation2 + $0x60] sm:$0x1] 0.0
        %666 = vst [vmem:[#allocation2 + $0x78] sm:$0x1] 0.0
        %667 = vst [vmem:[#allocation2 + $0x90] sm:$0x1] 0.0
        %668 = vst [vmem:[#allocation2 + $0xa8] sm:$0x1] 0.0
        %669 = vst [vmem:[#allocation2 + $0xc0] sm:$0x1] 0.0
        %670 = vst [vmem:[#allocation2 + $0xd8] sm:$0x1] 0.0
        %671 = vst [vmem:[#allocation2 + $0xf0] sm:$0x1] 0.0
        %672 = vst [vmem:[#allocation2 + $0x108] sm:$0x1] 0.0
        %673 = vst [vmem:[#allocation2 + $0x120] sm:$0x1] 0.0
        %674 = vst [vmem:[#allocation2 + $0x138] sm:$0x1] 0.0
        %675 = vst [vmem:[#allocation2 + $0x150] sm:$0x1] 0.0
        %676 = vst [vmem:[#allocation2 + $0x168] sm:$0x1] 0.0
        %677 = vst [vmem:[#allocation2 + $0x180] sm:$0x1] 0.0
        %678 = vst [vmem:[#allocation2 + $0x198] sm:$0x1] 0.0
        %679 = vst [vmem:[#allocation2 + $0x11] sm:$0x1] 0.0
        %680 = vst [vmem:[#allocation2 + $0x29] sm:$0x1] 0.0
        %681 = vst [vmem:[#allocation2 + $0x41] sm:$0x1] 0.0
        %682 = vst [vmem:[#allocation2 + $0x59] sm:$0x1] 0.0
        %683 = vst [vmem:[#allocation2 + $0x71] sm:$0x1] 0.0
        %684 = vst [vmem:[#allocation2 + $0x89] sm:$0x1] 0.0
        %685 = vst [vmem:[#allocation2 + $0xa1] sm:$0x1] 0.0
        %686 = vst [vmem:[#allocation2 + $0xb9] sm:$0x1] 0.0
        %687 = vst [vmem:[#allocation2 + $0xd1] sm:$0x1] 0.0
        %688 = vst [vmem:[#allocation2 + $0xe9] sm:$0x1] 0.0
        %689 = vst [vmem:[#allocation2 + $0x101] sm:$0x1] 0.0
        %690 = vst [vmem:[#allocation2 + $0x119] sm:$0x1] 0.0
        %691 = vst [vmem:[#allocation2 + $0x131] sm:$0x1] 0.0
        %692 = vst [vmem:[#allocation2 + $0x149] sm:$0x1] 0.0
        %693 = vst [vmem:[#allocation2 + $0x161] sm:$0x1] 0.0
        %694 = vst [vmem:[#allocation2 + $0x179] sm:$0x1] 0.0
        %695 = vst [vmem:[#allocation2 + $0x191] sm:$0x1] 0.0
        %696 = vst [vmem:[#allocation2 + $0x1a9] sm:$0x1] 0.0
        %s697 = scalar_lea.vmem [#allocation2], 24
        %698 = vst [vmem:[%s697 + $0x1] sm:$0xff] %v622
        %699 = vst [vmem:[%s697 + $0x9] sm:$0xff] %v623
        %700 = vst [vmem:[%s697 + $0x19] sm:$0xff] %v624
        %701 = vst [vmem:[%s697 + $0x21] sm:$0xff] %v625
        %702 = vst [vmem:[%s697 + $0x31] sm:$0xff] %v626
        %703 = vst [vmem:[%s697 + $0x39] sm:$0xff] %v627
        %704 = vst [vmem:[%s697 + $0x49] sm:$0xff] %v628
        %705 = vst [vmem:[%s697 + $0x51] sm:$0xff] %v629
        %706 = vst [vmem:[%s697 + $0x61] sm:$0xff] %v630
        %707 = vst [vmem:[%s697 + $0x69] sm:$0xff] %v631
        %708 = vst [vmem:[%s697 + $0x79] sm:$0xff] %v632
        %709 = vst [vmem:[%s697 + $0x81] sm:$0xff] %v633
        %710 = vst [vmem:[%s697 + $0x91] sm:$0xff] %v634
        %711 = vst [vmem:[%s697 + $0x99] sm:$0xff] %v635
        %712 = vst [vmem:[%s697 + $0xa9] sm:$0xff] %v636
        %713 = vst [vmem:[%s697 + $0xb1] sm:$0xff] %v637
        %714 = vst [vmem:[%s697 + $0xc1] sm:$0xff] %v638
        %715 = vst [vmem:[%s697 + $0xc9] sm:$0xff] %v639
        %716 = vst [vmem:[%s697 + $0xd9] sm:$0xff] %v640
        %717 = vst [vmem:[%s697 + $0xe1] sm:$0xff] %v641
        %718 = vst [vmem:[%s697 + $0xf1] sm:$0xff] %v642
        %719 = vst [vmem:[%s697 + $0xf9] sm:$0xff] %v643
        %720 = vst [vmem:[%s697 + $0x109] sm:$0xff] %v644
        %721 = vst [vmem:[%s697 + $0x111] sm:$0xff] %v645
        %722 = vst [vmem:[%s697 + $0x121] sm:$0xff] %v646
        %723 = vst [vmem:[%s697 + $0x129] sm:$0xff] %v647
        %724 = vst [vmem:[%s697 + $0x139] sm:$0xff] %v648
        %725 = vst [vmem:[%s697 + $0x141] sm:$0xff] %v649
        %726 = vst [vmem:[%s697 + $0x151] sm:$0xff] %v650
        %727 = vst [vmem:[%s697 + $0x159] sm:$0xff] %v651
        %728 = vst [vmem:[%s697 + $0x169] sm:$0xff] %v652
        %729 = vst [vmem:[%s697 + $0x171] sm:$0xff] %v653
        %v730 = vld [vmem:[#allocation2] sm:$0xff]
        %v731 = vld [vmem:[#allocation2 + $0x8] sm:$0xff]
        %v732 = vld [vmem:[#allocation2 + $0x18] sm:$0xff]
        %v733 = vld [vmem:[#allocation2 + $0x20] sm:$0xff]
        %v734 = vld [vmem:[#allocation2 + $0x30] sm:$0xff]
        %v735 = vld [vmem:[#allocation2 + $0x38] sm:$0xff]
        %v736 = vld [vmem:[#allocation2 + $0x48] sm:$0xff]
        %v737 = vld [vmem:[#allocation2 + $0x50] sm:$0xff]
        %v738 = vld [vmem:[#allocation2 + $0x60] sm:$0xff]
        %v739 = vld [vmem:[#allocation2 + $0x68] sm:$0xff]
        %v740 = vld [vmem:[#allocation2 + $0x78] sm:$0xff]
        %v741 = vld [vmem:[#allocation2 + $0x80] sm:$0xff]
        %v742 = vld [vmem:[#allocation2 + $0x90] sm:$0xff]
        %v743 = vld [vmem:[#allocation2 + $0x98] sm:$0xff]
        %v744 = vld [vmem:[#allocation2 + $0xa8] sm:$0xff]
        %v745 = vld [vmem:[#allocation2 + $0xb0] sm:$0xff]
        %v746 = vld [vmem:[#allocation2 + $0xc0] sm:$0xff]
        %v747 = vld [vmem:[#allocation2 + $0xc8] sm:$0xff]
        %v748 = vld [vmem:[#allocation2 + $0xd8] sm:$0xff]
        %v749 = vld [vmem:[#allocation2 + $0xe0] sm:$0xff]
        %v750 = vld [vmem:[#allocation2 + $0xf0] sm:$0xff]
        %v751 = vld [vmem:[#allocation2 + $0xf8] sm:$0xff]
        %v752 = vld [vmem:[#allocation2 + $0x108] sm:$0xff]
        %v753 = vld [vmem:[#allocation2 + $0x110] sm:$0xff]
        %v754 = vld [vmem:[#allocation2 + $0x120] sm:$0xff]
        %v755 = vld [vmem:[#allocation2 + $0x128] sm:$0xff]
        %v756 = vld [vmem:[#allocation2 + $0x138] sm:$0xff]
        %v757 = vld [vmem:[#allocation2 + $0x140] sm:$0xff]
        %v758 = vld [vmem:[#allocation2 + $0x150] sm:$0xff]
        %v759 = vld [vmem:[#allocation2 + $0x158] sm:$0xff]
        %v760 = vld [vmem:[#allocation2 + $0x168] sm:$0xff]
        %v761 = vld [vmem:[#allocation2 + $0x170] sm:$0xff]
        %v762 = vpack.c.bf16 %v731, %v730
        %v763 = vpack.c.bf16 %v733, %v732
        %v764 = vpack.c.bf16 %v735, %v734
        %v765 = vpack.c.bf16 %v737, %v736
        %v766 = vpack.c.bf16 %v739, %v738
        %v767 = vpack.c.bf16 %v741, %v740
        %v768 = vpack.c.bf16 %v743, %v742
        %v769 = vpack.c.bf16 %v745, %v744
        %v770 = vpack.c.bf16 %v747, %v746
        %v771 = vpack.c.bf16 %v749, %v748
        %v772 = vpack.c.bf16 %v751, %v750
        %v773 = vpack.c.bf16 %v753, %v752
        %v774 = vpack.c.bf16 %v755, %v754
        %v775 = vpack.c.bf16 %v757, %v756
        %v776 = vpack.c.bf16 %v759, %v758
        %v777 = vpack.c.bf16 %v761, %v760
        %v778 = vld [vmem:[#allocation2 + $0x1] sm:$0xff]
        %v779 = vld [vmem:[#allocation2 + $0x9] sm:$0xff]
        %v780 = vld [vmem:[#allocation2 + $0x19] sm:$0xff]
        %v781 = vld [vmem:[#allocation2 + $0x21] sm:$0xff]
        %v782 = vld [vmem:[#allocation2 + $0x31] sm:$0xff]
        %v783 = vld [vmem:[#allocation2 + $0x39] sm:$0xff]
        %v784 = vld [vmem:[#allocation2 + $0x49] sm:$0xff]
        %v785 = vld [vmem:[#allocation2 + $0x51] sm:$0xff]
        %v786 = vld [vmem:[#allocation2 + $0x61] sm:$0xff]
        %v787 = vld [vmem:[#allocation2 + $0x69] sm:$0xff]
        %v788 = vld [vmem:[#allocation2 + $0x79] sm:$0xff]
        %v789 = vld [vmem:[#allocation2 + $0x81] sm:$0xff]
        %v790 = vld [vmem:[#allocation2 + $0x91] sm:$0xff]
        %v791 = vld [vmem:[#allocation2 + $0x99] sm:$0xff]
        %v792 = vld [vmem:[#allocation2 + $0xa9] sm:$0xff]
        %v793 = vld [vmem:[#allocation2 + $0xb1] sm:$0xff]
        %v794 = vld [vmem:[#allocation2 + $0xc1] sm:$0xff]
        %v795 = vld [vmem:[#allocation2 + $0xc9] sm:$0xff]
        %v796 = vld [vmem:[#allocation2 + $0xd9] sm:$0xff]
        %v797 = vld [vmem:[#allocation2 + $0xe1] sm:$0xff]
        %v798 = vld [vmem:[#allocation2 + $0xf1] sm:$0xff]
        %v799 = vld [vmem:[#allocation2 + $0xf9] sm:$0xff]
        %v800 = vld [vmem:[#allocation2 + $0x109] sm:$0xff]
        %v801 = vld [vmem:[#allocation2 + $0x111] sm:$0xff]
        %v802 = vld [vmem:[#allocation2 + $0x121] sm:$0xff]
        %v803 = vld [vmem:[#allocation2 + $0x129] sm:$0xff]
        %v804 = vld [vmem:[#allocation2 + $0x139] sm:$0xff]
        %v805 = vld [vmem:[#allocation2 + $0x141] sm:$0xff]
        %v806 = vld [vmem:[#allocation2 + $0x151] sm:$0xff]
        %v807 = vld [vmem:[#allocation2 + $0x159] sm:$0xff]
        %v808 = vld [vmem:[#allocation2 + $0x169] sm:$0xff]
        %v809 = vld [vmem:[#allocation2 + $0x171] sm:$0xff]
        %v810 = vpack.c.bf16 %v779, %v778
        %v811 = vpack.c.bf16 %v781, %v780
        %v812 = vpack.c.bf16 %v783, %v782
        %v813 = vpack.c.bf16 %v785, %v784
        %v814 = vpack.c.bf16 %v787, %v786
        %v815 = vpack.c.bf16 %v789, %v788
        %v816 = vpack.c.bf16 %v791, %v790
        %v817 = vpack.c.bf16 %v793, %v792
        %v818 = vpack.c.bf16 %v795, %v794
        %v819 = vpack.c.bf16 %v797, %v796
        %v820 = vpack.c.bf16 %v799, %v798
        %v821 = vpack.c.bf16 %v801, %v800
        %v822 = vpack.c.bf16 %v803, %v802
        %v823 = vpack.c.bf16 %v805, %v804
        %v824 = vpack.c.bf16 %v807, %v806
        %v825 = vpack.c.bf16 %v809, %v808
        %v826 = vld [vmem:[#allocation2 + $0x2] sm:$0xff]
        %v827 = vld [vmem:[#allocation2 + $0xa] sm:$0xff]
        %v828 = vld [vmem:[#allocation2 + $0x1a] sm:$0xff]
        %v829 = vld [vmem:[#allocation2 + $0x22] sm:$0xff]
        %v830 = vld [vmem:[#allocation2 + $0x32] sm:$0xff]
        %v831 = vld [vmem:[#allocation2 + $0x3a] sm:$0xff]
        %v832 = vld [vmem:[#allocation2 + $0x4a] sm:$0xff]
        %v833 = vld [vmem:[#allocation2 + $0x52] sm:$0xff]
        %v834 = vld [vmem:[#allocation2 + $0x62] sm:$0xff]
        %v835 = vld [vmem:[#allocation2 + $0x6a] sm:$0xff]
        %v836 = vld [vmem:[#allocation2 + $0x7a] sm:$0xff]
        %v837 = vld [vmem:[#allocation2 + $0x82] sm:$0xff]
        %v838 = vld [vmem:[#allocation2 + $0x92] sm:$0xff]
        %v839 = vld [vmem:[#allocation2 + $0x9a] sm:$0xff]
        %v840 = vld [vmem:[#allocation2 + $0xaa] sm:$0xff]
        %v841 = vld [vmem:[#allocation2 + $0xb2] sm:$0xff]
        %v842 = vld [vmem:[#allocation2 + $0xc2] sm:$0xff]
        %v843 = vld [vmem:[#allocation2 + $0xca] sm:$0xff]
        %v844 = vld [vmem:[#allocation2 + $0xda] sm:$0xff]
        %v845 = vld [vmem:[#allocation2 + $0xe2] sm:$0xff]
        %v846 = vld [vmem:[#allocation2 + $0xf2] sm:$0xff]
        %v847 = vld [vmem:[#allocation2 + $0xfa] sm:$0xff]
        %v848 = vld [vmem:[#allocation2 + $0x10a] sm:$0xff]
        %v849 = vld [vmem:[#allocation2 + $0x112] sm:$0xff]
        %v850 = vld [vmem:[#allocation2 + $0x122] sm:$0xff]
        %v851 = vld [vmem:[#allocation2 + $0x12a] sm:$0xff]
        %v852 = vld [vmem:[#allocation2 + $0x13a] sm:$0xff]
        %v853 = vld [vmem:[#allocation2 + $0x142] sm:$0xff]
        %v854 = vld [vmem:[#allocation2 + $0x152] sm:$0xff]
        %v855 = vld [vmem:[#allocation2 + $0x15a] sm:$0xff]
        %v856 = vld [vmem:[#allocation2 + $0x16a] sm:$0xff]
        %v857 = vld [vmem:[#allocation2 + $0x172] sm:$0xff]
        %v858 = vpack.c.bf16 %v827, %v826
        %v859 = vpack.c.bf16 %v829, %v828
        %v860 = vpack.c.bf16 %v831, %v830
        %v861 = vpack.c.bf16 %v833, %v832
        %v862 = vpack.c.bf16 %v835, %v834
        %v863 = vpack.c.bf16 %v837, %v836
        %v864 = vpack.c.bf16 %v839, %v838
        %v865 = vpack.c.bf16 %v841, %v840
        %v866 = vpack.c.bf16 %v843, %v842
        %v867 = vpack.c.bf16 %v845, %v844
        %v868 = vpack.c.bf16 %v847, %v846
        %v869 = vpack.c.bf16 %v849, %v848
        %v870 = vpack.c.bf16 %v851, %v850
        %v871 = vpack.c.bf16 %v853, %v852
        %v872 = vpack.c.bf16 %v855, %v854
        %v873 = vpack.c.bf16 %v857, %v856
        %v874 = vld [vmem:[%s697] sm:$0xff]
        %v875 = vld [vmem:[%s697 + $0x8] sm:$0xff]
        %v876 = vld [vmem:[%s697 + $0x18] sm:$0xff]
        %v877 = vld [vmem:[%s697 + $0x20] sm:$0xff]
        %v878 = vld [vmem:[%s697 + $0x30] sm:$0xff]
        %v879 = vld [vmem:[%s697 + $0x38] sm:$0xff]
        %v880 = vld [vmem:[%s697 + $0x48] sm:$0xff]
        %v881 = vld [vmem:[%s697 + $0x50] sm:$0xff]
        %v882 = vld [vmem:[%s697 + $0x60] sm:$0xff]
        %v883 = vld [vmem:[%s697 + $0x68] sm:$0xff]
        %v884 = vld [vmem:[%s697 + $0x78] sm:$0xff]
        %v885 = vld [vmem:[%s697 + $0x80] sm:$0xff]
        %v886 = vld [vmem:[%s697 + $0x90] sm:$0xff]
        %v887 = vld [vmem:[%s697 + $0x98] sm:$0xff]
        %v888 = vld [vmem:[%s697 + $0xa8] sm:$0xff]
        %v889 = vld [vmem:[%s697 + $0xb0] sm:$0xff]
        %v890 = vld [vmem:[%s697 + $0xc0] sm:$0xff]
        %v891 = vld [vmem:[%s697 + $0xc8] sm:$0xff]
        %v892 = vld [vmem:[%s697 + $0xd8] sm:$0xff]
        %v893 = vld [vmem:[%s697 + $0xe0] sm:$0xff]
        %v894 = vld [vmem:[%s697 + $0xf0] sm:$0xff]
        %v895 = vld [vmem:[%s697 + $0xf8] sm:$0xff]
        %v896 = vld [vmem:[%s697 + $0x108] sm:$0xff]
        %v897 = vld [vmem:[%s697 + $0x110] sm:$0xff]
        %v898 = vld [vmem:[%s697 + $0x120] sm:$0xff]
        %v899 = vld [vmem:[%s697 + $0x128] sm:$0xff]
        %v900 = vld [vmem:[%s697 + $0x138] sm:$0xff]
        %v901 = vld [vmem:[%s697 + $0x140] sm:$0xff]
        %v902 = vld [vmem:[%s697 + $0x150] sm:$0xff]
        %v903 = vld [vmem:[%s697 + $0x158] sm:$0xff]
        %v904 = vld [vmem:[%s697 + $0x168] sm:$0xff]
        %v905 = vld [vmem:[%s697 + $0x170] sm:$0xff]
        %v906 = vpack.c.bf16 %v875, %v874
        %v907 = vpack.c.bf16 %v877, %v876
        %v908 = vpack.c.bf16 %v879, %v878
        %v909 = vpack.c.bf16 %v881, %v880
        %v910 = vpack.c.bf16 %v883, %v882
        %v911 = vpack.c.bf16 %v885, %v884
        %v912 = vpack.c.bf16 %v887, %v886
        %v913 = vpack.c.bf16 %v889, %v888
        %v914 = vpack.c.bf16 %v891, %v890
        %v915 = vpack.c.bf16 %v893, %v892
        %v916 = vpack.c.bf16 %v895, %v894
        %v917 = vpack.c.bf16 %v897, %v896
        %v918 = vpack.c.bf16 %v899, %v898
        %v919 = vpack.c.bf16 %v901, %v900
        %v920 = vpack.c.bf16 %v903, %v902
        %v921 = vpack.c.bf16 %v905, %v904
        %v922 = vld [vmem:[%s697 + $0x1] sm:$0xff]
        %v923 = vld [vmem:[%s697 + $0x9] sm:$0xff]
        %v924 = vld [vmem:[%s697 + $0x19] sm:$0xff]
        %v925 = vld [vmem:[%s697 + $0x21] sm:$0xff]
        %v926 = vld [vmem:[%s697 + $0x31] sm:$0xff]
        %v927 = vld [vmem:[%s697 + $0x39] sm:$0xff]
        %v928 = vld [vmem:[%s697 + $0x49] sm:$0xff]
        %v929 = vld [vmem:[%s697 + $0x51] sm:$0xff]
        %v930 = vld [vmem:[%s697 + $0x61] sm:$0xff]
        %v931 = vld [vmem:[%s697 + $0x69] sm:$0xff]
        %v932 = vld [vmem:[%s697 + $0x79] sm:$0xff]
        %v933 = vld [vmem:[%s697 + $0x81] sm:$0xff]
        %v934 = vld [vmem:[%s697 + $0x91] sm:$0xff]
        %v935 = vld [vmem:[%s697 + $0x99] sm:$0xff]
        %v936 = vld [vmem:[%s697 + $0xa9] sm:$0xff]
        %v937 = vld [vmem:[%s697 + $0xb1] sm:$0xff]
        %v938 = vld [vmem:[%s697 + $0xc1] sm:$0xff]
        %v939 = vld [vmem:[%s697 + $0xc9] sm:$0xff]
        %v940 = vld [vmem:[%s697 + $0xd9] sm:$0xff]
        %v941 = vld [vmem:[%s697 + $0xe1] sm:$0xff]
        %v942 = vld [vmem:[%s697 + $0xf1] sm:$0xff]
        %v943 = vld [vmem:[%s697 + $0xf9] sm:$0xff]
        %v944 = vld [vmem:[%s697 + $0x109] sm:$0xff]
        %v945 = vld [vmem:[%s697 + $0x111] sm:$0xff]
        %v946 = vld [vmem:[%s697 + $0x121] sm:$0xff]
        %v947 = vld [vmem:[%s697 + $0x129] sm:$0xff]
        %v948 = vld [vmem:[%s697 + $0x139] sm:$0xff]
        %v949 = vld [vmem:[%s697 + $0x141] sm:$0xff]
        %v950 = vld [vmem:[%s697 + $0x151] sm:$0xff]
        %v951 = vld [vmem:[%s697 + $0x159] sm:$0xff]
        %v952 = vld [vmem:[%s697 + $0x169] sm:$0xff]
        %v953 = vld [vmem:[%s697 + $0x171] sm:$0xff]
        %v954 = vpack.c.bf16 %v923, %v922
        %v955 = vpack.c.bf16 %v925, %v924
        %v956 = vpack.c.bf16 %v927, %v926
        %v957 = vpack.c.bf16 %v929, %v928
        %v958 = vpack.c.bf16 %v931, %v930
        %v959 = vpack.c.bf16 %v933, %v932
        %v960 = vpack.c.bf16 %v935, %v934
        %v961 = vpack.c.bf16 %v937, %v936
        %v962 = vpack.c.bf16 %v939, %v938
        %v963 = vpack.c.bf16 %v941, %v940
        %v964 = vpack.c.bf16 %v943, %v942
        %v965 = vpack.c.bf16 %v945, %v944
        %v966 = vpack.c.bf16 %v947, %v946
        %v967 = vpack.c.bf16 %v949, %v948
        %v968 = vpack.c.bf16 %v951, %v950
        %v969 = vpack.c.bf16 %v953, %v952
        %v970 = vld [vmem:[%s697 + $0x2] sm:$0xff]
        %v971 = vld [vmem:[%s697 + $0xa] sm:$0xff]
        %v972 = vld [vmem:[%s697 + $0x1a] sm:$0xff]
        %v973 = vld [vmem:[%s697 + $0x22] sm:$0xff]
        %v974 = vld [vmem:[%s697 + $0x32] sm:$0xff]
        %v975 = vld [vmem:[%s697 + $0x3a] sm:$0xff]
        %v976 = vld [vmem:[%s697 + $0x4a] sm:$0xff]
        %v977 = vld [vmem:[%s697 + $0x52] sm:$0xff]
        %v978 = vld [vmem:[%s697 + $0x62] sm:$0xff]
        %v979 = vld [vmem:[%s697 + $0x6a] sm:$0xff]
        %v980 = vld [vmem:[%s697 + $0x7a] sm:$0xff]
        %v981 = vld [vmem:[%s697 + $0x82] sm:$0xff]
        %v982 = vld [vmem:[%s697 + $0x92] sm:$0xff]
        %v983 = vld [vmem:[%s697 + $0x9a] sm:$0xff]
        %v984 = vld [vmem:[%s697 + $0xaa] sm:$0xff]
        %v985 = vld [vmem:[%s697 + $0xb2] sm:$0xff]
        %v986 = vld [vmem:[%s697 + $0xc2] sm:$0xff]
        %v987 = vld [vmem:[%s697 + $0xca] sm:$0xff]
        %v988 = vld [vmem:[%s697 + $0xda] sm:$0xff]
        %v989 = vld [vmem:[%s697 + $0xe2] sm:$0xff]
        %v990 = vld [vmem:[%s697 + $0xf2] sm:$0xff]
        %v991 = vld [vmem:[%s697 + $0xfa] sm:$0xff]
        %v992 = vld [vmem:[%s697 + $0x10a] sm:$0xff]
        %v993 = vld [vmem:[%s697 + $0x112] sm:$0xff]
        %v994 = vld [vmem:[%s697 + $0x122] sm:$0xff]
        %v995 = vld [vmem:[%s697 + $0x12a] sm:$0xff]
        %v996 = vld [vmem:[%s697 + $0x13a] sm:$0xff]
        %v997 = vld [vmem:[%s697 + $0x142] sm:$0xff]
        %v998 = vld [vmem:[%s697 + $0x152] sm:$0xff]
        %v999 = vld [vmem:[%s697 + $0x15a] sm:$0xff]
        %v1000 = vld [vmem:[%s697 + $0x16a] sm:$0xff]
        %v1001 = vld [vmem:[%s697 + $0x172] sm:$0xff]
        %v1002 = vpack.c.bf16 %v971, %v970
        %v1003 = vpack.c.bf16 %v973, %v972
        %v1004 = vpack.c.bf16 %v975, %v974
        %v1005 = vpack.c.bf16 %v977, %v976
        %v1006 = vpack.c.bf16 %v979, %v978
        %v1007 = vpack.c.bf16 %v981, %v980
        %v1008 = vpack.c.bf16 %v983, %v982
        %v1009 = vpack.c.bf16 %v985, %v984
        %v1010 = vpack.c.bf16 %v987, %v986
        %v1011 = vpack.c.bf16 %v989, %v988
        %v1012 = vpack.c.bf16 %v991, %v990
        %v1013 = vpack.c.bf16 %v993, %v992
        %v1014 = vpack.c.bf16 %v995, %v994
        %v1015 = vpack.c.bf16 %v997, %v996
        %v1016 = vpack.c.bf16 %v999, %v998
        %v1017 = vpack.c.bf16 %v1001, %v1000
        %s1018 = scalar_lea.vmem [#allocation2], 48
        %v1019 = vld [vmem:[%s1018] sm:$0xff]
        %v1020 = vld [vmem:[%s1018 + $0x8] sm:$0xff]
        %v1021 = vld [vmem:[%s1018 + $0x18] sm:$0xff]
        %v1022 = vld [vmem:[%s1018 + $0x20] sm:$0xff]
        %v1023 = vld [vmem:[%s1018 + $0x30] sm:$0xff]
        %v1024 = vld [vmem:[%s1018 + $0x38] sm:$0xff]
        %v1025 = vld [vmem:[%s1018 + $0x48] sm:$0xff]
        %v1026 = vld [vmem:[%s1018 + $0x50] sm:$0xff]
        %v1027 = vld [vmem:[%s1018 + $0x60] sm:$0xff]
        %v1028 = vld [vmem:[%s1018 + $0x68] sm:$0xff]
        %v1029 = vld [vmem:[%s1018 + $0x78] sm:$0xff]
        %v1030 = vld [vmem:[%s1018 + $0x80] sm:$0xff]
        %v1031 = vld [vmem:[%s1018 + $0x90] sm:$0xff]
        %v1032 = vld [vmem:[%s1018 + $0x98] sm:$0xff]
        %v1033 = vld [vmem:[%s1018 + $0xa8] sm:$0xff]
        %v1034 = vld [vmem:[%s1018 + $0xb0] sm:$0xff]
        %v1035 = vld [vmem:[%s1018 + $0xc0] sm:$0xff]
        %v1036 = vld [vmem:[%s1018 + $0xc8] sm:$0xff]
        %v1037 = vld [vmem:[%s1018 + $0xd8] sm:$0xff]
        %v1038 = vld [vmem:[%s1018 + $0xe0] sm:$0xff]
        %v1039 = vld [vmem:[%s1018 + $0xf0] sm:$0xff]
        %v1040 = vld [vmem:[%s1018 + $0xf8] sm:$0xff]
        %v1041 = vld [vmem:[%s1018 + $0x108] sm:$0xff]
        %v1042 = vld [vmem:[%s1018 + $0x110] sm:$0xff]
        %v1043 = vld [vmem:[%s1018 + $0x120] sm:$0xff]
        %v1044 = vld [vmem:[%s1018 + $0x128] sm:$0xff]
        %v1045 = vld [vmem:[%s1018 + $0x138] sm:$0xff]
        %v1046 = vld [vmem:[%s1018 + $0x140] sm:$0xff]
        %v1047 = vld [vmem:[%s1018 + $0x150] sm:$0xff]
        %v1048 = vld [vmem:[%s1018 + $0x158] sm:$0xff]
        %v1049 = vld [vmem:[%s1018 + $0x168] sm:$0xff]
        %v1050 = vld [vmem:[%s1018 + $0x170] sm:$0xff]
        %v1051 = vpack.c.bf16 %v1020, %v1019
        %v1052 = vpack.c.bf16 %v1022, %v1021
        %v1053 = vpack.c.bf16 %v1024, %v1023
        %v1054 = vpack.c.bf16 %v1026, %v1025
        %v1055 = vpack.c.bf16 %v1028, %v1027
        %v1056 = vpack.c.bf16 %v1030, %v1029
        %v1057 = vpack.c.bf16 %v1032, %v1031
        %v1058 = vpack.c.bf16 %v1034, %v1033
        %v1059 = vpack.c.bf16 %v1036, %v1035
        %v1060 = vpack.c.bf16 %v1038, %v1037
        %v1061 = vpack.c.bf16 %v1040, %v1039
        %v1062 = vpack.c.bf16 %v1042, %v1041
        %v1063 = vpack.c.bf16 %v1044, %v1043
        %v1064 = vpack.c.bf16 %v1046, %v1045
        %v1065 = vpack.c.bf16 %v1048, %v1047
        %v1066 = vpack.c.bf16 %v1050, %v1049
        %v1067 = vld [vmem:[%s1018 + $0x1] sm:$0xff]
        %v1068 = vld [vmem:[%s1018 + $0x9] sm:$0xff]
        %v1069 = vld [vmem:[%s1018 + $0x19] sm:$0xff]
        %v1070 = vld [vmem:[%s1018 + $0x21] sm:$0xff]
        %v1071 = vld [vmem:[%s1018 + $0x31] sm:$0xff]
        %v1072 = vld [vmem:[%s1018 + $0x39] sm:$0xff]
        %v1073 = vld [vmem:[%s1018 + $0x49] sm:$0xff]
        %v1074 = vld [vmem:[%s1018 + $0x51] sm:$0xff]
        %v1075 = vld [vmem:[%s1018 + $0x61] sm:$0xff]
        %v1076 = vld [vmem:[%s1018 + $0x69] sm:$0xff]
        %v1077 = vld [vmem:[%s1018 + $0x79] sm:$0xff]
        %v1078 = vld [vmem:[%s1018 + $0x81] sm:$0xff]
        %v1079 = vld [vmem:[%s1018 + $0x91] sm:$0xff]
        %v1080 = vld [vmem:[%s1018 + $0x99] sm:$0xff]
        %v1081 = vld [vmem:[%s1018 + $0xa9] sm:$0xff]
        %v1082 = vld [vmem:[%s1018 + $0xb1] sm:$0xff]
        %v1083 = vld [vmem:[%s1018 + $0xc1] sm:$0xff]
        %v1084 = vld [vmem:[%s1018 + $0xc9] sm:$0xff]
        %v1085 = vld [vmem:[%s1018 + $0xd9] sm:$0xff]
        %v1086 = vld [vmem:[%s1018 + $0xe1] sm:$0xff]
        %v1087 = vld [vmem:[%s1018 + $0xf1] sm:$0xff]
        %v1088 = vld [vmem:[%s1018 + $0xf9] sm:$0xff]
        %v1089 = vld [vmem:[%s1018 + $0x109] sm:$0xff]
        %v1090 = vld [vmem:[%s1018 + $0x111] sm:$0xff]
        %v1091 = vld [vmem:[%s1018 + $0x121] sm:$0xff]
        %v1092 = vld [vmem:[%s1018 + $0x129] sm:$0xff]
        %v1093 = vld [vmem:[%s1018 + $0x139] sm:$0xff]
        %v1094 = vld [vmem:[%s1018 + $0x141] sm:$0xff]
        %v1095 = vld [vmem:[%s1018 + $0x151] sm:$0xff]
        %v1096 = vld [vmem:[%s1018 + $0x159] sm:$0xff]
        %v1097 = vld [vmem:[%s1018 + $0x169] sm:$0xff]
        %v1098 = vld [vmem:[%s1018 + $0x171] sm:$0xff]
        %v1099 = vpack.c.bf16 %v1068, %v1067
        %v1100 = vpack.c.bf16 %v1070, %v1069
        %v1101 = vpack.c.bf16 %v1072, %v1071
        %v1102 = vpack.c.bf16 %v1074, %v1073
        %v1103 = vpack.c.bf16 %v1076, %v1075
        %v1104 = vpack.c.bf16 %v1078, %v1077
        %v1105 = vpack.c.bf16 %v1080, %v1079
        %v1106 = vpack.c.bf16 %v1082, %v1081
        %v1107 = vpack.c.bf16 %v1084, %v1083
        %v1108 = vpack.c.bf16 %v1086, %v1085
        %v1109 = vpack.c.bf16 %v1088, %v1087
        %v1110 = vpack.c.bf16 %v1090, %v1089
        %v1111 = vpack.c.bf16 %v1092, %v1091
        %v1112 = vpack.c.bf16 %v1094, %v1093
        %v1113 = vpack.c.bf16 %v1096, %v1095
        %v1114 = vpack.c.bf16 %v1098, %v1097
        %v1115 = vld [vmem:[%s1018 + $0x2] sm:$0xff]
        %v1116 = vld [vmem:[%s1018 + $0xa] sm:$0xff]
        %v1117 = vld [vmem:[%s1018 + $0x1a] sm:$0xff]
        %v1118 = vld [vmem:[%s1018 + $0x22] sm:$0xff]
        %v1119 = vld [vmem:[%s1018 + $0x32] sm:$0xff]
        %v1120 = vld [vmem:[%s1018 + $0x3a] sm:$0xff]
        %v1121 = vld [vmem:[%s1018 + $0x4a] sm:$0xff]
        %v1122 = vld [vmem:[%s1018 + $0x52] sm:$0xff]
        %v1123 = vld [vmem:[%s1018 + $0x62] sm:$0xff]
        %v1124 = vld [vmem:[%s1018 + $0x6a] sm:$0xff]
        %v1125 = vld [vmem:[%s1018 + $0x7a] sm:$0xff]
        %v1126 = vld [vmem:[%s1018 + $0x82] sm:$0xff]
        %v1127 = vld [vmem:[%s1018 + $0x92] sm:$0xff]
        %v1128 = vld [vmem:[%s1018 + $0x9a] sm:$0xff]
        %v1129 = vld [vmem:[%s1018 + $0xaa] sm:$0xff]
        %v1130 = vld [vmem:[%s1018 + $0xb2] sm:$0xff]
        %v1131 = vld [vmem:[%s1018 + $0xc2] sm:$0xff]
        %v1132 = vld [vmem:[%s1018 + $0xca] sm:$0xff]
        %v1133 = vld [vmem:[%s1018 + $0xda] sm:$0xff]
        %v1134 = vld [vmem:[%s1018 + $0xe2] sm:$0xff]
        %v1135 = vld [vmem:[%s1018 + $0xf2] sm:$0xff]
        %v1136 = vld [vmem:[%s1018 + $0xfa] sm:$0xff]
        %v1137 = vld [vmem:[%s1018 + $0x10a] sm:$0xff]
        %v1138 = vld [vmem:[%s1018 + $0x112] sm:$0xff]
        %v1139 = vld [vmem:[%s1018 + $0x122] sm:$0xff]
        %v1140 = vld [vmem:[%s1018 + $0x12a] sm:$0xff]
        %v1141 = vld [vmem:[%s1018 + $0x13a] sm:$0xff]
        %v1142 = vld [vmem:[%s1018 + $0x142] sm:$0xff]
        %v1143 = vld [vmem:[%s1018 + $0x152] sm:$0xff]
        %v1144 = vld [vmem:[%s1018 + $0x15a] sm:$0xff]
        %v1145 = vld [vmem:[%s1018 + $0x16a] sm:$0xff]
        %v1146 = vld [vmem:[%s1018 + $0x172] sm:$0xff]
        %v1147 = vpack.c.bf16 %v1116, %v1115
        %v1148 = vpack.c.bf16 %v1118, %v1117
        %v1149 = vpack.c.bf16 %v1120, %v1119
        %v1150 = vpack.c.bf16 %v1122, %v1121
        %v1151 = vpack.c.bf16 %v1124, %v1123
        %v1152 = vpack.c.bf16 %v1126, %v1125
        %v1153 = vpack.c.bf16 %v1128, %v1127
        %v1154 = vpack.c.bf16 %v1130, %v1129
        %v1155 = vpack.c.bf16 %v1132, %v1131
        %v1156 = vpack.c.bf16 %v1134, %v1133
        %v1157 = vpack.c.bf16 %v1136, %v1135
        %v1158 = vpack.c.bf16 %v1138, %v1137
        %v1159 = vpack.c.bf16 %v1140, %v1139
        %v1160 = vpack.c.bf16 %v1142, %v1141
        %v1161 = vpack.c.bf16 %v1144, %v1143
        %v1162 = vpack.c.bf16 %v1146, %v1145
        %v1163 = vld [vmem:[#allocation8] sm:$0xf]
        %v1164 = vld [vmem:[#allocation8 + $0x4] sm:$0xf]
        %v1165 = vld [vmem:[#allocation8 + $0x8] sm:$0xf]
        %v1166 = vld [vmem:[#allocation8 + $0xc] sm:$0xf]
        %v1167 = vld [vmem:[#allocation8 + $0x10] sm:$0xf]
        %v1168 = vld [vmem:[#allocation8 + $0x14] sm:$0xf]
        %v1169 = vld [vmem:[#allocation8 + $0x18] sm:$0xf]
        %v1170 = vld [vmem:[#allocation8 + $0x1c] sm:$0xf]
        %v1171 = vld [vmem:[#allocation8 + $0x20] sm:$0xf]
        %v1172 = vld [vmem:[#allocation8 + $0x24] sm:$0xf]
        %v1173 = vld [vmem:[#allocation8 + $0x28] sm:$0xf]
        %v1174 = vld [vmem:[#allocation8 + $0x2c] sm:$0xf]
        %v1175 = vld [vmem:[#allocation8 + $0x30] sm:$0xf]
        %v1176 = vld [vmem:[#allocation8 + $0x34] sm:$0xf]
        %v1177 = vld [vmem:[#allocation8 + $0x38] sm:$0xf]
        %v1178 = vld [vmem:[#allocation8 + $0x3c] sm:$0xf]
        %v1179 = vld [vmem:[#allocation8 + $0x40] sm:$0xf]
        %v1180 = vld [vmem:[#allocation8 + $0x44] sm:$0xf]
        %v1181 = vld [vmem:[#allocation8 + $0x48] sm:$0xf]
        %v1182 = vld [vmem:[#allocation8 + $0x4c] sm:$0xf]
        %v1183 = vld [vmem:[#allocation8 + $0x50] sm:$0xf]
        %v1184 = vld [vmem:[#allocation8 + $0x54] sm:$0xf]
        %v1185 = vld [vmem:[#allocation8 + $0x58] sm:$0xf]
        %v1186 = vld [vmem:[#allocation8 + $0x5c] sm:$0xf]
        %v1187 = vld [vmem:[#allocation8 + $0x60] sm:$0xf]
        %v1188 = vld [vmem:[#allocation8 + $0x64] sm:$0xf]
        %v1189 = vld [vmem:[#allocation8 + $0x68] sm:$0xf]
        %v1190 = vld [vmem:[#allocation8 + $0x6c] sm:$0xf]
        %v1191 = vld [vmem:[#allocation8 + $0x70] sm:$0xf]
        %v1192 = vld [vmem:[#allocation8 + $0x74] sm:$0xf]
        %v1193 = vld [vmem:[#allocation8 + $0x78] sm:$0xf]
        %v1194 = vld [vmem:[#allocation8 + $0x7c] sm:$0xf]
        %v1195 = vld [vmem:[#allocation8 + $0x80] sm:$0xf]
        %v1196 = vld [vmem:[#allocation8 + $0x84] sm:$0xf]
        %v1197 = vld [vmem:[#allocation8 + $0x88] sm:$0xf]
        %v1198 = vld [vmem:[#allocation8 + $0x8c] sm:$0xf]
        %v1199 = vld [vmem:[#allocation8 + $0x90] sm:$0xf]
        %v1200 = vld [vmem:[#allocation8 + $0x94] sm:$0xf]
        %v1201 = vld [vmem:[#allocation8 + $0x98] sm:$0xf]
        %v1202 = vld [vmem:[#allocation8 + $0x9c] sm:$0xf]
        %v1203 = vld [vmem:[#allocation8 + $0xa0] sm:$0xf]
        %v1204 = vld [vmem:[#allocation8 + $0xa4] sm:$0xf]
        %v1205 = vld [vmem:[#allocation8 + $0xa8] sm:$0xf]
        %v1206 = vld [vmem:[#allocation8 + $0xac] sm:$0xf]
        %v1207 = vld [vmem:[#allocation8 + $0xb0] sm:$0xf]
        %v1208 = vld [vmem:[#allocation8 + $0xb4] sm:$0xf]
        %v1209 = vld [vmem:[#allocation8 + $0xb8] sm:$0xf]
        %v1210 = vld [vmem:[#allocation8 + $0xbc] sm:$0xf]
        %v1211 = vld [vmem:[#allocation8 + $0xc0] sm:$0xf]
        %v1212 = vld [vmem:[#allocation8 + $0xc4] sm:$0xf]
        %v1213 = vld [vmem:[#allocation8 + $0xc8] sm:$0xf]
        %v1214 = vld [vmem:[#allocation8 + $0xcc] sm:$0xf]
        %v1215 = vld [vmem:[#allocation8 + $0xd0] sm:$0xf]
        %v1216 = vld [vmem:[#allocation8 + $0xd4] sm:$0xf]
        %v1217 = vld [vmem:[#allocation8 + $0xd8] sm:$0xf]
        %v1218 = vld [vmem:[#allocation8 + $0xdc] sm:$0xf]
        %v1219 = vld [vmem:[#allocation8 + $0xe0] sm:$0xf]
        %v1220 = vld [vmem:[#allocation8 + $0xe4] sm:$0xf]
        %v1221 = vld [vmem:[#allocation8 + $0xe8] sm:$0xf]
        %v1222 = vld [vmem:[#allocation8 + $0xec] sm:$0xf]
        %v1223 = vld [vmem:[#allocation8 + $0xf0] sm:$0xf]
        %v1224 = vld [vmem:[#allocation8 + $0xf4] sm:$0xf]
        %v1225 = vld [vmem:[#allocation8 + $0xf8] sm:$0xf]
        %v1226 = vld [vmem:[#allocation8 + $0xfc] sm:$0xf]
        %v1227 = vld [vmem:[#allocation8 + $0x100] sm:$0xf]
        %v1228 = vld [vmem:[#allocation8 + $0x104] sm:$0xf]
        %v1229 = vld [vmem:[#allocation8 + $0x108] sm:$0xf]
        %v1230 = vld [vmem:[#allocation8 + $0x10c] sm:$0xf]
        %v1231 = vld [vmem:[#allocation8 + $0x110] sm:$0xf]
        %v1232 = vld [vmem:[#allocation8 + $0x114] sm:$0xf]
        %v1233 = vld [vmem:[#allocation8 + $0x118] sm:$0xf]
        %v1234 = vld [vmem:[#allocation8 + $0x11c] sm:$0xf]
        %v1235 = vld [vmem:[#allocation8 + $0x120] sm:$0xf]
        %v1236 = vld [vmem:[#allocation8 + $0x124] sm:$0xf]
        %v1237 = vld [vmem:[#allocation8 + $0x128] sm:$0xf]
        %v1238 = vld [vmem:[#allocation8 + $0x12c] sm:$0xf]
        %v1239 = vld [vmem:[#allocation8 + $0x130] sm:$0xf]
        %v1240 = vld [vmem:[#allocation8 + $0x134] sm:$0xf]
        %v1241 = vld [vmem:[#allocation8 + $0x138] sm:$0xf]
        %v1242 = vld [vmem:[#allocation8 + $0x13c] sm:$0xf]
        %v1243 = vld [vmem:[#allocation8 + $0x140] sm:$0xf]
        %v1244 = vld [vmem:[#allocation8 + $0x144] sm:$0xf]
        %v1245 = vld [vmem:[#allocation8 + $0x148] sm:$0xf]
        %v1246 = vld [vmem:[#allocation8 + $0x14c] sm:$0xf]
        %v1247 = vld [vmem:[#allocation8 + $0x150] sm:$0xf]
        %v1248 = vld [vmem:[#allocation8 + $0x154] sm:$0xf]
        %v1249 = vld [vmem:[#allocation8 + $0x158] sm:$0xf]
        %v1250 = vld [vmem:[#allocation8 + $0x15c] sm:$0xf]
        %v1251 = vld [vmem:[#allocation8 + $0x160] sm:$0xf]
        %v1252 = vld [vmem:[#allocation8 + $0x164] sm:$0xf]
        %v1253 = vld [vmem:[#allocation8 + $0x168] sm:$0xf]
        %v1254 = vld [vmem:[#allocation8 + $0x16c] sm:$0xf]
        %v1255 = vld [vmem:[#allocation8 + $0x170] sm:$0xf]
        %v1256 = vld [vmem:[#allocation8 + $0x174] sm:$0xf]
        %v1257 = vld [vmem:[#allocation8 + $0x178] sm:$0xf]
        %v1258 = vld [vmem:[#allocation8 + $0x17c] sm:$0xf]
        %v1259 = vld [vmem:[#allocation8 + $0x180] sm:$0xf]
        %v1260 = vld [vmem:[#allocation8 + $0x184] sm:$0xf]
        %v1261 = vld [vmem:[#allocation8 + $0x188] sm:$0xf]
        %v1262 = vld [vmem:[#allocation8 + $0x18c] sm:$0xf]
        %v1263 = vld [vmem:[#allocation8 + $0x190] sm:$0xf]
        %v1264 = vld [vmem:[#allocation8 + $0x194] sm:$0xf]
        %v1265 = vld [vmem:[#allocation8 + $0x198] sm:$0xf]
        %v1266 = vld [vmem:[#allocation8 + $0x19c] sm:$0xf]
        %v1267 = vld [vmem:[#allocation8 + $0x1a0] sm:$0xf]
        %v1268 = vld [vmem:[#allocation8 + $0x1a4] sm:$0xf]
        %v1269 = vld [vmem:[#allocation8 + $0x1a8] sm:$0xf]
        %v1270 = vld [vmem:[#allocation8 + $0x1ac] sm:$0xf]
        %v1271 = vld [vmem:[#allocation8 + $0x1b0] sm:$0xf]
        %v1272 = vld [vmem:[#allocation8 + $0x1b4] sm:$0xf]
        %v1273 = vld [vmem:[#allocation8 + $0x1b8] sm:$0xf]
        %v1274 = vld [vmem:[#allocation8 + $0x1bc] sm:$0xf]
        %v1275 = vld [vmem:[#allocation8 + $0x1c0] sm:$0xf]
        %v1276 = vld [vmem:[#allocation8 + $0x1c4] sm:$0xf]
        %v1277 = vld [vmem:[#allocation8 + $0x1c8] sm:$0xf]
        %v1278 = vld [vmem:[#allocation8 + $0x1cc] sm:$0xf]
        %v1279 = vld [vmem:[#allocation8 + $0x1d0] sm:$0xf]
        %v1280 = vld [vmem:[#allocation8 + $0x1d4] sm:$0xf]
        %v1281 = vld [vmem:[#allocation8 + $0x1d8] sm:$0xf]
        %v1282 = vld [vmem:[#allocation8 + $0x1dc] sm:$0xf]
        %v1283 = vld [vmem:[#allocation8 + $0x1e0] sm:$0xf]
        %v1284 = vld [vmem:[#allocation8 + $0x1e4] sm:$0xf]
        %v1285 = vld [vmem:[#allocation8 + $0x1e8] sm:$0xf]
        %v1286 = vld [vmem:[#allocation8 + $0x1ec] sm:$0xf]
        %v1287 = vld [vmem:[#allocation8 + $0x1f0] sm:$0xf]
        %v1288 = vld [vmem:[#allocation8 + $0x1f4] sm:$0xf]
        %v1289 = vld [vmem:[#allocation8 + $0x1f8] sm:$0xf]
        %v1290 = vld [vmem:[#allocation8 + $0x1fc] sm:$0xf]
        %v1291 = vld [vmem:[#allocation8 + $0x200] sm:$0xf]
        %v1292 = vld [vmem:[#allocation8 + $0x204] sm:$0xf]
        %v1293 = vld [vmem:[#allocation8 + $0x208] sm:$0xf]
        %v1294 = vld [vmem:[#allocation8 + $0x20c] sm:$0xf]
        %v1295 = vld [vmem:[#allocation8 + $0x210] sm:$0xf]
        %v1296 = vld [vmem:[#allocation8 + $0x214] sm:$0xf]
        %v1297 = vld [vmem:[#allocation8 + $0x218] sm:$0xf]
        %v1298 = vld [vmem:[#allocation8 + $0x21c] sm:$0xf]
        %v1299 = vld [vmem:[#allocation8 + $0x220] sm:$0xf]
        %v1300 = vld [vmem:[#allocation8 + $0x224] sm:$0xf]
        %v1301 = vld [vmem:[#allocation8 + $0x228] sm:$0xf]
        %v1302 = vld [vmem:[#allocation8 + $0x22c] sm:$0xf]
        %v1303 = vld [vmem:[#allocation8 + $0x230] sm:$0xf]
        %v1304 = vld [vmem:[#allocation8 + $0x234] sm:$0xf]
        %v1305 = vld [vmem:[#allocation8 + $0x238] sm:$0xf]
        %v1306 = vld [vmem:[#allocation8 + $0x23c] sm:$0xf]
        %v1307 = vld [vmem:[%s4] sm:$0x1]
        %v1309 = vlaneseq
        %v1310 = vshrl.u32 %v1309, 7
        %v1311 = vsub.s32 0, %v1310
        %v1312 = vrot.slane %v1307, %v1311
        %v1458 = vunpack.c.l.b16 %v1163
        %v1459 = vunpack.c.l.b16 %v1164
        %v1460 = vunpack.c.l.b16 %v1165
        %v1461 = vunpack.c.l.b16 %v1166
        %v1462 = vunpack.c.l.b16 %v1167
        %v1463 = vunpack.c.l.b16 %v1168
        %v1464 = vunpack.c.l.b16 %v1169
        %v1465 = vunpack.c.l.b16 %v1170
        %v1466 = vunpack.c.l.b16 %v1171
        %v1467 = vunpack.c.l.b16 %v1172
        %v1468 = vunpack.c.l.b16 %v1173
        %v1469 = vunpack.c.l.b16 %v1174
        %v1470 = vunpack.c.l.b16 %v1175
        %v1471 = vunpack.c.l.b16 %v1176
        %v1472 = vunpack.c.l.b16 %v1177
        %v1473 = vunpack.c.l.b16 %v1178
        %v1474 = vunpack.c.l.b16 %v1179
        %v1475 = vunpack.c.l.b16 %v1180
        %v1476 = vunpack.c.l.b16 %v1181
        %v1477 = vunpack.c.l.b16 %v1182
        %v1478 = vunpack.c.l.b16 %v1183
        %v1479 = vunpack.c.l.b16 %v1184
        %v1480 = vunpack.c.l.b16 %v1185
        %v1481 = vunpack.c.l.b16 %v1186
        %v1482 = vunpack.c.l.b16 %v1187
        %v1483 = vunpack.c.l.b16 %v1188
        %v1484 = vunpack.c.l.b16 %v1189
        %v1485 = vunpack.c.l.b16 %v1190
        %v1486 = vunpack.c.l.b16 %v1191
        %v1487 = vunpack.c.l.b16 %v1192
        %v1488 = vunpack.c.l.b16 %v1193
        %v1489 = vunpack.c.l.b16 %v1194
        %v1490 = vunpack.c.l.b16 %v1195
        %v1491 = vunpack.c.l.b16 %v1196
        %v1492 = vunpack.c.l.b16 %v1197
        %v1493 = vunpack.c.l.b16 %v1198
        %v1494 = vunpack.c.l.b16 %v1199
        %v1495 = vunpack.c.l.b16 %v1200
        %v1496 = vunpack.c.l.b16 %v1201
        %v1497 = vunpack.c.l.b16 %v1202
        %v1498 = vunpack.c.l.b16 %v1203
        %v1499 = vunpack.c.l.b16 %v1204
        %v1500 = vunpack.c.l.b16 %v1205
        %v1501 = vunpack.c.l.b16 %v1206
        %v1502 = vunpack.c.l.b16 %v1207
        %v1503 = vunpack.c.l.b16 %v1208
        %v1504 = vunpack.c.l.b16 %v1209
        %v1505 = vunpack.c.l.b16 %v1210
        %v1506 = vunpack.c.l.b16 %v1211
        %v1507 = vunpack.c.l.b16 %v1212
        %v1508 = vunpack.c.l.b16 %v1213
        %v1509 = vunpack.c.l.b16 %v1214
        %v1510 = vunpack.c.l.b16 %v1215
        %v1511 = vunpack.c.l.b16 %v1216
        %v1512 = vunpack.c.l.b16 %v1217
        %v1513 = vunpack.c.l.b16 %v1218
        %v1514 = vunpack.c.l.b16 %v1219
        %v1515 = vunpack.c.l.b16 %v1220
        %v1516 = vunpack.c.l.b16 %v1221
        %v1517 = vunpack.c.l.b16 %v1222
        %v1518 = vunpack.c.l.b16 %v1223
        %v1519 = vunpack.c.l.b16 %v1224
        %v1520 = vunpack.c.l.b16 %v1225
        %v1521 = vunpack.c.l.b16 %v1226
        %v1522 = vunpack.c.l.b16 %v1227
        %v1523 = vunpack.c.l.b16 %v1228
        %v1524 = vunpack.c.l.b16 %v1229
        %v1525 = vunpack.c.l.b16 %v1230
        %v1526 = vunpack.c.l.b16 %v1231
        %v1527 = vunpack.c.l.b16 %v1232
        %v1528 = vunpack.c.l.b16 %v1233
        %v1529 = vunpack.c.l.b16 %v1234
        %v1530 = vunpack.c.l.b16 %v1235
        %v1531 = vunpack.c.l.b16 %v1236
        %v1532 = vunpack.c.l.b16 %v1237
        %v1533 = vunpack.c.l.b16 %v1238
        %v1534 = vunpack.c.l.b16 %v1239
        %v1535 = vunpack.c.l.b16 %v1240
        %v1536 = vunpack.c.l.b16 %v1241
        %v1537 = vunpack.c.l.b16 %v1242
        %v1538 = vunpack.c.l.b16 %v1243
        %v1539 = vunpack.c.l.b16 %v1244
        %v1540 = vunpack.c.l.b16 %v1245
        %v1541 = vunpack.c.l.b16 %v1246
        %v1542 = vunpack.c.l.b16 %v1247
        %v1543 = vunpack.c.l.b16 %v1248
        %v1544 = vunpack.c.l.b16 %v1249
        %v1545 = vunpack.c.l.b16 %v1250
        %v1546 = vunpack.c.l.b16 %v1251
        %v1547 = vunpack.c.l.b16 %v1252
        %v1548 = vunpack.c.l.b16 %v1253
        %v1549 = vunpack.c.l.b16 %v1254
        %v1550 = vunpack.c.l.b16 %v1255
        %v1551 = vunpack.c.l.b16 %v1256
        %v1552 = vunpack.c.l.b16 %v1257
        %v1553 = vunpack.c.l.b16 %v1258
        %v1554 = vunpack.c.l.b16 %v1259
        %v1555 = vunpack.c.l.b16 %v1260
        %v1556 = vunpack.c.l.b16 %v1261
        %v1557 = vunpack.c.l.b16 %v1262
        %v1558 = vunpack.c.l.b16 %v1263
        %v1559 = vunpack.c.l.b16 %v1264
        %v1560 = vunpack.c.l.b16 %v1265
        %v1561 = vunpack.c.l.b16 %v1266
        %v1562 = vunpack.c.l.b16 %v1267
        %v1563 = vunpack.c.l.b16 %v1268
        %v1564 = vunpack.c.l.b16 %v1269
        %v1565 = vunpack.c.l.b16 %v1270
        %v1566 = vunpack.c.l.b16 %v1271
        %v1567 = vunpack.c.l.b16 %v1272
        %v1568 = vunpack.c.l.b16 %v1273
        %v1569 = vunpack.c.l.b16 %v1274
        %v1570 = vunpack.c.l.b16 %v1275
        %v1571 = vunpack.c.l.b16 %v1276
        %v1572 = vunpack.c.l.b16 %v1277
        %v1573 = vunpack.c.l.b16 %v1278
        %v1574 = vunpack.c.l.b16 %v1279
        %v1575 = vunpack.c.l.b16 %v1280
        %v1576 = vunpack.c.l.b16 %v1281
        %v1577 = vunpack.c.l.b16 %v1282
        %v1578 = vunpack.c.l.b16 %v1283
        %v1579 = vunpack.c.l.b16 %v1284
        %v1580 = vunpack.c.l.b16 %v1285
        %v1581 = vunpack.c.l.b16 %v1286
        %v1582 = vunpack.c.l.b16 %v1287
        %v1583 = vunpack.c.l.b16 %v1288
        %v1584 = vunpack.c.l.b16 %v1289
        %v1585 = vunpack.c.l.b16 %v1290
        %v1586 = vunpack.c.l.b16 %v1291
        %v1587 = vunpack.c.l.b16 %v1292
        %v1588 = vunpack.c.l.b16 %v1293
        %v1589 = vunpack.c.l.b16 %v1294
        %v1590 = vunpack.c.l.b16 %v1295
        %v1591 = vunpack.c.l.b16 %v1296
        %v1592 = vunpack.c.l.b16 %v1297
        %v1593 = vunpack.c.l.b16 %v1298
        %v1594 = vunpack.c.l.b16 %v1299
        %v1595 = vunpack.c.l.b16 %v1300
        %v1596 = vunpack.c.l.b16 %v1301
        %v1597 = vunpack.c.l.b16 %v1302
        %v1598 = vunpack.c.l.b16 %v1303
        %v1599 = vunpack.c.l.b16 %v1304
        %v1600 = vunpack.c.l.b16 %v1305
        %v1601 = vunpack.c.l.b16 %v1306
        %v1602 = vpack.c.b16 %v1459, %v1458
        %v1603 = vpack.c.b16 %v1461, %v1460
        %v1604 = vpack.c.b16 %v1463, %v1462
        %v1605 = vpack.c.b16 %v1465, %v1464
        %v1606 = vpack.c.b16 %v1467, %v1466
        %v1607 = vpack.c.b16 %v1469, %v1468
        %v1608 = vpack.c.b16 %v1471, %v1470
        %v1609 = vpack.c.b16 %v1473, %v1472
        %v1610 = vpack.c.b16 %v1475, %v1474
        %v1611 = vpack.c.b16 %v1477, %v1476
        %v1612 = vpack.c.b16 %v1479, %v1478
        %v1613 = vpack.c.b16 %v1481, %v1480
        %v1614 = vpack.c.b16 %v1483, %v1482
        %v1615 = vpack.c.b16 %v1485, %v1484
        %v1616 = vpack.c.b16 %v1487, %v1486
        %v1617 = vpack.c.b16 %v1489, %v1488
        %v1618 = vpack.c.b16 %v1491, %v1490
        %v1619 = vpack.c.b16 %v1493, %v1492
        %v1620 = vpack.c.b16 %v1495, %v1494
        %v1621 = vpack.c.b16 %v1497, %v1496
        %v1622 = vpack.c.b16 %v1499, %v1498
        %v1623 = vpack.c.b16 %v1501, %v1500
        %v1624 = vpack.c.b16 %v1503, %v1502
        %v1625 = vpack.c.b16 %v1505, %v1504
        %v1626 = vpack.c.b16 %v1507, %v1506
        %v1627 = vpack.c.b16 %v1509, %v1508
        %v1628 = vpack.c.b16 %v1511, %v1510
        %v1629 = vpack.c.b16 %v1513, %v1512
        %v1630 = vpack.c.b16 %v1515, %v1514
        %v1631 = vpack.c.b16 %v1517, %v1516
        %v1632 = vpack.c.b16 %v1519, %v1518
        %v1633 = vpack.c.b16 %v1521, %v1520
        %v1634 = vpack.c.b16 %v1523, %v1522
        %v1635 = vpack.c.b16 %v1525, %v1524
        %v1636 = vpack.c.b16 %v1527, %v1526
        %v1637 = vpack.c.b16 %v1529, %v1528
        %v1638 = vpack.c.b16 %v1531, %v1530
        %v1639 = vpack.c.b16 %v1533, %v1532
        %v1640 = vpack.c.b16 %v1535, %v1534
        %v1641 = vpack.c.b16 %v1537, %v1536
        %v1642 = vpack.c.b16 %v1539, %v1538
        %v1643 = vpack.c.b16 %v1541, %v1540
        %v1644 = vpack.c.b16 %v1543, %v1542
        %v1645 = vpack.c.b16 %v1545, %v1544
        %v1646 = vpack.c.b16 %v1547, %v1546
        %v1647 = vpack.c.b16 %v1549, %v1548
        %v1648 = vpack.c.b16 %v1551, %v1550
        %v1649 = vpack.c.b16 %v1553, %v1552
        %v1650 = vpack.c.b16 %v1555, %v1554
        %v1651 = vpack.c.b16 %v1557, %v1556
        %v1652 = vpack.c.b16 %v1559, %v1558
        %v1653 = vpack.c.b16 %v1561, %v1560
        %v1654 = vpack.c.b16 %v1563, %v1562
        %v1655 = vpack.c.b16 %v1565, %v1564
        %v1656 = vpack.c.b16 %v1567, %v1566
        %v1657 = vpack.c.b16 %v1569, %v1568
        %v1658 = vpack.c.b16 %v1571, %v1570
        %v1659 = vpack.c.b16 %v1573, %v1572
        %v1660 = vpack.c.b16 %v1575, %v1574
        %v1661 = vpack.c.b16 %v1577, %v1576
        %v1662 = vpack.c.b16 %v1579, %v1578
        %v1663 = vpack.c.b16 %v1581, %v1580
        %v1664 = vpack.c.b16 %v1583, %v1582
        %v1665 = vpack.c.b16 %v1585, %v1584
        %v1666 = vpack.c.b16 %v1587, %v1586
        %v1667 = vpack.c.b16 %v1589, %v1588
        %v1668 = vpack.c.b16 %v1591, %v1590
        %v1669 = vpack.c.b16 %v1593, %v1592
        %v1670 = vpack.c.b16 %v1595, %v1594
        %v1671 = vpack.c.b16 %v1597, %v1596
        %v1672 = vpack.c.b16 %v1599, %v1598
        %v1673 = vpack.c.b16 %v1601, %v1600
        %1746 = vmatprep.subr.bf16.mxu0 0
        %1747 = vmatpush1.bf16.msra.mxu0 %v1609
        %1748 = vmatprep.subr.bf16.mxu0 0
        %1749 = vmatpush1.bf16.msra.mxu0 %v1608
        %1750 = vmatprep.subr.bf16.mxu0 0
        %1751 = vmatpush1.bf16.msra.mxu0 %v1607
        %1752 = vmatprep.subr.bf16.mxu0 0
        %1753 = vmatpush1.bf16.msra.mxu0 %v1606
        %1754 = vmatprep.subr.bf16.mxu0 0
        %1755 = vmatpush1.bf16.msra.mxu0 %v1605
        %1756 = vmatprep.subr.bf16.mxu0 0
        %1757 = vmatpush1.bf16.msra.mxu0 %v1604
        %1758 = vmatprep.subr.bf16.mxu0 0
        %1759 = vmatpush1.bf16.msra.mxu0 %v1603
        %1760 = vmatprep.subr.bf16.mxu0 0
        %1761 = vmatpush1.bf16.msra.mxu0 %v1602
        %1762 = vmatprep.subr.bf16.mxu0 0
        %1763 = vmatpush2.bf16.msra.mxu0 %v1617
        %1764 = vmatprep.subr.bf16.mxu0 0
        %1765 = vmatpush2.bf16.msra.mxu0 %v1616
        %1766 = vmatprep.subr.bf16.mxu0 0
        %1767 = vmatpush2.bf16.msra.mxu0 %v1615
        %1768 = vmatprep.subr.bf16.mxu0 0
        %1769 = vmatpush2.bf16.msra.mxu0 %v1614
        %1770 = vmatprep.subr.bf16.mxu0 0
        %1771 = vmatpush2.bf16.msra.mxu0 %v1613
        %1772 = vmatprep.subr.bf16.mxu0 0
        %1773 = vmatpush2.bf16.msra.mxu0 %v1612
        %1774 = vmatprep.subr.bf16.mxu0 0
        %1775 = vmatpush2.bf16.msra.mxu0 %v1611
        %1776 = vmatprep.subr.bf16.mxu0 0
        %1777 = vmatpush2.bf16.msra.mxu0 %v1610
        %1778 = vmatprep.mubr.bf16.mxu0 %v810
        %1779 = vmatmul.mubr.bf16.gmra.mxu0 %v762
        %v1780 = vpop.f32.mrf.mxu0
        %v1781 = vadd.f32 %v1312, %v1780
        %v1782 = vpop.f32.mrf.mxu0
        %v1783 = vpop.f32.mrf.mxu0
        %v1784 = vadd.f32 %v1312, %v1783
        %v1785 = vpop.f32.mrf.mxu0
        %1786 = vmatprep.mubr.bf16.mxu0 %v811
        %1787 = vmatmul.mubr.bf16.gmra.mxu0 %v763
        %v1788 = vpop.f32.mrf.mxu0
        %v1789 = vadd.f32 %v1312, %v1788
        %v1790 = vpop.f32.mrf.mxu0
        %v1791 = vpop.f32.mrf.mxu0
        %v1792 = vadd.f32 %v1312, %v1791
        %v1793 = vpop.f32.mrf.mxu0
        %1794 = vmatprep.mubr.bf16.mxu0 %v812
        %1795 = vmatmul.mubr.bf16.gmra.mxu0 %v764
        %v1796 = vpop.f32.mrf.mxu0
        %v1797 = vadd.f32 %v1312, %v1796
        %v1798 = vpop.f32.mrf.mxu0
        %v1799 = vpop.f32.mrf.mxu0
        %v1800 = vadd.f32 %v1312, %v1799
        %v1801 = vpop.f32.mrf.mxu0
        %1802 = vmatprep.mubr.bf16.mxu0 %v813
        %1803 = vmatmul.mubr.bf16.gmra.mxu0 %v765
        %v1804 = vpop.f32.mrf.mxu0
        %v1805 = vadd.f32 %v1312, %v1804
        %v1806 = vpop.f32.mrf.mxu0
        %v1807 = vpop.f32.mrf.mxu0
        %v1808 = vadd.f32 %v1312, %v1807
        %v1809 = vpop.f32.mrf.mxu0
        %1810 = vmatprep.mubr.bf16.mxu0 %v814
        %1811 = vmatmul.mubr.bf16.gmra.mxu0 %v766
        %v1812 = vpop.f32.mrf.mxu0
        %v1813 = vadd.f32 %v1312, %v1812
        %v1814 = vpop.f32.mrf.mxu0
        %v1815 = vpop.f32.mrf.mxu0
        %v1816 = vadd.f32 %v1312, %v1815
        %v1817 = vpop.f32.mrf.mxu0
        %1818 = vmatprep.mubr.bf16.mxu0 %v815
        %1819 = vmatmul.mubr.bf16.gmra.mxu0 %v767
        %v1820 = vpop.f32.mrf.mxu0
        %v1821 = vadd.f32 %v1312, %v1820
        %v1822 = vpop.f32.mrf.mxu0
        %v1823 = vpop.f32.mrf.mxu0
        %v1824 = vadd.f32 %v1312, %v1823
        %v1825 = vpop.f32.mrf.mxu0
        %1826 = vmatprep.mubr.bf16.mxu0 %v816
        %1827 = vmatmul.mubr.bf16.gmra.mxu0 %v768
        %v1828 = vpop.f32.mrf.mxu0
        %v1829 = vadd.f32 %v1312, %v1828
        %v1830 = vpop.f32.mrf.mxu0
        %v1831 = vpop.f32.mrf.mxu0
        %v1832 = vadd.f32 %v1312, %v1831
        %v1833 = vpop.f32.mrf.mxu0
        %1834 = vmatprep.mubr.bf16.mxu0 %v817
        %1835 = vmatmul.mubr.bf16.gmra.mxu0 %v769
        %v1836 = vpop.f32.mrf.mxu0
        %v1837 = vadd.f32 %v1312, %v1836
        %v1838 = vpop.f32.mrf.mxu0
        %v1839 = vpop.f32.mrf.mxu0
        %v1840 = vadd.f32 %v1312, %v1839
        %v1841 = vpop.f32.mrf.mxu0
        %1842 = vmatprep.mubr.bf16.mxu0 %v818
        %1843 = vmatmul.mubr.bf16.gmra.mxu0 %v770
        %v1844 = vpop.f32.mrf.mxu0
        %v1845 = vadd.f32 %v1312, %v1844
        %v1846 = vpop.f32.mrf.mxu0
        %v1847 = vpop.f32.mrf.mxu0
        %v1848 = vadd.f32 %v1312, %v1847
        %v1849 = vpop.f32.mrf.mxu0
        %1850 = vmatprep.mubr.bf16.mxu0 %v819
        %1851 = vmatmul.mubr.bf16.gmra.mxu0 %v771
        %v1852 = vpop.f32.mrf.mxu0
        %v1853 = vadd.f32 %v1312, %v1852
        %v1854 = vpop.f32.mrf.mxu0
        %v1855 = vpop.f32.mrf.mxu0
        %v1856 = vadd.f32 %v1312, %v1855
        %v1857 = vpop.f32.mrf.mxu0
        %1858 = vmatprep.mubr.bf16.mxu0 %v820
        %1859 = vmatmul.mubr.bf16.gmra.mxu0 %v772
        %v1860 = vpop.f32.mrf.mxu0
        %v1861 = vadd.f32 %v1312, %v1860
        %v1862 = vpop.f32.mrf.mxu0
        %v1863 = vpop.f32.mrf.mxu0
        %v1864 = vadd.f32 %v1312, %v1863
        %v1865 = vpop.f32.mrf.mxu0
        %1866 = vmatprep.mubr.bf16.mxu0 %v821
        %1867 = vmatmul.mubr.bf16.gmra.mxu0 %v773
        %v1868 = vpop.f32.mrf.mxu0
        %v1869 = vadd.f32 %v1312, %v1868
        %v1870 = vpop.f32.mrf.mxu0
        %v1871 = vpop.f32.mrf.mxu0
        %v1872 = vadd.f32 %v1312, %v1871
        %v1873 = vpop.f32.mrf.mxu0
        %1874 = vmatprep.mubr.bf16.mxu0 %v822
        %1875 = vmatmul.mubr.bf16.gmra.mxu0 %v774
        %v1876 = vpop.f32.mrf.mxu0
        %v1877 = vadd.f32 %v1312, %v1876
        %v1878 = vpop.f32.mrf.mxu0
        %v1879 = vpop.f32.mrf.mxu0
        %v1880 = vadd.f32 %v1312, %v1879
        %v1881 = vpop.f32.mrf.mxu0
        %1882 = vmatprep.mubr.bf16.mxu0 %v823
        %1883 = vmatmul.mubr.bf16.gmra.mxu0 %v775
        %v1884 = vpop.f32.mrf.mxu0
        %v1885 = vadd.f32 %v1312, %v1884
        %v1886 = vpop.f32.mrf.mxu0
        %v1887 = vpop.f32.mrf.mxu0
        %v1888 = vadd.f32 %v1312, %v1887
        %v1889 = vpop.f32.mrf.mxu0
        %1890 = vmatprep.mubr.bf16.mxu0 %v824
        %1891 = vmatmul.mubr.bf16.gmra.mxu0 %v776
        %v1892 = vpop.f32.mrf.mxu0
        %v1893 = vadd.f32 %v1312, %v1892
        %v1894 = vpop.f32.mrf.mxu0
        %v1895 = vpop.f32.mrf.mxu0
        %v1896 = vadd.f32 %v1312, %v1895
        %v1897 = vpop.f32.mrf.mxu0
        %1898 = vmatprep.mubr.bf16.mxu0 %v825
        %1899 = vmatmul.mubr.bf16.gmra.mxu0 %v777
        %v1900 = vpop.f32.mrf.mxu0
        %v1901 = vadd.f32 %v1312, %v1900
        %v1902 = vpop.f32.mrf.mxu0
        %v1903 = vpop.f32.mrf.mxu0
        %v1904 = vadd.f32 %v1312, %v1903
        %v1905 = vpop.f32.mrf.mxu0
        %1906 = vdwg.mxu0
        %1907 = vmatprep.subr.bf16.mxu0 0
        %1908 = vmatpush1.bf16.msra.mxu0 %v1625
        %1909 = vmatprep.subr.bf16.mxu0 0
        %1910 = vmatpush1.bf16.msra.mxu0 %v1624
        %1911 = vmatprep.subr.bf16.mxu0 0
        %1912 = vmatpush1.bf16.msra.mxu0 %v1623
        %1913 = vmatprep.subr.bf16.mxu0 0
        %1914 = vmatpush1.bf16.msra.mxu0 %v1622
        %1915 = vmatprep.subr.bf16.mxu0 0
        %1916 = vmatpush1.bf16.msra.mxu0 %v1621
        %1917 = vmatprep.subr.bf16.mxu0 0
        %1918 = vmatpush1.bf16.msra.mxu0 %v1620
        %1919 = vmatprep.subr.bf16.mxu0 0
        %1920 = vmatpush1.bf16.msra.mxu0 %v1619
        %1921 = vmatprep.subr.bf16.mxu0 0
        %1922 = vmatpush1.bf16.msra.mxu0 %v1618
        %1923 = vmatprep.subr.bf16.mxu0 0
        %1924 = vmatpush2.bf16.msra.mxu0 %v1633
        %1925 = vmatprep.subr.bf16.mxu0 0
        %1926 = vmatpush2.bf16.msra.mxu0 %v1632
        %1927 = vmatprep.subr.bf16.mxu0 0
        %1928 = vmatpush2.bf16.msra.mxu0 %v1631
        %1929 = vmatprep.subr.bf16.mxu0 0
        %1930 = vmatpush2.bf16.msra.mxu0 %v1630
        %1931 = vmatprep.subr.bf16.mxu0 0
        %1932 = vmatpush2.bf16.msra.mxu0 %v1629
        %1933 = vmatprep.subr.bf16.mxu0 0
        %1934 = vmatpush2.bf16.msra.mxu0 %v1628
        %1935 = vmatprep.subr.bf16.mxu0 0
        %1936 = vmatpush2.bf16.msra.mxu0 %v1627
        %1937 = vmatprep.subr.bf16.mxu0 0
        %1938 = vmatpush2.bf16.msra.mxu0 %v1626
        %1939 = vmatprep.mubr.bf16.mxu0 %v906
        %1940 = vmatmul.mubr.bf16.gmra.mxu0 %v858
        %v1941 = vpop.f32.mrf.mxu0
        %v1942 = vadd.f32 %v1781, %v1941
        %v1943 = vpop.f32.mrf.mxu0
        %v1944 = vpop.f32.mrf.mxu0
        %v1945 = vadd.f32 %v1784, %v1944
        %v1946 = vpop.f32.mrf.mxu0
        %1947 = vmatprep.mubr.bf16.mxu0 %v907
        %1948 = vmatmul.mubr.bf16.gmra.mxu0 %v859
        %v1949 = vpop.f32.mrf.mxu0
        %v1950 = vadd.f32 %v1789, %v1949
        %v1951 = vpop.f32.mrf.mxu0
        %v1952 = vpop.f32.mrf.mxu0
        %v1953 = vadd.f32 %v1792, %v1952
        %v1954 = vpop.f32.mrf.mxu0
        %1955 = vmatprep.mubr.bf16.mxu0 %v908
        %1956 = vmatmul.mubr.bf16.gmra.mxu0 %v860
        %v1957 = vpop.f32.mrf.mxu0
        %v1958 = vadd.f32 %v1797, %v1957
        %v1959 = vpop.f32.mrf.mxu0
        %v1960 = vpop.f32.mrf.mxu0
        %v1961 = vadd.f32 %v1800, %v1960
        %v1962 = vpop.f32.mrf.mxu0
        %1963 = vmatprep.mubr.bf16.mxu0 %v909
        %1964 = vmatmul.mubr.bf16.gmra.mxu0 %v861
        %v1965 = vpop.f32.mrf.mxu0
        %v1966 = vadd.f32 %v1805, %v1965
        %v1967 = vpop.f32.mrf.mxu0
        %v1968 = vpop.f32.mrf.mxu0
        %v1969 = vadd.f32 %v1808, %v1968
        %v1970 = vpop.f32.mrf.mxu0
        %1971 = vmatprep.mubr.bf16.mxu0 %v910
        %1972 = vmatmul.mubr.bf16.gmra.mxu0 %v862
        %v1973 = vpop.f32.mrf.mxu0
        %v1974 = vadd.f32 %v1813, %v1973
        %v1975 = vpop.f32.mrf.mxu0
        %v1976 = vpop.f32.mrf.mxu0
        %v1977 = vadd.f32 %v1816, %v1976
        %v1978 = vpop.f32.mrf.mxu0
        %1979 = vmatprep.mubr.bf16.mxu0 %v911
        %1980 = vmatmul.mubr.bf16.gmra.mxu0 %v863
        %v1981 = vpop.f32.mrf.mxu0
        %v1982 = vadd.f32 %v1821, %v1981
        %v1983 = vpop.f32.mrf.mxu0
        %v1984 = vpop.f32.mrf.mxu0
        %v1985 = vadd.f32 %v1824, %v1984
        %v1986 = vpop.f32.mrf.mxu0
        %1987 = vmatprep.mubr.bf16.mxu0 %v912
        %1988 = vmatmul.mubr.bf16.gmra.mxu0 %v864
        %v1989 = vpop.f32.mrf.mxu0
        %v1990 = vadd.f32 %v1829, %v1989
        %v1991 = vpop.f32.mrf.mxu0
        %v1992 = vpop.f32.mrf.mxu0
        %v1993 = vadd.f32 %v1832, %v1992
        %v1994 = vpop.f32.mrf.mxu0
        %1995 = vmatprep.mubr.bf16.mxu0 %v913
        %1996 = vmatmul.mubr.bf16.gmra.mxu0 %v865
        %v1997 = vpop.f32.mrf.mxu0
        %v1998 = vadd.f32 %v1837, %v1997
        %v1999 = vpop.f32.mrf.mxu0
        %v2000 = vpop.f32.mrf.mxu0
        %v2001 = vadd.f32 %v1840, %v2000
        %v2002 = vpop.f32.mrf.mxu0
        %2003 = vmatprep.mubr.bf16.mxu0 %v914
        %2004 = vmatmul.mubr.bf16.gmra.mxu0 %v866
        %v2005 = vpop.f32.mrf.mxu0
        %v2006 = vadd.f32 %v1845, %v2005
        %v2007 = vpop.f32.mrf.mxu0
        %v2008 = vpop.f32.mrf.mxu0
        %v2009 = vadd.f32 %v1848, %v2008
        %v2010 = vpop.f32.mrf.mxu0
        %2011 = vmatprep.mubr.bf16.mxu0 %v915
        %2012 = vmatmul.mubr.bf16.gmra.mxu0 %v867
        %v2013 = vpop.f32.mrf.mxu0
        %v2014 = vadd.f32 %v1853, %v2013
        %v2015 = vpop.f32.mrf.mxu0
        %v2016 = vpop.f32.mrf.mxu0
        %v2017 = vadd.f32 %v1856, %v2016
        %v2018 = vpop.f32.mrf.mxu0
        %2019 = vmatprep.mubr.bf16.mxu0 %v916
        %2020 = vmatmul.mubr.bf16.gmra.mxu0 %v868
        %v2021 = vpop.f32.mrf.mxu0
        %v2022 = vadd.f32 %v1861, %v2021
        %v2023 = vpop.f32.mrf.mxu0
        %v2024 = vpop.f32.mrf.mxu0
        %v2025 = vadd.f32 %v1864, %v2024
        %v2026 = vpop.f32.mrf.mxu0
        %2027 = vmatprep.mubr.bf16.mxu0 %v917
        %2028 = vmatmul.mubr.bf16.gmra.mxu0 %v869
        %v2029 = vpop.f32.mrf.mxu0
        %v2030 = vadd.f32 %v1869, %v2029
        %v2031 = vpop.f32.mrf.mxu0
        %v2032 = vpop.f32.mrf.mxu0
        %v2033 = vadd.f32 %v1872, %v2032
        %v2034 = vpop.f32.mrf.mxu0
        %2035 = vmatprep.mubr.bf16.mxu0 %v918
        %2036 = vmatmul.mubr.bf16.gmra.mxu0 %v870
        %v2037 = vpop.f32.mrf.mxu0
        %v2038 = vadd.f32 %v1877, %v2037
        %v2039 = vpop.f32.mrf.mxu0
        %v2040 = vpop.f32.mrf.mxu0
        %v2041 = vadd.f32 %v1880, %v2040
        %v2042 = vpop.f32.mrf.mxu0
        %2043 = vmatprep.mubr.bf16.mxu0 %v919
        %2044 = vmatmul.mubr.bf16.gmra.mxu0 %v871
        %v2045 = vpop.f32.mrf.mxu0
        %v2046 = vadd.f32 %v1885, %v2045
        %v2047 = vpop.f32.mrf.mxu0
        %v2048 = vpop.f32.mrf.mxu0
        %v2049 = vadd.f32 %v1888, %v2048
        %v2050 = vpop.f32.mrf.mxu0
        %2051 = vmatprep.mubr.bf16.mxu0 %v920
        %2052 = vmatmul.mubr.bf16.gmra.mxu0 %v872
        %v2053 = vpop.f32.mrf.mxu0
        %v2054 = vadd.f32 %v1893, %v2053
        %v2055 = vpop.f32.mrf.mxu0
        %v2056 = vpop.f32.mrf.mxu0
        %v2057 = vadd.f32 %v1896, %v2056
        %v2058 = vpop.f32.mrf.mxu0
        %2059 = vmatprep.mubr.bf16.mxu0 %v921
        %2060 = vmatmul.mubr.bf16.gmra.mxu0 %v873
        %v2061 = vpop.f32.mrf.mxu0
        %v2062 = vadd.f32 %v1901, %v2061
        %v2063 = vpop.f32.mrf.mxu0
        %v2064 = vpop.f32.mrf.mxu0
        %v2065 = vadd.f32 %v1904, %v2064
        %v2066 = vpop.f32.mrf.mxu0
        %2067 = vdwg.mxu0
        %2068 = vmatprep.subr.bf16.mxu0 0
        %2069 = vmatpush1.bf16.msra.mxu0 %v1641
        %2070 = vmatprep.subr.bf16.mxu0 0
        %2071 = vmatpush1.bf16.msra.mxu0 %v1640
        %2072 = vmatprep.subr.bf16.mxu0 0
        %2073 = vmatpush1.bf16.msra.mxu0 %v1639
        %2074 = vmatprep.subr.bf16.mxu0 0
        %2075 = vmatpush1.bf16.msra.mxu0 %v1638
        %2076 = vmatprep.subr.bf16.mxu0 0
        %2077 = vmatpush1.bf16.msra.mxu0 %v1637
        %2078 = vmatprep.subr.bf16.mxu0 0
        %2079 = vmatpush1.bf16.msra.mxu0 %v1636
        %2080 = vmatprep.subr.bf16.mxu0 0
        %2081 = vmatpush1.bf16.msra.mxu0 %v1635
        %2082 = vmatprep.subr.bf16.mxu0 0
        %2083 = vmatpush1.bf16.msra.mxu0 %v1634
        %2084 = vmatprep.subr.bf16.mxu0 0
        %2085 = vmatpush2.bf16.msra.mxu0 %v1649
        %2086 = vmatprep.subr.bf16.mxu0 0
        %2087 = vmatpush2.bf16.msra.mxu0 %v1648
        %2088 = vmatprep.subr.bf16.mxu0 0
        %2089 = vmatpush2.bf16.msra.mxu0 %v1647
        %2090 = vmatprep.subr.bf16.mxu0 0
        %2091 = vmatpush2.bf16.msra.mxu0 %v1646
        %2092 = vmatprep.subr.bf16.mxu0 0
        %2093 = vmatpush2.bf16.msra.mxu0 %v1645
        %2094 = vmatprep.subr.bf16.mxu0 0
        %2095 = vmatpush2.bf16.msra.mxu0 %v1644
        %2096 = vmatprep.subr.bf16.mxu0 0
        %2097 = vmatpush2.bf16.msra.mxu0 %v1643
        %2098 = vmatprep.subr.bf16.mxu0 0
        %2099 = vmatpush2.bf16.msra.mxu0 %v1642
        %2100 = vmatprep.mubr.bf16.mxu0 %v1002
        %2101 = vmatmul.mubr.bf16.gmra.mxu0 %v954
        %v2102 = vpop.f32.mrf.mxu0
        %v2103 = vadd.f32 %v1942, %v2102
        %v2104 = vpop.f32.mrf.mxu0
        %v2105 = vpop.f32.mrf.mxu0
        %v2106 = vadd.f32 %v1945, %v2105
        %v2107 = vpop.f32.mrf.mxu0
        %2108 = vmatprep.mubr.bf16.mxu0 %v1003
        %2109 = vmatmul.mubr.bf16.gmra.mxu0 %v955
        %v2110 = vpop.f32.mrf.mxu0
        %v2111 = vadd.f32 %v1950, %v2110
        %v2112 = vpop.f32.mrf.mxu0
        %v2113 = vpop.f32.mrf.mxu0
        %v2114 = vadd.f32 %v1953, %v2113
        %v2115 = vpop.f32.mrf.mxu0
        %2116 = vmatprep.mubr.bf16.mxu0 %v1004
        %2117 = vmatmul.mubr.bf16.gmra.mxu0 %v956
        %v2118 = vpop.f32.mrf.mxu0
        %v2119 = vadd.f32 %v1958, %v2118
        %v2120 = vpop.f32.mrf.mxu0
        %v2121 = vpop.f32.mrf.mxu0
        %v2122 = vadd.f32 %v1961, %v2121
        %v2123 = vpop.f32.mrf.mxu0
        %2124 = vmatprep.mubr.bf16.mxu0 %v1005
        %2125 = vmatmul.mubr.bf16.gmra.mxu0 %v957
        %v2126 = vpop.f32.mrf.mxu0
        %v2127 = vadd.f32 %v1966, %v2126
        %v2128 = vpop.f32.mrf.mxu0
        %v2129 = vpop.f32.mrf.mxu0
        %v2130 = vadd.f32 %v1969, %v2129
        %v2131 = vpop.f32.mrf.mxu0
        %2132 = vmatprep.mubr.bf16.mxu0 %v1006
        %2133 = vmatmul.mubr.bf16.gmra.mxu0 %v958
        %v2134 = vpop.f32.mrf.mxu0
        %v2135 = vadd.f32 %v1974, %v2134
        %v2136 = vpop.f32.mrf.mxu0
        %v2137 = vpop.f32.mrf.mxu0
        %v2138 = vadd.f32 %v1977, %v2137
        %v2139 = vpop.f32.mrf.mxu0
        %2140 = vmatprep.mubr.bf16.mxu0 %v1007
        %2141 = vmatmul.mubr.bf16.gmra.mxu0 %v959
        %v2142 = vpop.f32.mrf.mxu0
        %v2143 = vadd.f32 %v1982, %v2142
        %v2144 = vpop.f32.mrf.mxu0
        %v2145 = vpop.f32.mrf.mxu0
        %v2146 = vadd.f32 %v1985, %v2145
        %v2147 = vpop.f32.mrf.mxu0
        %2148 = vmatprep.mubr.bf16.mxu0 %v1008
        %2149 = vmatmul.mubr.bf16.gmra.mxu0 %v960
        %v2150 = vpop.f32.mrf.mxu0
        %v2151 = vadd.f32 %v1990, %v2150
        %v2152 = vpop.f32.mrf.mxu0
        %v2153 = vpop.f32.mrf.mxu0
        %v2154 = vadd.f32 %v1993, %v2153
        %v2155 = vpop.f32.mrf.mxu0
        %2156 = vmatprep.mubr.bf16.mxu0 %v1009
        %2157 = vmatmul.mubr.bf16.gmra.mxu0 %v961
        %v2158 = vpop.f32.mrf.mxu0
        %v2159 = vadd.f32 %v1998, %v2158
        %v2160 = vpop.f32.mrf.mxu0
        %v2161 = vpop.f32.mrf.mxu0
        %v2162 = vadd.f32 %v2001, %v2161
        %v2163 = vpop.f32.mrf.mxu0
        %2164 = vmatprep.mubr.bf16.mxu0 %v1010
        %2165 = vmatmul.mubr.bf16.gmra.mxu0 %v962
        %v2166 = vpop.f32.mrf.mxu0
        %v2167 = vadd.f32 %v2006, %v2166
        %v2168 = vpop.f32.mrf.mxu0
        %v2169 = vpop.f32.mrf.mxu0
        %v2170 = vadd.f32 %v2009, %v2169
        %v2171 = vpop.f32.mrf.mxu0
        %2172 = vmatprep.mubr.bf16.mxu0 %v1011
        %2173 = vmatmul.mubr.bf16.gmra.mxu0 %v963
        %v2174 = vpop.f32.mrf.mxu0
        %v2175 = vadd.f32 %v2014, %v2174
        %v2176 = vpop.f32.mrf.mxu0
        %v2177 = vpop.f32.mrf.mxu0
        %v2178 = vadd.f32 %v2017, %v2177
        %v2179 = vpop.f32.mrf.mxu0
        %2180 = vmatprep.mubr.bf16.mxu0 %v1012
        %2181 = vmatmul.mubr.bf16.gmra.mxu0 %v964
        %v2182 = vpop.f32.mrf.mxu0
        %v2183 = vadd.f32 %v2022, %v2182
        %v2184 = vpop.f32.mrf.mxu0
        %v2185 = vpop.f32.mrf.mxu0
        %v2186 = vadd.f32 %v2025, %v2185
        %v2187 = vpop.f32.mrf.mxu0
        %2188 = vmatprep.mubr.bf16.mxu0 %v1013
        %2189 = vmatmul.mubr.bf16.gmra.mxu0 %v965
        %v2190 = vpop.f32.mrf.mxu0
        %v2191 = vadd.f32 %v2030, %v2190
        %v2192 = vpop.f32.mrf.mxu0
        %v2193 = vpop.f32.mrf.mxu0
        %v2194 = vadd.f32 %v2033, %v2193
        %v2195 = vpop.f32.mrf.mxu0
        %2196 = vmatprep.mubr.bf16.mxu0 %v1014
        %2197 = vmatmul.mubr.bf16.gmra.mxu0 %v966
        %v2198 = vpop.f32.mrf.mxu0
        %v2199 = vadd.f32 %v2038, %v2198
        %v2200 = vpop.f32.mrf.mxu0
        %v2201 = vpop.f32.mrf.mxu0
        %v2202 = vadd.f32 %v2041, %v2201
        %v2203 = vpop.f32.mrf.mxu0
        %2204 = vmatprep.mubr.bf16.mxu0 %v1015
        %2205 = vmatmul.mubr.bf16.gmra.mxu0 %v967
        %v2206 = vpop.f32.mrf.mxu0
        %v2207 = vadd.f32 %v2046, %v2206
        %v2208 = vpop.f32.mrf.mxu0
        %v2209 = vpop.f32.mrf.mxu0
        %v2210 = vadd.f32 %v2049, %v2209
        %v2211 = vpop.f32.mrf.mxu0
        %2212 = vmatprep.mubr.bf16.mxu0 %v1016
        %2213 = vmatmul.mubr.bf16.gmra.mxu0 %v968
        %v2214 = vpop.f32.mrf.mxu0
        %v2215 = vadd.f32 %v2054, %v2214
        %v2216 = vpop.f32.mrf.mxu0
        %v2217 = vpop.f32.mrf.mxu0
        %v2218 = vadd.f32 %v2057, %v2217
        %v2219 = vpop.f32.mrf.mxu0
        %2220 = vmatprep.mubr.bf16.mxu0 %v1017
        %2221 = vmatmul.mubr.bf16.gmra.mxu0 %v969
        %v2222 = vpop.f32.mrf.mxu0
        %v2223 = vadd.f32 %v2062, %v2222
        %v2224 = vpop.f32.mrf.mxu0
        %v2225 = vpop.f32.mrf.mxu0
        %v2226 = vadd.f32 %v2065, %v2225
        %v2227 = vpop.f32.mrf.mxu0
        %2228 = vdwg.mxu0
        %2229 = vmatprep.subr.bf16.mxu0 0
        %2230 = vmatpush1.bf16.msra.mxu0 %v1657
        %2231 = vmatprep.subr.bf16.mxu0 0
        %2232 = vmatpush1.bf16.msra.mxu0 %v1656
        %2233 = vmatprep.subr.bf16.mxu0 0
        %2234 = vmatpush1.bf16.msra.mxu0 %v1655
        %2235 = vmatprep.subr.bf16.mxu0 0
        %2236 = vmatpush1.bf16.msra.mxu0 %v1654
        %2237 = vmatprep.subr.bf16.mxu0 0
        %2238 = vmatpush1.bf16.msra.mxu0 %v1653
        %2239 = vmatprep.subr.bf16.mxu0 0
        %2240 = vmatpush1.bf16.msra.mxu0 %v1652
        %2241 = vmatprep.subr.bf16.mxu0 0
        %2242 = vmatpush1.bf16.msra.mxu0 %v1651
        %2243 = vmatprep.subr.bf16.mxu0 0
        %2244 = vmatpush1.bf16.msra.mxu0 %v1650
        %2245 = vmatprep.subr.bf16.mxu0 0
        %2246 = vmatpush2.bf16.msra.mxu0 %v1665
        %2247 = vmatprep.subr.bf16.mxu0 0
        %2248 = vmatpush2.bf16.msra.mxu0 %v1664
        %2249 = vmatprep.subr.bf16.mxu0 0
        %2250 = vmatpush2.bf16.msra.mxu0 %v1663
        %2251 = vmatprep.subr.bf16.mxu0 0
        %2252 = vmatpush2.bf16.msra.mxu0 %v1662
        %2253 = vmatprep.subr.bf16.mxu0 0
        %2254 = vmatpush2.bf16.msra.mxu0 %v1661
        %2255 = vmatprep.subr.bf16.mxu0 0
        %2256 = vmatpush2.bf16.msra.mxu0 %v1660
        %2257 = vmatprep.subr.bf16.mxu0 0
        %2258 = vmatpush2.bf16.msra.mxu0 %v1659
        %2259 = vmatprep.subr.bf16.mxu0 0
        %2260 = vmatpush2.bf16.msra.mxu0 %v1658
        %2261 = vmatprep.mubr.bf16.mxu0 %v1099
        %2262 = vmatmul.mubr.bf16.gmra.mxu0 %v1051
        %v2263 = vpop.f32.mrf.mxu0
        %v2264 = vadd.f32 %v2103, %v2263
        %v2265 = vpop.f32.mrf.mxu0
        %v2266 = vpop.f32.mrf.mxu0
        %v2267 = vadd.f32 %v2106, %v2266
        %v2268 = vpop.f32.mrf.mxu0
        %2269 = vmatprep.mubr.bf16.mxu0 %v1100
        %2270 = vmatmul.mubr.bf16.gmra.mxu0 %v1052
        %v2271 = vpop.f32.mrf.mxu0
        %v2272 = vadd.f32 %v2111, %v2271
        %v2273 = vpop.f32.mrf.mxu0
        %v2274 = vpop.f32.mrf.mxu0
        %v2275 = vadd.f32 %v2114, %v2274
        %v2276 = vpop.f32.mrf.mxu0
        %2277 = vmatprep.mubr.bf16.mxu0 %v1101
        %2278 = vmatmul.mubr.bf16.gmra.mxu0 %v1053
        %v2279 = vpop.f32.mrf.mxu0
        %v2280 = vadd.f32 %v2119, %v2279
        %v2281 = vpop.f32.mrf.mxu0
        %v2282 = vpop.f32.mrf.mxu0
        %v2283 = vadd.f32 %v2122, %v2282
        %v2284 = vpop.f32.mrf.mxu0
        %2285 = vmatprep.mubr.bf16.mxu0 %v1102
        %2286 = vmatmul.mubr.bf16.gmra.mxu0 %v1054
        %v2287 = vpop.f32.mrf.mxu0
        %v2288 = vadd.f32 %v2127, %v2287
        %v2289 = vpop.f32.mrf.mxu0
        %v2290 = vpop.f32.mrf.mxu0
        %v2291 = vadd.f32 %v2130, %v2290
        %v2292 = vpop.f32.mrf.mxu0
        %2293 = vmatprep.mubr.bf16.mxu0 %v1103
        %2294 = vmatmul.mubr.bf16.gmra.mxu0 %v1055
        %v2295 = vpop.f32.mrf.mxu0
        %v2296 = vadd.f32 %v2135, %v2295
        %v2297 = vpop.f32.mrf.mxu0
        %v2298 = vpop.f32.mrf.mxu0
        %v2299 = vadd.f32 %v2138, %v2298
        %v2300 = vpop.f32.mrf.mxu0
        %2301 = vmatprep.mubr.bf16.mxu0 %v1104
        %2302 = vmatmul.mubr.bf16.gmra.mxu0 %v1056
        %v2303 = vpop.f32.mrf.mxu0
        %v2304 = vadd.f32 %v2143, %v2303
        %v2305 = vpop.f32.mrf.mxu0
        %v2306 = vpop.f32.mrf.mxu0
        %v2307 = vadd.f32 %v2146, %v2306
        %v2308 = vpop.f32.mrf.mxu0
        %2309 = vmatprep.mubr.bf16.mxu0 %v1105
        %2310 = vmatmul.mubr.bf16.gmra.mxu0 %v1057
        %v2311 = vpop.f32.mrf.mxu0
        %v2312 = vadd.f32 %v2151, %v2311
        %v2313 = vpop.f32.mrf.mxu0
        %v2314 = vpop.f32.mrf.mxu0
        %v2315 = vadd.f32 %v2154, %v2314
        %v2316 = vpop.f32.mrf.mxu0
        %2317 = vmatprep.mubr.bf16.mxu0 %v1106
        %2318 = vmatmul.mubr.bf16.gmra.mxu0 %v1058
        %v2319 = vpop.f32.mrf.mxu0
        %v2320 = vadd.f32 %v2159, %v2319
        %v2321 = vpop.f32.mrf.mxu0
        %v2322 = vpop.f32.mrf.mxu0
        %v2323 = vadd.f32 %v2162, %v2322
        %v2324 = vpop.f32.mrf.mxu0
        %2325 = vmatprep.mubr.bf16.mxu0 %v1107
        %2326 = vmatmul.mubr.bf16.gmra.mxu0 %v1059
        %v2327 = vpop.f32.mrf.mxu0
        %v2328 = vadd.f32 %v2167, %v2327
        %v2329 = vpop.f32.mrf.mxu0
        %v2330 = vpop.f32.mrf.mxu0
        %v2331 = vadd.f32 %v2170, %v2330
        %v2332 = vpop.f32.mrf.mxu0
        %2333 = vmatprep.mubr.bf16.mxu0 %v1108
        %2334 = vmatmul.mubr.bf16.gmra.mxu0 %v1060
        %v2335 = vpop.f32.mrf.mxu0
        %v2336 = vadd.f32 %v2175, %v2335
        %v2337 = vpop.f32.mrf.mxu0
        %v2338 = vpop.f32.mrf.mxu0
        %v2339 = vadd.f32 %v2178, %v2338
        %v2340 = vpop.f32.mrf.mxu0
        %2341 = vmatprep.mubr.bf16.mxu0 %v1109
        %2342 = vmatmul.mubr.bf16.gmra.mxu0 %v1061
        %v2343 = vpop.f32.mrf.mxu0
        %v2344 = vadd.f32 %v2183, %v2343
        %v2345 = vpop.f32.mrf.mxu0
        %v2346 = vpop.f32.mrf.mxu0
        %v2347 = vadd.f32 %v2186, %v2346
        %v2348 = vpop.f32.mrf.mxu0
        %2349 = vmatprep.mubr.bf16.mxu0 %v1110
        %2350 = vmatmul.mubr.bf16.gmra.mxu0 %v1062
        %v2351 = vpop.f32.mrf.mxu0
        %v2352 = vadd.f32 %v2191, %v2351
        %v2353 = vpop.f32.mrf.mxu0
        %v2354 = vpop.f32.mrf.mxu0
        %v2355 = vadd.f32 %v2194, %v2354
        %v2356 = vpop.f32.mrf.mxu0
        %2357 = vmatprep.mubr.bf16.mxu0 %v1111
        %2358 = vmatmul.mubr.bf16.gmra.mxu0 %v1063
        %v2359 = vpop.f32.mrf.mxu0
        %v2360 = vadd.f32 %v2199, %v2359
        %v2361 = vpop.f32.mrf.mxu0
        %v2362 = vpop.f32.mrf.mxu0
        %v2363 = vadd.f32 %v2202, %v2362
        %v2364 = vpop.f32.mrf.mxu0
        %2365 = vmatprep.mubr.bf16.mxu0 %v1112
        %2366 = vmatmul.mubr.bf16.gmra.mxu0 %v1064
        %v2367 = vpop.f32.mrf.mxu0
        %v2368 = vadd.f32 %v2207, %v2367
        %v2369 = vpop.f32.mrf.mxu0
        %v2370 = vpop.f32.mrf.mxu0
        %v2371 = vadd.f32 %v2210, %v2370
        %v2372 = vpop.f32.mrf.mxu0
        %2373 = vmatprep.mubr.bf16.mxu0 %v1113
        %2374 = vmatmul.mubr.bf16.gmra.mxu0 %v1065
        %v2375 = vpop.f32.mrf.mxu0
        %v2376 = vadd.f32 %v2215, %v2375
        %v2377 = vpop.f32.mrf.mxu0
        %v2378 = vpop.f32.mrf.mxu0
        %v2379 = vadd.f32 %v2218, %v2378
        %v2380 = vpop.f32.mrf.mxu0
        %2381 = vmatprep.mubr.bf16.mxu0 %v1114
        %2382 = vmatmul.mubr.bf16.gmra.mxu0 %v1066
        %v2383 = vpop.f32.mrf.mxu0
        %v2384 = vadd.f32 %v2223, %v2383
        %v2385 = vpop.f32.mrf.mxu0
        %v2386 = vpop.f32.mrf.mxu0
        %v2387 = vadd.f32 %v2226, %v2386
        %v2388 = vpop.f32.mrf.mxu0
        %2389 = vdwg.mxu0
        %2390 = vmatprep.subr.bf16.mxu0 0
        %2391 = vmatpush1.bf16.msra.mxu0 %v1673
        %2392 = vmatprep.subr.bf16.mxu0 0
        %2393 = vmatpush1.bf16.msra.mxu0 %v1672
        %2394 = vmatprep.subr.bf16.mxu0 0
        %2395 = vmatpush1.bf16.msra.mxu0 %v1671
        %2396 = vmatprep.subr.bf16.mxu0 0
        %2397 = vmatpush1.bf16.msra.mxu0 %v1670
        %2398 = vmatprep.subr.bf16.mxu0 0
        %2399 = vmatpush1.bf16.msra.mxu0 %v1669
        %2400 = vmatprep.subr.bf16.mxu0 0
        %2401 = vmatpush1.bf16.msra.mxu0 %v1668
        %2402 = vmatprep.subr.bf16.mxu0 0
        %2403 = vmatpush1.bf16.msra.mxu0 %v1667
        %2404 = vmatprep.subr.bf16.mxu0 0
        %2405 = vmatpush1.bf16.msra.mxu0 %v1666
        %2406 = vmatprep.subr.bf16.mxu0 0
        %2407 = vmatpush2.bf16.msra.mxu0 0
        %2408 = vmatprep.subr.bf16.mxu0 0
        %2409 = vmatpush2.bf16.msra.mxu0 0
        %2410 = vmatprep.subr.bf16.mxu0 0
        %2411 = vmatpush2.bf16.msra.mxu0 0
        %2412 = vmatprep.subr.bf16.mxu0 0
        %2413 = vmatpush2.bf16.msra.mxu0 0
        %2414 = vmatprep.subr.bf16.mxu0 0
        %2415 = vmatpush2.bf16.msra.mxu0 0
        %2416 = vmatprep.subr.bf16.mxu0 0
        %2417 = vmatpush2.bf16.msra.mxu0 0
        %2418 = vmatprep.subr.bf16.mxu0 0
        %2419 = vmatpush2.bf16.msra.mxu0 0
        %2420 = vmatprep.subr.bf16.mxu0 0
        %2421 = vmatpush2.bf16.msra.mxu0 0
        %2422 = vmatprep.mubr.bf16.mxu0 0
        %2423 = vmatmul.mubr.bf16.gmra.mxu0 %v1147
        %v2424 = vpop.f32.mrf.mxu0
        %v2425 = vadd.f32 %v2264, %v2424
        %v2426 = vpop.f32.mrf.mxu0
        %v2427 = vpop.f32.mrf.mxu0
        %v2428 = vadd.f32 %v2267, %v2427
        %v2429 = vpop.f32.mrf.mxu0
        %2430 = vmatprep.mubr.bf16.mxu0 0
        %2431 = vmatmul.mubr.bf16.gmra.mxu0 %v1148
        %v2432 = vpop.f32.mrf.mxu0
        %v2433 = vadd.f32 %v2272, %v2432
        %v2434 = vpop.f32.mrf.mxu0
        %v2435 = vpop.f32.mrf.mxu0
        %v2436 = vadd.f32 %v2275, %v2435
        %v2437 = vpop.f32.mrf.mxu0
        %2438 = vmatprep.mubr.bf16.mxu0 0
        %2439 = vmatmul.mubr.bf16.gmra.mxu0 %v1149
        %v2440 = vpop.f32.mrf.mxu0
        %v2441 = vadd.f32 %v2280, %v2440
        %v2442 = vpop.f32.mrf.mxu0
        %v2443 = vpop.f32.mrf.mxu0
        %v2444 = vadd.f32 %v2283, %v2443
        %v2445 = vpop.f32.mrf.mxu0
        %2446 = vmatprep.mubr.bf16.mxu0 0
        %2447 = vmatmul.mubr.bf16.gmra.mxu0 %v1150
        %v2448 = vpop.f32.mrf.mxu0
        %v2449 = vadd.f32 %v2288, %v2448
        %v2450 = vpop.f32.mrf.mxu0
        %v2451 = vpop.f32.mrf.mxu0
        %v2452 = vadd.f32 %v2291, %v2451
        %v2453 = vpop.f32.mrf.mxu0
        %2454 = vmatprep.mubr.bf16.mxu0 0
        %2455 = vmatmul.mubr.bf16.gmra.mxu0 %v1151
        %v2456 = vpop.f32.mrf.mxu0
        %v2457 = vadd.f32 %v2296, %v2456
        %v2458 = vpop.f32.mrf.mxu0
        %v2459 = vpop.f32.mrf.mxu0
        %v2460 = vadd.f32 %v2299, %v2459
        %v2461 = vpop.f32.mrf.mxu0
        %2462 = vmatprep.mubr.bf16.mxu0 0
        %2463 = vmatmul.mubr.bf16.gmra.mxu0 %v1152
        %v2464 = vpop.f32.mrf.mxu0
        %v2465 = vadd.f32 %v2304, %v2464
        %v2466 = vpop.f32.mrf.mxu0
        %v2467 = vpop.f32.mrf.mxu0
        %v2468 = vadd.f32 %v2307, %v2467
        %v2469 = vpop.f32.mrf.mxu0
        %2470 = vmatprep.mubr.bf16.mxu0 0
        %2471 = vmatmul.mubr.bf16.gmra.mxu0 %v1153
        %v2472 = vpop.f32.mrf.mxu0
        %v2473 = vadd.f32 %v2312, %v2472
        %v2474 = vpop.f32.mrf.mxu0
        %v2475 = vpop.f32.mrf.mxu0
        %v2476 = vadd.f32 %v2315, %v2475
        %v2477 = vpop.f32.mrf.mxu0
        %2478 = vmatprep.mubr.bf16.mxu0 0
        %2479 = vmatmul.mubr.bf16.gmra.mxu0 %v1154
        %v2480 = vpop.f32.mrf.mxu0
        %v2481 = vadd.f32 %v2320, %v2480
        %v2482 = vpop.f32.mrf.mxu0
        %v2483 = vpop.f32.mrf.mxu0
        %v2484 = vadd.f32 %v2323, %v2483
        %v2485 = vpop.f32.mrf.mxu0
        %2486 = vmatprep.mubr.bf16.mxu0 0
        %2487 = vmatmul.mubr.bf16.gmra.mxu0 %v1155
        %v2488 = vpop.f32.mrf.mxu0
        %v2489 = vadd.f32 %v2328, %v2488
        %v2490 = vpop.f32.mrf.mxu0
        %v2491 = vpop.f32.mrf.mxu0
        %v2492 = vadd.f32 %v2331, %v2491
        %v2493 = vpop.f32.mrf.mxu0
        %2494 = vmatprep.mubr.bf16.mxu0 0
        %2495 = vmatmul.mubr.bf16.gmra.mxu0 %v1156
        %v2496 = vpop.f32.mrf.mxu0
        %v2497 = vadd.f32 %v2336, %v2496
        %v2498 = vpop.f32.mrf.mxu0
        %v2499 = vpop.f32.mrf.mxu0
        %v2500 = vadd.f32 %v2339, %v2499
        %v2501 = vpop.f32.mrf.mxu0
        %2502 = vmatprep.mubr.bf16.mxu0 0
        %2503 = vmatmul.mubr.bf16.gmra.mxu0 %v1157
        %v2504 = vpop.f32.mrf.mxu0
        %v2505 = vadd.f32 %v2344, %v2504
        %v2506 = vpop.f32.mrf.mxu0
        %v2507 = vpop.f32.mrf.mxu0
        %v2508 = vadd.f32 %v2347, %v2507
        %v2509 = vpop.f32.mrf.mxu0
        %2510 = vmatprep.mubr.bf16.mxu0 0
        %2511 = vmatmul.mubr.bf16.gmra.mxu0 %v1158
        %v2512 = vpop.f32.mrf.mxu0
        %v2513 = vadd.f32 %v2352, %v2512
        %v2514 = vpop.f32.mrf.mxu0
        %v2515 = vpop.f32.mrf.mxu0
        %v2516 = vadd.f32 %v2355, %v2515
        %v2517 = vpop.f32.mrf.mxu0
        %2518 = vmatprep.mubr.bf16.mxu0 0
        %2519 = vmatmul.mubr.bf16.gmra.mxu0 %v1159
        %v2520 = vpop.f32.mrf.mxu0
        %v2521 = vadd.f32 %v2360, %v2520
        %v2522 = vpop.f32.mrf.mxu0
        %v2523 = vpop.f32.mrf.mxu0
        %v2524 = vadd.f32 %v2363, %v2523
        %v2525 = vpop.f32.mrf.mxu0
        %2526 = vmatprep.mubr.bf16.mxu0 0
        %2527 = vmatmul.mubr.bf16.gmra.mxu0 %v1160
        %v2528 = vpop.f32.mrf.mxu0
        %v2529 = vadd.f32 %v2368, %v2528
        %v2530 = vpop.f32.mrf.mxu0
        %v2531 = vpop.f32.mrf.mxu0
        %v2532 = vadd.f32 %v2371, %v2531
        %v2533 = vpop.f32.mrf.mxu0
        %2534 = vmatprep.mubr.bf16.mxu0 0
        %2535 = vmatmul.mubr.bf16.gmra.mxu0 %v1161
        %v2536 = vpop.f32.mrf.mxu0
        %v2537 = vadd.f32 %v2376, %v2536
        %v2538 = vpop.f32.mrf.mxu0
        %v2539 = vpop.f32.mrf.mxu0
        %v2540 = vadd.f32 %v2379, %v2539
        %v2541 = vpop.f32.mrf.mxu0
        %2542 = vmatprep.mubr.bf16.mxu0 0
        %2543 = vmatmul.mubr.bf16.gmra.mxu0 %v1162
        %v2544 = vpop.f32.mrf.mxu0
        %v2545 = vadd.f32 %v2384, %v2544
        %v2546 = vpop.f32.mrf.mxu0
        %v2547 = vpop.f32.mrf.mxu0
        %v2548 = vadd.f32 %v2387, %v2547
        %v2549 = vpop.f32.mrf.mxu0
        %2550 = vdwg.mxu0
        %v2551 = vmax.f32 %v2425, 0.0
        %v2552 = vmax.f32 %v2428, 0.0
        %v2553 = vmax.f32 %v2433, 0.0
        %v2554 = vmax.f32 %v2436, 0.0
        %v2555 = vmax.f32 %v2441, 0.0
        %v2556 = vmax.f32 %v2444, 0.0
        %v2557 = vmax.f32 %v2449, 0.0
        %v2558 = vmax.f32 %v2452, 0.0
        %v2559 = vmax.f32 %v2457, 0.0
        %v2560 = vmax.f32 %v2460, 0.0
        %v2561 = vmax.f32 %v2465, 0.0
        %v2562 = vmax.f32 %v2468, 0.0
        %v2563 = vmax.f32 %v2473, 0.0
        %v2564 = vmax.f32 %v2476, 0.0
        %v2565 = vmax.f32 %v2481, 0.0
        %v2566 = vmax.f32 %v2484, 0.0
        %v2567 = vmax.f32 %v2489, 0.0
        %v2568 = vmax.f32 %v2492, 0.0
        %v2569 = vmax.f32 %v2497, 0.0
        %v2570 = vmax.f32 %v2500, 0.0
        %v2571 = vmax.f32 %v2505, 0.0
        %v2572 = vmax.f32 %v2508, 0.0
        %v2573 = vmax.f32 %v2513, 0.0
        %v2574 = vmax.f32 %v2516, 0.0
        %v2575 = vmax.f32 %v2521, 0.0
        %v2576 = vmax.f32 %v2524, 0.0
        %v2577 = vmax.f32 %v2529, 0.0
        %v2578 = vmax.f32 %v2532, 0.0
        %v2579 = vmax.f32 %v2537, 0.0
        %v2580 = vmax.f32 %v2540, 0.0
        %v2581 = vmax.f32 %v2545, 0.0
        %v2582 = vmax.f32 %v2548, 0.0
        %v2583 = vpack.c.bf16 %v2552, %v2551
        %v2584 = vpack.c.bf16 %v2554, %v2553
        %v2585 = vpack.c.bf16 %v2556, %v2555
        %v2586 = vpack.c.bf16 %v2558, %v2557
        %v2587 = vpack.c.bf16 %v2560, %v2559
        %v2588 = vpack.c.bf16 %v2562, %v2561
        %v2589 = vpack.c.bf16 %v2564, %v2563
        %v2590 = vpack.c.bf16 %v2566, %v2565
        %v2591 = vpack.c.bf16 %v2568, %v2567
        %v2592 = vpack.c.bf16 %v2570, %v2569
        %v2593 = vpack.c.bf16 %v2572, %v2571
        %v2594 = vpack.c.bf16 %v2574, %v2573
        %v2595 = vpack.c.bf16 %v2576, %v2575
        %v2596 = vpack.c.bf16 %v2578, %v2577
        %v2597 = vpack.c.bf16 %v2580, %v2579
        %v2598 = vpack.c.bf16 %v2582, %v2581
        %v2599 = vld [vmem:[#allocation9] sm:$0xf]
        %v2600 = vld [vmem:[#allocation9 + $0x4] sm:$0xf]
        %v2601 = vld [vmem:[#allocation9 + $0x8] sm:$0xf]
        %v2602 = vld [vmem:[#allocation9 + $0xc] sm:$0xf]
        %v2603 = vld [vmem:[#allocation9 + $0x10] sm:$0xf]
        %v2604 = vld [vmem:[#allocation9 + $0x14] sm:$0xf]
        %v2605 = vld [vmem:[#allocation9 + $0x18] sm:$0xf]
        %v2606 = vld [vmem:[#allocation9 + $0x1c] sm:$0xf]
        %v2607 = vld [vmem:[#allocation9 + $0x20] sm:$0xf]
        %v2608 = vld [vmem:[#allocation9 + $0x24] sm:$0xf]
        %v2609 = vld [vmem:[#allocation9 + $0x28] sm:$0xf]
        %v2610 = vld [vmem:[#allocation9 + $0x2c] sm:$0xf]
        %v2611 = vld [vmem:[#allocation9 + $0x30] sm:$0xf]
        %v2612 = vld [vmem:[#allocation9 + $0x34] sm:$0xf]
        %v2613 = vld [vmem:[#allocation9 + $0x38] sm:$0xf]
        %v2614 = vld [vmem:[#allocation9 + $0x3c] sm:$0xf]
        %v2615 = vld [vmem:[%s6] sm:$0x1]
        %v2617 = vlaneseq
        %v2618 = vshrl.u32 %v2617, 7
        %v2619 = vsub.s32 0, %v2618
        %v2620 = vrot.slane %v2615, %v2619
        %v2638 = vunpack.c.l.b16 %v2599
        %v2639 = vunpack.c.l.b16 %v2600
        %v2640 = vunpack.c.l.b16 %v2601
        %v2641 = vunpack.c.l.b16 %v2602
        %v2642 = vunpack.c.l.b16 %v2603
        %v2643 = vunpack.c.l.b16 %v2604
        %v2644 = vunpack.c.l.b16 %v2605
        %v2645 = vunpack.c.l.b16 %v2606
        %v2646 = vunpack.c.l.b16 %v2607
        %v2647 = vunpack.c.l.b16 %v2608
        %v2648 = vunpack.c.l.b16 %v2609
        %v2649 = vunpack.c.l.b16 %v2610
        %v2650 = vunpack.c.l.b16 %v2611
        %v2651 = vunpack.c.l.b16 %v2612
        %v2652 = vunpack.c.l.b16 %v2613
        %v2653 = vunpack.c.l.b16 %v2614
        %v2654 = vpack.c.b16 %v2639, %v2638
        %v2655 = vpack.c.b16 %v2641, %v2640
        %v2656 = vpack.c.b16 %v2643, %v2642
        %v2657 = vpack.c.b16 %v2645, %v2644
        %v2658 = vpack.c.b16 %v2647, %v2646
        %v2659 = vpack.c.b16 %v2649, %v2648
        %v2660 = vpack.c.b16 %v2651, %v2650
        %v2661 = vpack.c.b16 %v2653, %v2652
        %2670 = vmatprep.subr.bf16.mxu0 0
        %2671 = vmatpush1.bf16.msra.mxu0 %v2661
        %2672 = vmatprep.subr.bf16.mxu0 0
        %2673 = vmatpush1.bf16.msra.mxu0 %v2660
        %2674 = vmatprep.subr.bf16.mxu0 0
        %2675 = vmatpush1.bf16.msra.mxu0 %v2659
        %2676 = vmatprep.subr.bf16.mxu0 0
        %2677 = vmatpush1.bf16.msra.mxu0 %v2658
        %2678 = vmatprep.subr.bf16.mxu0 0
        %2679 = vmatpush1.bf16.msra.mxu0 %v2657
        %2680 = vmatprep.subr.bf16.mxu0 0
        %2681 = vmatpush1.bf16.msra.mxu0 %v2656
        %2682 = vmatprep.subr.bf16.mxu0 0
        %2683 = vmatpush1.bf16.msra.mxu0 %v2655
        %2684 = vmatprep.subr.bf16.mxu0 0
        %2685 = vmatpush1.bf16.msra.mxu0 %v2654
        %2686 = vmatprep.subr.bf16.mxu0 0
        %2687 = vmatpush2.bf16.msra.mxu0 0
        %2688 = vmatprep.subr.bf16.mxu0 0
        %2689 = vmatpush2.bf16.msra.mxu0 0
        %2690 = vmatprep.subr.bf16.mxu0 0
        %2691 = vmatpush2.bf16.msra.mxu0 0
        %2692 = vmatprep.subr.bf16.mxu0 0
        %2693 = vmatpush2.bf16.msra.mxu0 0
        %2694 = vmatprep.subr.bf16.mxu0 0
        %2695 = vmatpush2.bf16.msra.mxu0 0
        %2696 = vmatprep.subr.bf16.mxu0 0
        %2697 = vmatpush2.bf16.msra.mxu0 0
        %2698 = vmatprep.subr.bf16.mxu0 0
        %2699 = vmatpush2.bf16.msra.mxu0 0
        %2700 = vmatprep.subr.bf16.mxu0 0
        %2701 = vmatpush2.bf16.msra.mxu0 0
        %2702 = vmatprep.mubr.bf16.mxu0 0
        %2703 = vmatmul.mubr.bf16.gmra.mxu0 %v2583
        %v2704 = vpop.f32.mrf.mxu0
        %v2705 = vadd.f32 %v2620, %v2704
        %v2706 = vpop.f32.mrf.mxu0
        %v2707 = vpop.f32.mrf.mxu0
        %v2708 = vadd.f32 %v2620, %v2707
        %v2709 = vpop.f32.mrf.mxu0
        %2710 = vmatprep.mubr.bf16.mxu0 0
        %2711 = vmatmul.mubr.bf16.gmra.mxu0 %v2584
        %v2712 = vpop.f32.mrf.mxu0
        %v2713 = vadd.f32 %v2620, %v2712
        %v2714 = vpop.f32.mrf.mxu0
        %v2715 = vpop.f32.mrf.mxu0
        %v2716 = vadd.f32 %v2620, %v2715
        %v2717 = vpop.f32.mrf.mxu0
        %2718 = vmatprep.mubr.bf16.mxu0 0
        %2719 = vmatmul.mubr.bf16.gmra.mxu0 %v2585
        %v2720 = vpop.f32.mrf.mxu0
        %v2721 = vadd.f32 %v2620, %v2720
        %v2722 = vpop.f32.mrf.mxu0
        %v2723 = vpop.f32.mrf.mxu0
        %v2724 = vadd.f32 %v2620, %v2723
        %v2725 = vpop.f32.mrf.mxu0
        %2726 = vmatprep.mubr.bf16.mxu0 0
        %2727 = vmatmul.mubr.bf16.gmra.mxu0 %v2586
        %v2728 = vpop.f32.mrf.mxu0
        %v2729 = vadd.f32 %v2620, %v2728
        %v2730 = vpop.f32.mrf.mxu0
        %v2731 = vpop.f32.mrf.mxu0
        %v2732 = vadd.f32 %v2620, %v2731
        %v2733 = vpop.f32.mrf.mxu0
        %2734 = vmatprep.mubr.bf16.mxu0 0
        %2735 = vmatmul.mubr.bf16.gmra.mxu0 %v2587
        %v2736 = vpop.f32.mrf.mxu0
        %v2737 = vadd.f32 %v2620, %v2736
        %v2738 = vpop.f32.mrf.mxu0
        %v2739 = vpop.f32.mrf.mxu0
        %v2740 = vadd.f32 %v2620, %v2739
        %v2741 = vpop.f32.mrf.mxu0
        %2742 = vmatprep.mubr.bf16.mxu0 0
        %2743 = vmatmul.mubr.bf16.gmra.mxu0 %v2588
        %v2744 = vpop.f32.mrf.mxu0
        %v2745 = vadd.f32 %v2620, %v2744
        %v2746 = vpop.f32.mrf.mxu0
        %v2747 = vpop.f32.mrf.mxu0
        %v2748 = vadd.f32 %v2620, %v2747
        %v2749 = vpop.f32.mrf.mxu0
        %2750 = vmatprep.mubr.bf16.mxu0 0
        %2751 = vmatmul.mubr.bf16.gmra.mxu0 %v2589
        %v2752 = vpop.f32.mrf.mxu0
        %v2753 = vadd.f32 %v2620, %v2752
        %v2754 = vpop.f32.mrf.mxu0
        %v2755 = vpop.f32.mrf.mxu0
        %v2756 = vadd.f32 %v2620, %v2755
        %v2757 = vpop.f32.mrf.mxu0
        %2758 = vmatprep.mubr.bf16.mxu0 0
        %2759 = vmatmul.mubr.bf16.gmra.mxu0 %v2590
        %v2760 = vpop.f32.mrf.mxu0
        %v2761 = vadd.f32 %v2620, %v2760
        %v2762 = vpop.f32.mrf.mxu0
        %v2763 = vpop.f32.mrf.mxu0
        %v2764 = vadd.f32 %v2620, %v2763
        %v2765 = vpop.f32.mrf.mxu0
        %2766 = vmatprep.mubr.bf16.mxu0 0
        %2767 = vmatmul.mubr.bf16.gmra.mxu0 %v2591
        %v2768 = vpop.f32.mrf.mxu0
        %v2769 = vadd.f32 %v2620, %v2768
        %v2770 = vpop.f32.mrf.mxu0
        %v2771 = vpop.f32.mrf.mxu0
        %v2772 = vadd.f32 %v2620, %v2771
        %v2773 = vpop.f32.mrf.mxu0
        %2774 = vmatprep.mubr.bf16.mxu0 0
        %2775 = vmatmul.mubr.bf16.gmra.mxu0 %v2592
        %v2776 = vpop.f32.mrf.mxu0
        %v2777 = vadd.f32 %v2620, %v2776
        %v2778 = vpop.f32.mrf.mxu0
        %v2779 = vpop.f32.mrf.mxu0
        %v2780 = vadd.f32 %v2620, %v2779
        %v2781 = vpop.f32.mrf.mxu0
        %2782 = vmatprep.mubr.bf16.mxu0 0
        %2783 = vmatmul.mubr.bf16.gmra.mxu0 %v2593
        %v2784 = vpop.f32.mrf.mxu0
        %v2785 = vadd.f32 %v2620, %v2784
        %v2786 = vpop.f32.mrf.mxu0
        %v2787 = vpop.f32.mrf.mxu0
        %v2788 = vadd.f32 %v2620, %v2787
        %v2789 = vpop.f32.mrf.mxu0
        %2790 = vmatprep.mubr.bf16.mxu0 0
        %2791 = vmatmul.mubr.bf16.gmra.mxu0 %v2594
        %v2792 = vpop.f32.mrf.mxu0
        %v2793 = vadd.f32 %v2620, %v2792
        %v2794 = vpop.f32.mrf.mxu0
        %v2795 = vpop.f32.mrf.mxu0
        %v2796 = vadd.f32 %v2620, %v2795
        %v2797 = vpop.f32.mrf.mxu0
        %2798 = vmatprep.mubr.bf16.mxu0 0
        %2799 = vmatmul.mubr.bf16.gmra.mxu0 %v2595
        %v2800 = vpop.f32.mrf.mxu0
        %v2801 = vadd.f32 %v2620, %v2800
        %v2802 = vpop.f32.mrf.mxu0
        %v2803 = vpop.f32.mrf.mxu0
        %v2804 = vadd.f32 %v2620, %v2803
        %v2805 = vpop.f32.mrf.mxu0
        %2806 = vmatprep.mubr.bf16.mxu0 0
        %2807 = vmatmul.mubr.bf16.gmra.mxu0 %v2596
        %v2808 = vpop.f32.mrf.mxu0
        %v2809 = vadd.f32 %v2620, %v2808
        %v2810 = vpop.f32.mrf.mxu0
        %v2811 = vpop.f32.mrf.mxu0
        %v2812 = vadd.f32 %v2620, %v2811
        %v2813 = vpop.f32.mrf.mxu0
        %2814 = vmatprep.mubr.bf16.mxu0 0
        %2815 = vmatmul.mubr.bf16.gmra.mxu0 %v2597
        %v2816 = vpop.f32.mrf.mxu0
        %v2817 = vadd.f32 %v2620, %v2816
        %v2818 = vpop.f32.mrf.mxu0
        %v2819 = vpop.f32.mrf.mxu0
        %v2820 = vadd.f32 %v2620, %v2819
        %v2821 = vpop.f32.mrf.mxu0
        %2822 = vmatprep.mubr.bf16.mxu0 0
        %2823 = vmatmul.mubr.bf16.gmra.mxu0 %v2598
        %v2824 = vpop.f32.mrf.mxu0
        %v2825 = vadd.f32 %v2620, %v2824
        %v2826 = vpop.f32.mrf.mxu0
        %v2827 = vpop.f32.mrf.mxu0
        %v2828 = vadd.f32 %v2620, %v2827
        %v2829 = vpop.f32.mrf.mxu0
        %2830 = vdwg.mxu0
        %v2831 = vadd.f32 %v2705, %v342
        %v2832 = vadd.f32 %v2708, %v343
        %v2833 = vadd.f32 %v2713, %v344
        %v2834 = vadd.f32 %v2716, %v345
        %v2835 = vadd.f32 %v2721, %v346
        %v2836 = vadd.f32 %v2724, %v347
        %v2837 = vadd.f32 %v2729, %v348
        %v2838 = vadd.f32 %v2732, %v349
        %v2839 = vadd.f32 %v2737, %v350
        %v2840 = vadd.f32 %v2740, %v351
        %v2841 = vadd.f32 %v2745, %v352
        %v2842 = vadd.f32 %v2748, %v353
        %v2843 = vadd.f32 %v2753, %v354
        %v2844 = vadd.f32 %v2756, %v355
        %v2845 = vadd.f32 %v2761, %v356
        %v2846 = vadd.f32 %v2764, %v357
        %v2847 = vadd.f32 %v2769, %v358
        %v2848 = vadd.f32 %v2772, %v359
        %v2849 = vadd.f32 %v2777, %v360
        %v2850 = vadd.f32 %v2780, %v361
        %v2851 = vadd.f32 %v2785, %v362
        %v2852 = vadd.f32 %v2788, %v363
        %v2853 = vadd.f32 %v2793, %v364
        %v2854 = vadd.f32 %v2796, %v365
        %v2855 = vadd.f32 %v2801, %v366
        %v2856 = vadd.f32 %v2804, %v367
        %v2857 = vadd.f32 %v2809, %v368
        %v2858 = vadd.f32 %v2812, %v369
        %v2859 = vadd.f32 %v2817, %v370
        %v2860 = vadd.f32 %v2820, %v371
        %v2861 = vadd.f32 %v2825, %v372
        %v2862 = vadd.f32 %v2828, %v373
        %v2863 = vmax.f32 %v2831, 0.0
        %v2864 = vmax.f32 %v2832, 0.0
        %v2865 = vmax.f32 %v2833, 0.0
        %v2866 = vmax.f32 %v2834, 0.0
        %v2867 = vmax.f32 %v2835, 0.0
        %v2868 = vmax.f32 %v2836, 0.0
        %v2869 = vmax.f32 %v2837, 0.0
        %v2870 = vmax.f32 %v2838, 0.0
        %v2871 = vmax.f32 %v2839, 0.0
        %v2872 = vmax.f32 %v2840, 0.0
        %v2873 = vmax.f32 %v2841, 0.0
        %v2874 = vmax.f32 %v2842, 0.0
        %v2875 = vmax.f32 %v2843, 0.0
        %v2876 = vmax.f32 %v2844, 0.0
        %v2877 = vmax.f32 %v2845, 0.0
        %v2878 = vmax.f32 %v2846, 0.0
        %v2879 = vmax.f32 %v2847, 0.0
        %v2880 = vmax.f32 %v2848, 0.0
        %v2881 = vmax.f32 %v2849, 0.0
        %v2882 = vmax.f32 %v2850, 0.0
        %v2883 = vmax.f32 %v2851, 0.0
        %v2884 = vmax.f32 %v2852, 0.0
        %v2885 = vmax.f32 %v2853, 0.0
        %v2886 = vmax.f32 %v2854, 0.0
        %v2887 = vmax.f32 %v2855, 0.0
        %v2888 = vmax.f32 %v2856, 0.0
        %v2889 = vmax.f32 %v2857, 0.0
        %v2890 = vmax.f32 %v2858, 0.0
        %v2891 = vmax.f32 %v2859, 0.0
        %v2892 = vmax.f32 %v2860, 0.0
        %v2893 = vmax.f32 %v2861, 0.0
        %v2894 = vmax.f32 %v2862, 0.0
        %2895 = vst [vmem:[%s340] sm:$0xff] %v2863
        %2896 = vst [vmem:[%s340 + $0x8] sm:$0xff] %v2864
        %2897 = vst [vmem:[%s340 + $0x10] sm:$0xff] %v2865
        %2898 = vst [vmem:[%s340 + $0x18] sm:$0xff] %v2866
        %2899 = vst [vmem:[%s340 + $0x20] sm:$0xff] %v2867
        %2900 = vst [vmem:[%s340 + $0x28] sm:$0xff] %v2868
        %2901 = vst [vmem:[%s340 + $0x30] sm:$0xff] %v2869
        %2902 = vst [vmem:[%s340 + $0x38] sm:$0xff] %v2870
        %2903 = vst [vmem:[%s340 + $0x40] sm:$0xff] %v2871
        %2904 = vst [vmem:[%s340 + $0x48] sm:$0xff] %v2872
        %2905 = vst [vmem:[%s340 + $0x50] sm:$0xff] %v2873
        %2906 = vst [vmem:[%s340 + $0x58] sm:$0xff] %v2874
        %2907 = vst [vmem:[%s340 + $0x60] sm:$0xff] %v2875
        %2908 = vst [vmem:[%s340 + $0x68] sm:$0xff] %v2876
        %2909 = vst [vmem:[%s340 + $0x70] sm:$0xff] %v2877
        %2910 = vst [vmem:[%s340 + $0x78] sm:$0xff] %v2878
        %2911 = vst [vmem:[%s340 + $0x80] sm:$0xff] %v2879
        %2912 = vst [vmem:[%s340 + $0x88] sm:$0xff] %v2880
        %2913 = vst [vmem:[%s340 + $0x90] sm:$0xff] %v2881
        %2914 = vst [vmem:[%s340 + $0x98] sm:$0xff] %v2882
        %2915 = vst [vmem:[%s340 + $0xa0] sm:$0xff] %v2883
        %2916 = vst [vmem:[%s340 + $0xa8] sm:$0xff] %v2884
        %2917 = vst [vmem:[%s340 + $0xb0] sm:$0xff] %v2885
        %2918 = vst [vmem:[%s340 + $0xb8] sm:$0xff] %v2886
        %2919 = vst [vmem:[%s340 + $0xc0] sm:$0xff] %v2887
        %2920 = vst [vmem:[%s340 + $0xc8] sm:$0xff] %v2888
        %2921 = vst [vmem:[%s340 + $0xd0] sm:$0xff] %v2889
        %2922 = vst [vmem:[%s340 + $0xd8] sm:$0xff] %v2890
        %2923 = vst [vmem:[%s340 + $0xe0] sm:$0xff] %v2891
        %2924 = vst [vmem:[%s340 + $0xe8] sm:$0xff] %v2892
        %2925 = vst [vmem:[%s340 + $0xf0] sm:$0xff] %v2893
        %2926 = vst [vmem:[%s340 + $0xf8] sm:$0xff] %v2894
        %s2927 = sand.u32 %s186, 1
        %s2928 = scalar_lea.sflag [#allocation5], %s2927
        %s2929 = sand.u32 %s186, 1
        %s2930 = smul.addr %s2929, 256
        %s2931 = scalar_lea.vmem [#allocation11], %s2930
        // Predicated region
        $region65: #{tpu_custom_call.1} parent=47 // pred_check
          %p2932 = pneg %p196
        $region66: #{tpu_custom_call.1} parent=47 // pred_check_branch
          %2934 = sbr.rel (%p2932) target = $region68
        $region67: #{tpu_custom_call.1} parent=47 // pred_region
          %s2936 = ssub.s32 4096, 4096
          %2937 = vsyncadd %s2928, %s2936
          %s2938 = smul.addr %s26, 32
          %s2939 = smul.addr %s2938, 128
          %s2940 = scalar_lea.hbm %s7, %s2939
          %s2941 = sshll.u32 %s2931, 4
          %s2942 = int_to_ptr.vmem [resolvable:$true] %s2941
          %2947 = dma.vmem_to_hbm [thread:$0]  %s2942, 4096, %s2940, %s2928, 128, 128, 8
        $region68: #{tpu_custom_call.1} parent=47 // pred_fallthru
          _
      $region48: #{tpu_custom_call.1} parent=5 // pred_fallthru
        _
      %p2948 = scmp.le.s32.totalorder 2, %s21
      // Predicated region
      $region69: #{tpu_custom_call.1} parent=5 // pred_check
        %p2949 = pneg %p2948
      $region70: #{tpu_custom_call.1} parent=5 // pred_check_branch
        %2951 = sbr.rel (%p2949) target = $region72
      $region71: #{tpu_custom_call.1} parent=5 // pred_region
        %s2952 = ssub.s32 %s21, 2
        // Predicated region
        $region73: #{tpu_custom_call.1} parent=71 // pred_check
          %p2953 = pneg %p202
        $region74: #{tpu_custom_call.1} parent=71 // pred_check_branch
          %2955 = sbr.rel (%p2953) target = $region76
        $region75: #{tpu_custom_call.1} parent=71 // pred_region
          %s2956 = sand.u32 %s187, 1
          %s2957 = scalar_lea.sflag [#allocation5], %s2956
          %s2958 = sand.u32 %s187, 1
          %s2959 = smul.addr %s2958, 256
          %s2960 = scalar_lea.vmem [#allocation11], %s2959
          %2961 = dma.done %s2957, 4096
        $region76: #{tpu_custom_call.1} parent=71 // pred_fallthru
          _
      $region72: #{tpu_custom_call.1} parent=5 // pred_fallthru
        _
    $region6: #{tpu_custom_call.1} parent=1 // loop_footer
      %s25 = sadd.s32 1, %s21
    $region7: #{tpu_custom_call.1} parent=1 // loop_footer_branch
      %20 = sbr.rel target = $region3
    $region8: #{tpu_custom_call.1} parent=1 // loop_exit
      _
    %2962 = vsyncpa [#allocation4], 1
    %s2963 = scalar_lea.sflag [#allocation4], 1
    %2964 = vsyncpa %s2963, 1
    %2965 = vsyncpa [#allocation7], 1
    %2966 = vsyncpa [#allocation10], 1
    %2967 = vsyncpa [#allocation5], 1
    %s2968 = scalar_lea.sflag [#allocation5], 1
    %2969 = vsyncpa %s2968, 1

</llo_original>
